<compile_context>
chip_gen: v5e
topology: v5e:2x2
jax: 0.10.0
libtpu: 0.0.40
codegen_flags: <defaults>
</compile_context>

<pallas_src>
import functools

import jax
import jax.numpy as jnp
from jax.experimental import pallas as pl
from jax.experimental.pallas import tpu as pltpu

INPUT_SIZE = 3
PADDED_IN = 8          # input features padded to a sublane-friendly width
HIDDEN_SIZE = 256
OUTPUT_SIZE = 1
NUM_LAYERS = 8         # 1 input Linear+ReLU, 7 hidden Linear+ReLU, 1 output Linear
NUM_HIDDEN = NUM_LAYERS - 1


def _round_up(n, m):
    return -(-n // m) * m


def ffnn_kernel(x_ref, w0_ref, b0_ref, wh_ref, bh_ref, wl_ref, bl_ref, o_ref):
    cdt = wh_ref.dtype  # MXU input dtype (float32 or bfloat16)

    # Layer 0: (tb, 8) @ (8, 256); bias add + ReLU in f32.
    h = jnp.dot(x_ref[...].astype(cdt), w0_ref[...],
                preferred_element_type=jnp.float32)
    h = jnp.maximum(h + b0_ref[...], 0.0)

    # 7 hidden layers, statically unrolled: (tb, 256) @ (256, 256).
    for i in range(NUM_HIDDEN):
        h = jnp.dot(h.astype(cdt), wh_ref[i],
                    preferred_element_type=jnp.float32)
        h = jnp.maximum(h + bh_ref[i], 0.0)          # bh_ref[i]: (1, 256)

    # Output layer 256 -> 1 as VPU multiply + lane reduction (MXU with N=1 is
    # wasteful); result written as a lane-dense (1, 1, tb) row.
    out = jnp.sum(h * wl_ref[...].astype(jnp.float32), axis=-1)      # (tb,)
    o_ref[...] = (out[None, None, :] + bl_ref[...]).astype(o_ref.dtype)


@functools.partial(jax.jit, static_argnames=("tb", "compute_dtype"))
def ffnn_forward(x, w0, b0, wh, bh, wl, bl, *, tb=None,
                 compute_dtype=jnp.float32):
    B = x.shape[0]
    if tb is None:
        # Large tiles for MXU utilisation; keep >= 2 grid steps when possible
        # so the "parallel" axis load-balances across 2 TensorCores (v7x).
        tb = 256 if B > 256 else min(128, max(8, _round_up(B, 8)))
    B_pad = _round_up(B, tb)
    grid = (B_pad // tb,)
    cdt = jnp.dtype(compute_dtype)

    # Host-side layout prep (tiny XLA ops outside the kernel).
    x_p = jnp.zeros((B_pad, PADDED_IN), jnp.float32).at[:B, :INPUT_SIZE].set(x)
    w0_p = jnp.zeros((PADDED_IN, HIDDEN_SIZE), cdt).at[:INPUT_SIZE].set(
        w0.astype(cdt))
    wh_c = wh.astype(cdt)
    wl_r = wl.reshape(1, HIDDEN_SIZE).astype(cdt)
    b0_r = b0.reshape(1, HIDDEN_SIZE).astype(jnp.float32)
    bh_r = bh.reshape(NUM_HIDDEN, 1, HIDDEN_SIZE).astype(jnp.float32)
    bl_r = bl.reshape(1, 1).astype(jnp.float32)

    flops = 2 * B_pad * (PADDED_IN * HIDDEN_SIZE
                         + NUM_HIDDEN * HIDDEN_SIZE * HIDDEN_SIZE
                         + HIDDEN_SIZE * OUTPUT_SIZE)
    bytes_accessed = (
        x_p.size * 4 + B_pad * OUTPUT_SIZE * 4
        + (w0_p.size + wh_c.size + wl_r.size) * cdt.itemsize
        + (b0_r.size + bh_r.size + bl_r.size) * 4)

    out3d = pl.pallas_call(
        ffnn_kernel,
        out_shape=jax.ShapeDtypeStruct((grid[0], 1, tb), jnp.float32),
        grid_spec=pltpu.PrefetchScalarGridSpec(
            num_scalar_prefetch=0,
            grid=grid,
            in_specs=[
                pl.BlockSpec((tb, PADDED_IN), lambda i: (i, 0)),
                pl.BlockSpec((PADDED_IN, HIDDEN_SIZE), lambda i: (0, 0)),
                pl.BlockSpec((1, HIDDEN_SIZE), lambda i: (0, 0)),
                pl.BlockSpec((NUM_HIDDEN, HIDDEN_SIZE, HIDDEN_SIZE),
                             lambda i: (0, 0, 0)),
                pl.BlockSpec((NUM_HIDDEN, 1, HIDDEN_SIZE),
                             lambda i: (0, 0, 0)),
                pl.BlockSpec((1, HIDDEN_SIZE), lambda i: (0, 0)),
                pl.BlockSpec((1, 1), lambda i: (0, 0)),
            ],
            out_specs=pl.BlockSpec((1, 1, tb), lambda i: (i, 0, 0)),
        ),
        compiler_params=pltpu.CompilerParams(
            dimension_semantics=("parallel",)),
        cost_estimate=pl.CostEstimate(flops=flops, transcendentals=0,
                                      bytes_accessed=bytes_accessed),
    )(x_p, w0_p, b0_r, wh_c, bh_r, wl_r, bl_r)

    return out3d.reshape(B_pad, OUTPUT_SIZE)[:B]


def init_params(key):
    """Deterministic init mirroring PyTorch Linear's U(-1/sqrt(fan_in), .)."""
    keys = jax.random.split(key, 6)

    def uniform(k, shape, fan_in):
        bound = 1.0 / jnp.sqrt(jnp.asarray(fan_in, jnp.float32))
        return jax.random.uniform(k, shape, jnp.float32, -bound, bound)

    w0 = uniform(keys[0], (INPUT_SIZE, HIDDEN_SIZE), INPUT_SIZE)
    b0 = uniform(keys[1], (1, HIDDEN_SIZE), INPUT_SIZE)
    wh = uniform(keys[2], (NUM_HIDDEN, HIDDEN_SIZE, HIDDEN_SIZE), HIDDEN_SIZE)
    bh = uniform(keys[3], (NUM_HIDDEN, HIDDEN_SIZE), HIDDEN_SIZE)
    wl = uniform(keys[4], (HIDDEN_SIZE, OUTPUT_SIZE), HIDDEN_SIZE)
    bl = uniform(keys[5], (1, OUTPUT_SIZE), HIDDEN_SIZE)
    return w0, b0, wh, bh, wl, bl


def ffnn_reference(x, w0, b0, wh, bh, wl, bl):
    h = jnp.maximum(x @ w0 + b0, 0.0)
    for i in range(NUM_HIDDEN):
        h = jnp.maximum(h @ wh[i] + bh[i][None, :], 0.0)
    return h @ wl + bl


if __name__ == "__main__":
    key = jax.random.PRNGKey(0)
    k_x, k_p = jax.random.split(key)

    batch = 300  # not a multiple of the tile: exercises batch padding + 2-step grid
    x = jax.random.normal(k_x, (batch, INPUT_SIZE), jnp.float32)
    params = init_params(k_p)

    # f32 path: exact semantics of the PyTorch module.
    out = jax.block_until_ready(ffnn_forward(x, *params))
    ref = ffnn_reference(x, *params)
    assert out.shape == (batch, OUTPUT_SIZE)
    assert jnp.allclose(out, ref, atol=5e-4, rtol=1e-3)

    # bf16 MXU fast path (v6e/v7x): weights/MXU inputs bf16, f32 accumulation.
    out_bf16 = jax.block_until_ready(
        ffnn_forward(x, *params, compute_dtype=jnp.bfloat16))
    assert out_bf16.shape == (batch, OUTPUT_SIZE)
    assert jnp.allclose(out_bf16, ref, atol=5e-3, rtol=5e-2)

    print("KERNEL_OK")
</pallas_src>

<mosaic_0001>
module attributes {stable_mosaic.version = 11 : i64} {
  func.func @ffnn_kernel(%arg0: i32, %arg1: memref<256x8xf32, #tpu.memory_space<vmem>>, %arg2: memref<8x256xf32, #tpu.memory_space<vmem>>, %arg3: memref<1x256xf32, #tpu.memory_space<vmem>>, %arg4: memref<7x256x256xf32, #tpu.memory_space<vmem>>, %arg5: memref<7x1x256xf32, #tpu.memory_space<vmem>>, %arg6: memref<1x256xf32, #tpu.memory_space<vmem>>, %arg7: memref<1x1xf32, #tpu.memory_space<vmem>>, %arg8: memref<1x1x256xf32, #tpu.memory_space<vmem>>) attributes {dimension_semantics = [#tpu.dimension_semantics<parallel>], iteration_bounds = array<i64: 2>, scalar_prefetch = 0 : i64, scratch_operands = 0 : i64, tpu.core_type = #tpu.core_type<tc>, window_params = [{transform_indices = @transform_0, window_bounds = array<i64: 256, 8>}, {pipeline_mode = #tpu.pipeline_mode<synchronous>, transform_indices = @transform_1, window_bounds = array<i64: 8, 256>}, {pipeline_mode = #tpu.pipeline_mode<synchronous>, transform_indices = @transform_2, window_bounds = array<i64: 1, 256>}, {pipeline_mode = #tpu.pipeline_mode<synchronous>, transform_indices = @transform_3, window_bounds = array<i64: 7, 256, 256>}, {pipeline_mode = #tpu.pipeline_mode<synchronous>, transform_indices = @transform_4, window_bounds = array<i64: 7, 1, 256>}, {pipeline_mode = #tpu.pipeline_mode<synchronous>, transform_indices = @transform_5, window_bounds = array<i64: 1, 256>}, {pipeline_mode = #tpu.pipeline_mode<synchronous>, transform_indices = @transform_6, window_bounds = array<i64: 1, 1>}, {transform_indices = @transform_7, window_bounds = array<i64: 1, 1, 256>}]} {
    %c0 = arith.constant 0 : index
    %c0_0 = arith.constant 0 : index
    %0 = vector.load %arg1[%c0, %c0_0] : memref<256x8xf32, #tpu.memory_space<vmem>>, vector<256x8xf32>
    %c0_1 = arith.constant 0 : index
    %c0_2 = arith.constant 0 : index
    %1 = vector.load %arg2[%c0_1, %c0_2] : memref<8x256xf32, #tpu.memory_space<vmem>>, vector<8x256xf32>
    %cst = arith.constant dense<0.000000e+00> : vector<256x256xf32>
    %2 = tpu.matmul %0, %1, %cst {dimension_numbers = #tpu.dot_dimension_numbers<[1], [0], [0], [1], [0, 0, 1, 1], [], []>} : vector<256x8xf32>, vector<8x256xf32>, vector<256x256xf32> -> vector<256x256xf32>
    %c0_3 = arith.constant 0 : index
    %c0_4 = arith.constant 0 : index
    %3 = vector.load %arg3[%c0_3, %c0_4] : memref<1x256xf32, #tpu.memory_space<vmem>>, vector<1x256xf32>
    %4 = vector.broadcast %3 : vector<1x256xf32> to vector<256x256xf32>
    %5 = arith.addf %2, %4 : vector<256x256xf32>
    %cst_5 = arith.constant 0.000000e+00 : f32
    %6 = vector.broadcast %cst_5 : f32 to vector<256x256xf32>
    %7 = arith.maximumf %5, %6 : vector<256x256xf32>
    %c0_6 = arith.constant 0 : index
    %c0_7 = arith.constant 0 : index
    %c0_8 = arith.constant 0 : index
    %8 = vector.load %arg4[%c0_6, %c0_7, %c0_8] : memref<7x256x256xf32, #tpu.memory_space<vmem>>, vector<1x256x256xf32>
    %9 = vector.shape_cast %8 : vector<1x256x256xf32> to vector<256x256xf32>
    %cst_9 = arith.constant dense<0.000000e+00> : vector<256x256xf32>
    %10 = tpu.matmul %7, %9, %cst_9 {dimension_numbers = #tpu.dot_dimension_numbers<[1], [0], [0], [1], [0, 0, 1, 1], [], []>} : vector<256x256xf32>, vector<256x256xf32>, vector<256x256xf32> -> vector<256x256xf32>
    %c0_10 = arith.constant 0 : index
    %c0_11 = arith.constant 0 : index
    %c0_12 = arith.constant 0 : index
    %11 = vector.load %arg5[%c0_10, %c0_11, %c0_12] : memref<7x1x256xf32, #tpu.memory_space<vmem>>, vector<1x1x256xf32>
    %12 = vector.shape_cast %11 : vector<1x1x256xf32> to vector<1x256xf32>
    %13 = vector.broadcast %12 : vector<1x256xf32> to vector<256x256xf32>
    %14 = arith.addf %10, %13 : vector<256x256xf32>
    %cst_13 = arith.constant 0.000000e+00 : f32
    %15 = vector.broadcast %cst_13 : f32 to vector<256x256xf32>
    %16 = arith.maximumf %14, %15 : vector<256x256xf32>
    %c1 = arith.constant 1 : index
    %c0_14 = arith.constant 0 : index
    %c0_15 = arith.constant 0 : index
    %17 = vector.load %arg4[%c1, %c0_14, %c0_15] : memref<7x256x256xf32, #tpu.memory_space<vmem>>, vector<1x256x256xf32>
    %18 = vector.shape_cast %17 : vector<1x256x256xf32> to vector<256x256xf32>
    %cst_16 = arith.constant dense<0.000000e+00> : vector<256x256xf32>
    %19 = tpu.matmul %16, %18, %cst_16 {dimension_numbers = #tpu.dot_dimension_numbers<[1], [0], [0], [1], [0, 0, 1, 1], [], []>} : vector<256x256xf32>, vector<256x256xf32>, vector<256x256xf32> -> vector<256x256xf32>
    %c1_17 = arith.constant 1 : index
    %c0_18 = arith.constant 0 : index
    %c0_19 = arith.constant 0 : index
    %20 = vector.load %arg5[%c1_17, %c0_18, %c0_19] : memref<7x1x256xf32, #tpu.memory_space<vmem>>, vector<1x1x256xf32>
    %21 = vector.shape_cast %20 : vector<1x1x256xf32> to vector<1x256xf32>
    %22 = vector.broadcast %21 : vector<1x256xf32> to vector<256x256xf32>
    %23 = arith.addf %19, %22 : vector<256x256xf32>
    %cst_20 = arith.constant 0.000000e+00 : f32
    %24 = vector.broadcast %cst_20 : f32 to vector<256x256xf32>
    %25 = arith.maximumf %23, %24 : vector<256x256xf32>
    %c2 = arith.constant 2 : index
    %c0_21 = arith.constant 0 : index
    %c0_22 = arith.constant 0 : index
    %26 = vector.load %arg4[%c2, %c0_21, %c0_22] : memref<7x256x256xf32, #tpu.memory_space<vmem>>, vector<1x256x256xf32>
    %27 = vector.shape_cast %26 : vector<1x256x256xf32> to vector<256x256xf32>
    %cst_23 = arith.constant dense<0.000000e+00> : vector<256x256xf32>
    %28 = tpu.matmul %25, %27, %cst_23 {dimension_numbers = #tpu.dot_dimension_numbers<[1], [0], [0], [1], [0, 0, 1, 1], [], []>} : vector<256x256xf32>, vector<256x256xf32>, vector<256x256xf32> -> vector<256x256xf32>
    %c2_24 = arith.constant 2 : index
    %c0_25 = arith.constant 0 : index
    %c0_26 = arith.constant 0 : index
    %29 = vector.load %arg5[%c2_24, %c0_25, %c0_26] : memref<7x1x256xf32, #tpu.memory_space<vmem>>, vector<1x1x256xf32>
    %30 = vector.shape_cast %29 : vector<1x1x256xf32> to vector<1x256xf32>
    %31 = vector.broadcast %30 : vector<1x256xf32> to vector<256x256xf32>
    %32 = arith.addf %28, %31 : vector<256x256xf32>
    %cst_27 = arith.constant 0.000000e+00 : f32
    %33 = vector.broadcast %cst_27 : f32 to vector<256x256xf32>
    %34 = arith.maximumf %32, %33 : vector<256x256xf32>
    %c3 = arith.constant 3 : index
    %c0_28 = arith.constant 0 : index
    %c0_29 = arith.constant 0 : index
    %35 = vector.load %arg4[%c3, %c0_28, %c0_29] : memref<7x256x256xf32, #tpu.memory_space<vmem>>, vector<1x256x256xf32>
    %36 = vector.shape_cast %35 : vector<1x256x256xf32> to vector<256x256xf32>
    %cst_30 = arith.constant dense<0.000000e+00> : vector<256x256xf32>
    %37 = tpu.matmul %34, %36, %cst_30 {dimension_numbers = #tpu.dot_dimension_numbers<[1], [0], [0], [1], [0, 0, 1, 1], [], []>} : vector<256x256xf32>, vector<256x256xf32>, vector<256x256xf32> -> vector<256x256xf32>
    %c3_31 = arith.constant 3 : index
    %c0_32 = arith.constant 0 : index
    %c0_33 = arith.constant 0 : index
    %38 = vector.load %arg5[%c3_31, %c0_32, %c0_33] : memref<7x1x256xf32, #tpu.memory_space<vmem>>, vector<1x1x256xf32>
    %39 = vector.shape_cast %38 : vector<1x1x256xf32> to vector<1x256xf32>
    %40 = vector.broadcast %39 : vector<1x256xf32> to vector<256x256xf32>
    %41 = arith.addf %37, %40 : vector<256x256xf32>
    %cst_34 = arith.constant 0.000000e+00 : f32
    %42 = vector.broadcast %cst_34 : f32 to vector<256x256xf32>
    %43 = arith.maximumf %41, %42 : vector<256x256xf32>
    %c4 = arith.constant 4 : index
    %c0_35 = arith.constant 0 : index
    %c0_36 = arith.constant 0 : index
    %44 = vector.load %arg4[%c4, %c0_35, %c0_36] : memref<7x256x256xf32, #tpu.memory_space<vmem>>, vector<1x256x256xf32>
    %45 = vector.shape_cast %44 : vector<1x256x256xf32> to vector<256x256xf32>
    %cst_37 = arith.constant dense<0.000000e+00> : vector<256x256xf32>
    %46 = tpu.matmul %43, %45, %cst_37 {dimension_numbers = #tpu.dot_dimension_numbers<[1], [0], [0], [1], [0, 0, 1, 1], [], []>} : vector<256x256xf32>, vector<256x256xf32>, vector<256x256xf32> -> vector<256x256xf32>
    %c4_38 = arith.constant 4 : index
    %c0_39 = arith.constant 0 : index
    %c0_40 = arith.constant 0 : index
    %47 = vector.load %arg5[%c4_38, %c0_39, %c0_40] : memref<7x1x256xf32, #tpu.memory_space<vmem>>, vector<1x1x256xf32>
    %48 = vector.shape_cast %47 : vector<1x1x256xf32> to vector<1x256xf32>
    %49 = vector.broadcast %48 : vector<1x256xf32> to vector<256x256xf32>
    %50 = arith.addf %46, %49 : vector<256x256xf32>
    %cst_41 = arith.constant 0.000000e+00 : f32
    %51 = vector.broadcast %cst_41 : f32 to vector<256x256xf32>
    %52 = arith.maximumf %50, %51 : vector<256x256xf32>
    %c5 = arith.constant 5 : index
    %c0_42 = arith.constant 0 : index
    %c0_43 = arith.constant 0 : index
    %53 = vector.load %arg4[%c5, %c0_42, %c0_43] : memref<7x256x256xf32, #tpu.memory_space<vmem>>, vector<1x256x256xf32>
    %54 = vector.shape_cast %53 : vector<1x256x256xf32> to vector<256x256xf32>
    %cst_44 = arith.constant dense<0.000000e+00> : vector<256x256xf32>
    %55 = tpu.matmul %52, %54, %cst_44 {dimension_numbers = #tpu.dot_dimension_numbers<[1], [0], [0], [1], [0, 0, 1, 1], [], []>} : vector<256x256xf32>, vector<256x256xf32>, vector<256x256xf32> -> vector<256x256xf32>
    %c5_45 = arith.constant 5 : index
    %c0_46 = arith.constant 0 : index
    %c0_47 = arith.constant 0 : index
    %56 = vector.load %arg5[%c5_45, %c0_46, %c0_47] : memref<7x1x256xf32, #tpu.memory_space<vmem>>, vector<1x1x256xf32>
    %57 = vector.shape_cast %56 : vector<1x1x256xf32> to vector<1x256xf32>
    %58 = vector.broadcast %57 : vector<1x256xf32> to vector<256x256xf32>
    %59 = arith.addf %55, %58 : vector<256x256xf32>
    %cst_48 = arith.constant 0.000000e+00 : f32
    %60 = vector.broadcast %cst_48 : f32 to vector<256x256xf32>
    %61 = arith.maximumf %59, %60 : vector<256x256xf32>
    %c6 = arith.constant 6 : index
    %c0_49 = arith.constant 0 : index
    %c0_50 = arith.constant 0 : index
    %62 = vector.load %arg4[%c6, %c0_49, %c0_50] : memref<7x256x256xf32, #tpu.memory_space<vmem>>, vector<1x256x256xf32>
    %63 = vector.shape_cast %62 : vector<1x256x256xf32> to vector<256x256xf32>
    %cst_51 = arith.constant dense<0.000000e+00> : vector<256x256xf32>
    %64 = tpu.matmul %61, %63, %cst_51 {dimension_numbers = #tpu.dot_dimension_numbers<[1], [0], [0], [1], [0, 0, 1, 1], [], []>} : vector<256x256xf32>, vector<256x256xf32>, vector<256x256xf32> -> vector<256x256xf32>
    %c6_52 = arith.constant 6 : index
    %c0_53 = arith.constant 0 : index
    %c0_54 = arith.constant 0 : index
    %65 = vector.load %arg5[%c6_52, %c0_53, %c0_54] : memref<7x1x256xf32, #tpu.memory_space<vmem>>, vector<1x1x256xf32>
    %66 = vector.shape_cast %65 : vector<1x1x256xf32> to vector<1x256xf32>
    %67 = vector.broadcast %66 : vector<1x256xf32> to vector<256x256xf32>
    %68 = arith.addf %64, %67 : vector<256x256xf32>
    %cst_55 = arith.constant 0.000000e+00 : f32
    %69 = vector.broadcast %cst_55 : f32 to vector<256x256xf32>
    %70 = arith.maximumf %68, %69 : vector<256x256xf32>
    %c0_56 = arith.constant 0 : index
    %c0_57 = arith.constant 0 : index
    %71 = vector.load %arg6[%c0_56, %c0_57] : memref<1x256xf32, #tpu.memory_space<vmem>>, vector<1x256xf32>
    %72 = vector.broadcast %71 : vector<1x256xf32> to vector<256x256xf32>
    %73 = arith.mulf %70, %72 : vector<256x256xf32>
    %cst_58 = arith.constant dense<0.000000e+00> : vector<256xf32>
    %74 = vector.multi_reduction <add>, %73, %cst_58 [1] : vector<256x256xf32> to vector<256xf32>
    %75 = vector.shape_cast %74 : vector<256xf32> to vector<1x1x256xf32>
    %c0_59 = arith.constant 0 : index
    %c0_60 = arith.constant 0 : index
    %76 = vector.load %arg7[%c0_59, %c0_60] : memref<1x1xf32, #tpu.memory_space<vmem>>, vector<1x1xf32>
    %77 = vector.shape_cast %76 : vector<1x1xf32> to vector<1x1x1xf32>
    %78 = vector.broadcast %77 : vector<1x1x1xf32> to vector<1x1x256xf32>
    %79 = arith.addf %75, %78 : vector<1x1x256xf32>
    %c0_61 = arith.constant 0 : index
    %c0_62 = arith.constant 0 : index
    %c0_63 = arith.constant 0 : index
    %80 = vector.load %arg8[%c0_61, %c0_62, %c0_63] : memref<1x1x256xf32, #tpu.memory_space<vmem>>, vector<1x1x256xf32>
    tpu.vector_store %arg8[%c0_61, %c0_62, %c0_63], %79 {strides = array<i32>} : memref<1x1x256xf32, #tpu.memory_space<vmem>>, vector<1x1x256xf32>,
    return
  }
  func.func @transform_0(%arg0: i32) -> (i32, i32) {
    %c0_i32 = arith.constant 0 : i32
    %c0_i32_0 = arith.constant 0 : i32
    return %arg0, %c0_i32 : i32, i32
  }
  func.func @transform_1(%arg0: i32) -> (i32, i32) {
    %c0_i32 = arith.constant 0 : i32
    %c0_i32_0 = arith.constant 0 : i32
    %c0_i32_1 = arith.constant 0 : i32
    return %c0_i32, %c0_i32_0 : i32, i32
  }
  func.func @transform_2(%arg0: i32) -> (i32, i32) {
    %c0_i32 = arith.constant 0 : i32
    %c0_i32_0 = arith.constant 0 : i32
    %c0_i32_1 = arith.constant 0 : i32
    return %c0_i32, %c0_i32_0 : i32, i32
  }
  func.func @transform_3(%arg0: i32) -> (i32, i32, i32) {
    %c0_i32 = arith.constant 0 : i32
    %c0_i32_0 = arith.constant 0 : i32
    %c0_i32_1 = arith.constant 0 : i32
    %c0_i32_2 = arith.constant 0 : i32
    return %c0_i32, %c0_i32_0, %c0_i32_1 : i32, i32, i32
  }
  func.func @transform_4(%arg0: i32) -> (i32, i32, i32) {
    %c0_i32 = arith.constant 0 : i32
    %c0_i32_0 = arith.constant 0 : i32
    %c0_i32_1 = arith.constant 0 : i32
    %c0_i32_2 = arith.constant 0 : i32
    return %c0_i32, %c0_i32_0, %c0_i32_1 : i32, i32, i32
  }
  func.func @transform_5(%arg0: i32) -> (i32, i32) {
    %c0_i32 = arith.constant 0 : i32
    %c0_i32_0 = arith.constant 0 : i32
    %c0_i32_1 = arith.constant 0 : i32
    return %c0_i32, %c0_i32_0 : i32, i32
  }
  func.func @transform_6(%arg0: i32) -> (i32, i32) {
    %c0_i32 = arith.constant 0 : i32
    %c0_i32_0 = arith.constant 0 : i32
    %c0_i32_1 = arith.constant 0 : i32
    return %c0_i32, %c0_i32_0 : i32, i32
  }
  func.func @transform_7(%arg0: i32) -> (i32, i32, i32) {
    %c0_i32 = arith.constant 0 : i32
    %c0_i32_0 = arith.constant 0 : i32
    %c0_i32_1 = arith.constant 0 : i32
    return %arg0, %c0_i32, %c0_i32_0 : i32, i32, i32
  }
}

</mosaic_0001>

<llo_original>
// kernel: ffnn_forward.1
$region0: #{ffnn_forward.1}
  #allocation0 [shape = 'u32[]', space=smem, size = 0x4, offset = 0x4, fixed_abs, tag = 'smem constant byte address 0x4 - core index']
  #allocation1 [shape = 'u32[72,128]{1,0:T(1,128)}', space=vmem, size = 0x9000, scoped, tag = 'internal scratch']
  #allocation2 [shape = 'f32[1,1]{1,0:T(1,128)S(1)}', space=vmem, size = 0x200, scoped, tag = 'scoped memory for ffnn_forward.1']
  %s0 = inlined_call_operand.vmem [shape: f32[512,8], index: 0, kind: input, shape index: {}]
  %s1 = inlined_call_operand.vmem [shape: f32[8,256], index: 1, kind: input, shape index: {}]
  %s2 = inlined_call_operand.hbm [shape: f32[1,256], index: 2, kind: input, shape index: {}]
  %s3 = inlined_call_operand.hbm [shape: f32[7,256,256], index: 3, kind: input, shape index: {}]
  %s4 = inlined_call_operand.vmem [shape: f32[7,1,256], index: 4, kind: input, shape index: {}]
  %s5 = inlined_call_operand.hbm [shape: f32[1,256], index: 5, kind: input, shape index: {}]
  %s6 = inlined_call_operand.<no memory space> [shape: f32[1,1], index: 6, kind: input, shape index: {}]
  %s7 = inlined_call_operand.vmem [shape: f32[2,1,256], index: 7, kind: output, shape index: {}]
  %s8 = sld [smem:[#allocation0]]
  $region73: #{ffnn_forward.1} parent=0
    _
  %s10 = ssub.s32 1, %s8
  %s11 = scalar_select 0, %s10, %s8
  %v12 = vstv %s6
  %13 = vst [vmem:[#allocation2] sm:$0x1] %v12
  $region1: #{ffnn_forward.1} parent=0
    #allocation3 [shape = 'u8[1024]{0}', space=vmem, size = 0x400, scoped, tag = 'input window, operand 2, single buffered']
    #allocation4 [shape = 's32[2]{0}', space=sflag, size = 0x8, scoped, tag = 'scoped memory for ffnn_forward.1']
    #allocation5 [shape = 'u8[1835008]{0}', space=vmem, size = 0x1c0000, scoped, tag = 'input window, operand 3, single buffered']
    #allocation6 [shape = 's32[1]{0}', space=sflag, size = 0x4, scoped, tag = 'scoped memory for ffnn_forward.1']
    #allocation7 [shape = 'u8[1024]{0}', space=vmem, size = 0x400, scoped, tag = 'input window, operand 5, single buffered']
    %14 = vsyncpa [#allocation4], 0
    %15 = vsyncpa [#allocation6], 0
    loop: start=0, step=1, limit=4
    $region2: #{ffnn_forward.1} parent=1 // loop_pre_header
      _
    $region3: #{ffnn_forward.1} parent=1 // loop_header
      %s17 = sphi 0, %s21
      %p18 = scmp.ge.s32.totalorder %s17, 4
      %s27 = sphi 0, %s29
      %s30 = sphi 0, %s27
      %s31 = sphi 0, %s30
      %s47 = sphi 0, %s31
      %s51 = sphi 0, %s51
      %s53 = sphi 0, %s51
      %s54 = sphi 0, %s53
      %s68 = sphi 0, %s54
      %s72 = sphi 0, %s72
      %s74 = sphi 0, %s72
      %s75 = sphi 0, %s74
      %s89 = sphi 0, %s75
      %s93 = sphi 0, %s93
      %s95 = sphi 0, %s93
      %s96 = sphi 0, %s95
      %s110 = sphi 0, %s96
      %s114 = sphi 0, %s114
      %s116 = sphi 0, %s114
      %s117 = sphi 0, %s116
      %s131 = sphi 0, %s117
      %s135 = sphi 0, %s135
      %s137 = sphi 0, %s135
      %s138 = sphi 0, %s137
      %s152 = sphi 0, %s138
      %s156 = sphi 0, %s156
      %s158 = sphi 0, %s156
      %s159 = sphi 0, %s158
      %s173 = sphi 0, %s159
      %s179 = sphi 0, %s181
      %s182 = sphi 0, %s179
      %s183 = sphi 0, %s182
      %s199 = sphi 0, %s183
    $region4: #{ffnn_forward.1} parent=1 // loop_header_branch
      %20 = sbr.rel (%p18) target = $region8
    $region5: #{ffnn_forward.1} parent=1 // loop_body
      %s22 = ssub.s32 %s17, 1
      %s23 = ssub.s32 %s17, 2
      %s24 = sadd.s32 %s17, 1
      %s25 = ssub.s32 %s17, %s24
      %p26 = scmp.eq.s32.totalorder %s25, 0
      %s28 = sadd.s32 %s27, 1
      %s29 = scalar_select %p26, %s27, %s28
      %p32 = pneg %p26
      %p33 = scmp.eq.s32.totalorder %s17, 1
      %p34 = por %p32, %p33
      %p35 = scmp.ne.s32.totalorder %s27, %s30
      %p36 = scmp.eq.s32.totalorder %s17, 0
      %p37 = por %p35, %p36
      %p38 = scmp.ne.s32.totalorder %s27, %s30
      %p39 = scmp.eq.s32.totalorder %s22, 1
      %p40 = por %p38, %p39
      %p41 = scmp.ne.s32.totalorder %s30, %s31
      %p42 = scmp.eq.s32.totalorder %s22, 0
      %p43 = por %p41, %p42
      %p44 = scmp.ne.s32.totalorder %s30, %s31
      %p45 = scmp.eq.s32.totalorder %s23, 1
      %p46 = por %p44, %p45
      %p48 = scmp.ne.s32.totalorder %s31, %s47
      %p49 = scmp.eq.s32.totalorder %s23, 0
      %p50 = por %p48, %p49
      %s52 = sadd.s32 %s51, 1
      %p55 = scmp.eq.s32.totalorder %s17, 1
      %p56 = scmp.ne.s32.totalorder %s51, %s53
      %p57 = scmp.eq.s32.totalorder %s17, 0
      %p58 = por %p56, %p57
      %p59 = scmp.ne.s32.totalorder %s51, %s53
      %p60 = scmp.eq.s32.totalorder %s22, 1
      %p61 = por %p59, %p60
      %p62 = scmp.ne.s32.totalorder %s53, %s54
      %p63 = scmp.eq.s32.totalorder %s22, 0
      %p64 = por %p62, %p63
      %p65 = scmp.ne.s32.totalorder %s53, %s54
      %p66 = scmp.eq.s32.totalorder %s23, 1
      %p67 = por %p65, %p66
      %p69 = scmp.ne.s32.totalorder %s54, %s68
      %p70 = scmp.eq.s32.totalorder %s23, 0
      %p71 = por %p69, %p70
      %s73 = sadd.s32 %s72, 1
      %p76 = scmp.eq.s32.totalorder %s17, 1
      %p77 = scmp.ne.s32.totalorder %s72, %s74
      %p78 = scmp.eq.s32.totalorder %s17, 0
      %p79 = por %p77, %p78
      %p80 = scmp.ne.s32.totalorder %s72, %s74
      %p81 = scmp.eq.s32.totalorder %s22, 1
      %p82 = por %p80, %p81
      %p83 = scmp.ne.s32.totalorder %s74, %s75
      %p84 = scmp.eq.s32.totalorder %s22, 0
      %p85 = por %p83, %p84
      %p86 = scmp.ne.s32.totalorder %s74, %s75
      %p87 = scmp.eq.s32.totalorder %s23, 1
      %p88 = por %p86, %p87
      %p90 = scmp.ne.s32.totalorder %s75, %s89
      %p91 = scmp.eq.s32.totalorder %s23, 0
      %p92 = por %p90, %p91
      %s94 = sadd.s32 %s93, 1
      %p97 = scmp.eq.s32.totalorder %s17, 1
      %p98 = scmp.ne.s32.totalorder %s93, %s95
      %p99 = scmp.eq.s32.totalorder %s17, 0
      %p100 = por %p98, %p99
      %p101 = scmp.ne.s32.totalorder %s93, %s95
      %p102 = scmp.eq.s32.totalorder %s22, 1
      %p103 = por %p101, %p102
      %p104 = scmp.ne.s32.totalorder %s95, %s96
      %p105 = scmp.eq.s32.totalorder %s22, 0
      %p106 = por %p104, %p105
      %p107 = scmp.ne.s32.totalorder %s95, %s96
      %p108 = scmp.eq.s32.totalorder %s23, 1
      %p109 = por %p107, %p108
      %p111 = scmp.ne.s32.totalorder %s96, %s110
      %p112 = scmp.eq.s32.totalorder %s23, 0
      %p113 = por %p111, %p112
      %s115 = sadd.s32 %s114, 1
      %p118 = scmp.eq.s32.totalorder %s17, 1
      %p119 = scmp.ne.s32.totalorder %s114, %s116
      %p120 = scmp.eq.s32.totalorder %s17, 0
      %p121 = por %p119, %p120
      %p122 = scmp.ne.s32.totalorder %s114, %s116
      %p123 = scmp.eq.s32.totalorder %s22, 1
      %p124 = por %p122, %p123
      %p125 = scmp.ne.s32.totalorder %s116, %s117
      %p126 = scmp.eq.s32.totalorder %s22, 0
      %p127 = por %p125, %p126
      %p128 = scmp.ne.s32.totalorder %s116, %s117
      %p129 = scmp.eq.s32.totalorder %s23, 1
      %p130 = por %p128, %p129
      %p132 = scmp.ne.s32.totalorder %s117, %s131
      %p133 = scmp.eq.s32.totalorder %s23, 0
      %p134 = por %p132, %p133
      %s136 = sadd.s32 %s135, 1
      %p139 = scmp.eq.s32.totalorder %s17, 1
      %p140 = scmp.ne.s32.totalorder %s135, %s137
      %p141 = scmp.eq.s32.totalorder %s17, 0
      %p142 = por %p140, %p141
      %p143 = scmp.ne.s32.totalorder %s135, %s137
      %p144 = scmp.eq.s32.totalorder %s22, 1
      %p145 = por %p143, %p144
      %p146 = scmp.ne.s32.totalorder %s137, %s138
      %p147 = scmp.eq.s32.totalorder %s22, 0
      %p148 = por %p146, %p147
      %p149 = scmp.ne.s32.totalorder %s137, %s138
      %p150 = scmp.eq.s32.totalorder %s23, 1
      %p151 = por %p149, %p150
      %p153 = scmp.ne.s32.totalorder %s138, %s152
      %p154 = scmp.eq.s32.totalorder %s23, 0
      %p155 = por %p153, %p154
      %s157 = sadd.s32 %s156, 1
      %p160 = scmp.eq.s32.totalorder %s17, 1
      %p161 = scmp.ne.s32.totalorder %s156, %s158
      %p162 = scmp.eq.s32.totalorder %s17, 0
      %p163 = por %p161, %p162
      %p164 = scmp.ne.s32.totalorder %s156, %s158
      %p165 = scmp.eq.s32.totalorder %s22, 1
      %p166 = por %p164, %p165
      %p167 = scmp.ne.s32.totalorder %s158, %s159
      %p168 = scmp.eq.s32.totalorder %s22, 0
      %p169 = por %p167, %p168
      %p170 = scmp.ne.s32.totalorder %s158, %s159
      %p171 = scmp.eq.s32.totalorder %s23, 1
      %p172 = por %p170, %p171
      %p174 = scmp.ne.s32.totalorder %s159, %s173
      %p175 = scmp.eq.s32.totalorder %s23, 0
      %p176 = por %p174, %p175
      %s177 = ssub.s32 %s17, %s24
      %p178 = scmp.eq.s32.totalorder %s177, 0
      %s180 = sadd.s32 %s179, 1
      %s181 = scalar_select %p178, %s179, %s180
      %p184 = pneg %p178
      %p185 = scmp.eq.s32.totalorder %s17, 1
      %p186 = por %p184, %p185
      %p187 = scmp.ne.s32.totalorder %s179, %s182
      %p188 = scmp.eq.s32.totalorder %s17, 0
      %p189 = por %p187, %p188
      %p190 = scmp.ne.s32.totalorder %s179, %s182
      %p191 = scmp.eq.s32.totalorder %s22, 1
      %p192 = por %p190, %p191
      %p193 = scmp.ne.s32.totalorder %s182, %s183
      %p194 = scmp.eq.s32.totalorder %s22, 0
      %p195 = por %p193, %p194
      %p196 = scmp.ne.s32.totalorder %s182, %s183
      %p197 = scmp.eq.s32.totalorder %s23, 1
      %p198 = por %p196, %p197
      %p200 = scmp.ne.s32.totalorder %s183, %s199
      %p201 = scmp.eq.s32.totalorder %s23, 0
      %p202 = por %p200, %p201
      %p203 = scmp.le.s32.totalorder 1, %s17
      %p204 = scmp.lt.s32.totalorder %s17, 3
      %p205 = pnand %p203, %p204
      %p206 = pneg %p205
      // Predicated region
      $region9: #{ffnn_forward.1} parent=5 // pred_check
        _
      $region10: #{ffnn_forward.1} parent=5 // pred_check_branch
        %208 = sbr.rel (%p205) target = $region12
      $region11: #{ffnn_forward.1} parent=5 // pred_region
        %s209 = ssub.s32 %s17, 1
        // Predicated region
        $region13: #{ffnn_forward.1} parent=11 // pred_check
          %p210 = pneg %p64
        $region14: #{ffnn_forward.1} parent=11 // pred_check_branch
          %212 = sbr.rel (%p210) target = $region16
        $region15: #{ffnn_forward.1} parent=11 // pred_region
          _
        $region16: #{ffnn_forward.1} parent=11 // pred_fallthru
          _
        // Predicated region
        $region17: #{ffnn_forward.1} parent=11 // pred_check
          %p213 = pneg %p85
        $region18: #{ffnn_forward.1} parent=11 // pred_check_branch
          %215 = sbr.rel (%p213) target = $region20
        $region19: #{ffnn_forward.1} parent=11 // pred_region
          %217 = vsyncadd [#allocation4], 0
          %s219 = sshll.u32 %s2, 4
          %s220 = int_to_ptr.hbm [resolvable:$true] %s219
          %s221 = sshll.u32 [#allocation3], 4
          %s222 = int_to_ptr.vmem [resolvable:$true] %s221
          %224 = dma.hbm_to_vmem [thread:$0]  %s220, 32, %s222, [#allocation4]
        $region20: #{ffnn_forward.1} parent=11 // pred_fallthru
          _
        // Predicated region
        $region21: #{ffnn_forward.1} parent=11 // pred_check
          %p225 = pneg %p106
        $region22: #{ffnn_forward.1} parent=11 // pred_check_branch
          %227 = sbr.rel (%p225) target = $region24
        $region23: #{ffnn_forward.1} parent=11 // pred_region
          %229 = vsyncadd [#allocation6], 0
          %s230 = sshll.u32 %s3, 4
          %s231 = int_to_ptr.hbm [resolvable:$true] %s230
          %s232 = sshll.u32 [#allocation5], 4
          %s233 = int_to_ptr.vmem [resolvable:$true] %s232
          %238 = dma.hbm_to_vmem [thread:$0]  %s231, 57344, %s233, [#allocation6], 256, 256, 16
        $region24: #{ffnn_forward.1} parent=11 // pred_fallthru
          _
        // Predicated region
        $region25: #{ffnn_forward.1} parent=11 // pred_check
          %p239 = pneg %p127
        $region26: #{ffnn_forward.1} parent=11 // pred_check_branch
          %241 = sbr.rel (%p239) target = $region28
        $region27: #{ffnn_forward.1} parent=11 // pred_region
          _
        $region28: #{ffnn_forward.1} parent=11 // pred_fallthru
          _
        // Predicated region
        $region29: #{ffnn_forward.1} parent=11 // pred_check
          %p242 = pneg %p148
        $region30: #{ffnn_forward.1} parent=11 // pred_check_branch
          %244 = sbr.rel (%p242) target = $region32
        $region31: #{ffnn_forward.1} parent=11 // pred_region
          %246 = vsyncadd [#allocation6], 0
          %s248 = sshll.u32 %s5, 4
          %s249 = int_to_ptr.hbm [resolvable:$true] %s248
          %s250 = sshll.u32 [#allocation7], 4
          %s251 = int_to_ptr.vmem [resolvable:$true] %s250
          %253 = dma.hbm_to_vmem [thread:$0]  %s249, 32, %s251, [#allocation6]
        $region32: #{ffnn_forward.1} parent=11 // pred_fallthru
          _
        // Predicated region
        $region33: #{ffnn_forward.1} parent=11 // pred_check
          %p254 = pneg %p169
        $region34: #{ffnn_forward.1} parent=11 // pred_check_branch
          %256 = sbr.rel (%p254) target = $region36
        $region35: #{ffnn_forward.1} parent=11 // pred_region
          _
        $region36: #{ffnn_forward.1} parent=11 // pred_fallthru
          _
      $region12: #{ffnn_forward.1} parent=5 // pred_fallthru
        _
      %p257 = scmp.lt.s32.totalorder %s17, 2
      // Predicated region
      $region37: #{ffnn_forward.1} parent=5 // pred_check
        %p258 = pneg %p257
      $region38: #{ffnn_forward.1} parent=5 // pred_check_branch
        %260 = sbr.rel (%p258) target = $region40
      $region39: #{ffnn_forward.1} parent=5 // pred_region
        // Predicated region
        $region41: #{ffnn_forward.1} parent=39 // pred_check
          %p261 = pneg %p37
        $region42: #{ffnn_forward.1} parent=39 // pred_check_branch
          %263 = sbr.rel (%p261) target = $region44
        $region43: #{ffnn_forward.1} parent=39 // pred_region
          %s264 = smul.u32 32, %s17
          %p265 = scmp.lt.s32.totalorder %s264, 63
          %s266 = scalar_select %p265, %s264, 63
          %s267 = smul.addr %s266, 8
          %s268 = scalar_lea.vmem %s0, %s267
          %s269 = smul.u32 32, %s17
        $region44: #{ffnn_forward.1} parent=39 // pred_fallthru
          _
      $region40: #{ffnn_forward.1} parent=5 // pred_fallthru
        _
      %p270 = scmp.le.s32.totalorder 1, %s17
      %p271 = scmp.lt.s32.totalorder %s17, 3
      %p272 = pnand %p270, %p271
      %p273 = pneg %p272
      // Predicated region
      $region45: #{ffnn_forward.1} parent=5 // pred_check
        _
      $region46: #{ffnn_forward.1} parent=5 // pred_check_branch
        %275 = sbr.rel (%p272) target = $region48
      $region47: #{ffnn_forward.1} parent=5 // pred_region
        %s276 = ssub.s32 %s17, 1
        // Predicated region
        $region49: #{ffnn_forward.1} parent=47 // pred_check
          %p277 = pneg %p85
        $region50: #{ffnn_forward.1} parent=47 // pred_check_branch
          %279 = sbr.rel (%p277) target = $region52
        $region51: #{ffnn_forward.1} parent=47 // pred_region
          %281 = dma.done [#allocation4], 32
        $region52: #{ffnn_forward.1} parent=47 // pred_fallthru
          _
        // Predicated region
        $region53: #{ffnn_forward.1} parent=47 // pred_check
          %p282 = pneg %p106
        $region54: #{ffnn_forward.1} parent=47 // pred_check_branch
          %284 = sbr.rel (%p282) target = $region56
        $region55: #{ffnn_forward.1} parent=47 // pred_region
          %286 = dma.done [#allocation6], 57344
        $region56: #{ffnn_forward.1} parent=47 // pred_fallthru
          _
        // Predicated region
        $region57: #{ffnn_forward.1} parent=47 // pred_check
          %p287 = pneg %p148
        $region58: #{ffnn_forward.1} parent=47 // pred_check_branch
          %289 = sbr.rel (%p287) target = $region60
        $region59: #{ffnn_forward.1} parent=47 // pred_region
          %291 = dma.done [#allocation6], 32
        $region60: #{ffnn_forward.1} parent=47 // pred_fallthru
          _
        %s292 = smul.u32 32, %s22
        %p293 = scmp.lt.s32.totalorder %s292, 63
        %s294 = scalar_select %p293, %s292, 63
        %s295 = smul.addr %s294, 8
        %s296 = scalar_lea.vmem %s0, %s295
        %p297 = pneg %p43
        %p298 = pneg %p40
        %p299 = pneg %p64
        %p300 = pneg %p61
        %p301 = pneg %p85
        %p302 = pneg %p82
        %p303 = pneg %p106
        %p304 = pneg %p103
        %p305 = pneg %p127
        %p306 = pneg %p124
        %p307 = pneg %p148
        %p308 = pneg %p145
        %p309 = pneg %p169
        %p310 = pneg %p166
        %p311 = pneg %p195
        %p312 = pneg %p192
        %p313 = scmp.lt.s32.totalorder %s22, 1
        %s314 = scalar_select %p313, %s22, 1
        %s315 = smul.addr %s314, 2
        %s316 = scalar_lea.vmem %s7, %s315
        %s317 = smul.u32 32, %s22
        %p318 = scmp.lt.s32.totalorder %s317, 63
        %s319 = scalar_select %p318, %s317, 63
        %s320 = smul.addr %s319, 8
        %s321 = scalar_lea.vmem %s0, %s320
        %s322 = smul.u32 32, %s22
        %p323 = scmp.lt.s32.totalorder %s22, 1
        %s324 = scalar_select %p323, %s22, 1
        %s325 = smul.addr %s324, 2
        %s326 = scalar_lea.vmem %s7, %s325
        %v327 = vld [vmem:[%s321] sm:$0xff]
        %v328 = vld [vmem:[%s321 + $0x8] sm:$0xff]
        %v329 = vld [vmem:[%s321 + $0x10] sm:$0xff]
        %v330 = vld [vmem:[%s321 + $0x18] sm:$0xff]
        %v331 = vld [vmem:[%s321 + $0x20] sm:$0xff]
        %v332 = vld [vmem:[%s321 + $0x28] sm:$0xff]
        %v333 = vld [vmem:[%s321 + $0x30] sm:$0xff]
        %v334 = vld [vmem:[%s321 + $0x38] sm:$0xff]
        %v335 = vld [vmem:[%s321 + $0x40] sm:$0xff]
        %v336 = vld [vmem:[%s321 + $0x48] sm:$0xff]
        %v337 = vld [vmem:[%s321 + $0x50] sm:$0xff]
        %v338 = vld [vmem:[%s321 + $0x58] sm:$0xff]
        %v339 = vld [vmem:[%s321 + $0x60] sm:$0xff]
        %v340 = vld [vmem:[%s321 + $0x68] sm:$0xff]
        %v341 = vld [vmem:[%s321 + $0x70] sm:$0xff]
        %v342 = vld [vmem:[%s321 + $0x78] sm:$0xff]
        %v343 = vld [vmem:[%s321 + $0x80] sm:$0xff]
        %v344 = vld [vmem:[%s321 + $0x88] sm:$0xff]
        %v345 = vld [vmem:[%s321 + $0x90] sm:$0xff]
        %v346 = vld [vmem:[%s321 + $0x98] sm:$0xff]
        %v347 = vld [vmem:[%s321 + $0xa0] sm:$0xff]
        %v348 = vld [vmem:[%s321 + $0xa8] sm:$0xff]
        %v349 = vld [vmem:[%s321 + $0xb0] sm:$0xff]
        %v350 = vld [vmem:[%s321 + $0xb8] sm:$0xff]
        %v351 = vld [vmem:[%s321 + $0xc0] sm:$0xff]
        %v352 = vld [vmem:[%s321 + $0xc8] sm:$0xff]
        %v353 = vld [vmem:[%s321 + $0xd0] sm:$0xff]
        %v354 = vld [vmem:[%s321 + $0xd8] sm:$0xff]
        %v355 = vld [vmem:[%s321 + $0xe0] sm:$0xff]
        %v356 = vld [vmem:[%s321 + $0xe8] sm:$0xff]
        %v357 = vld [vmem:[%s321 + $0xf0] sm:$0xff]
        %v358 = vld [vmem:[%s321 + $0xf8] sm:$0xff]
        %v359 = vld [vmem:[%s1] sm:$0xff]
        %v360 = vld [vmem:[%s1 + $0x8] sm:$0xff]
        %v361 = vld [vmem:[#allocation3] sm:$0x3]
        %v363 = vperm.slane %v361, 0
        %v364 = vperm.slane %v361, 1
        %vm367 = vcmask 64512
        %v369 = vsel %vm367, %v327, 0
        %v372 = vsel %vm367, %v328, 0
        %v375 = vsel %vm367, %v329, 0
        %v378 = vsel %vm367, %v330, 0
        %v381 = vsel %vm367, %v331, 0
        %v384 = vsel %vm367, %v332, 0
        %v387 = vsel %vm367, %v333, 0
        %v390 = vsel %vm367, %v334, 0
        %v393 = vsel %vm367, %v335, 0
        %v396 = vsel %vm367, %v336, 0
        %v399 = vsel %vm367, %v337, 0
        %v402 = vsel %vm367, %v338, 0
        %v405 = vsel %vm367, %v339, 0
        %v408 = vsel %vm367, %v340, 0
        %v411 = vsel %vm367, %v341, 0
        %v414 = vsel %vm367, %v342, 0
        %v417 = vsel %vm367, %v343, 0
        %v420 = vsel %vm367, %v344, 0
        %v423 = vsel %vm367, %v345, 0
        %v426 = vsel %vm367, %v346, 0
        %v429 = vsel %vm367, %v347, 0
        %v432 = vsel %vm367, %v348, 0
        %v435 = vsel %vm367, %v349, 0
        %v438 = vsel %vm367, %v350, 0
        %v441 = vsel %vm367, %v351, 0
        %v444 = vsel %vm367, %v352, 0
        %v447 = vsel %vm367, %v353, 0
        %v450 = vsel %vm367, %v354, 0
        %v453 = vsel %vm367, %v355, 0
        %v456 = vsel %vm367, %v356, 0
        %v459 = vsel %vm367, %v357, 0
        %v462 = vsel %vm367, %v358, 0
        %464 = vmatpush.msra.mxu0 0.0
        %465 = vmatpush.msra.mxu0 0.0
        %466 = vmatpush.msra.mxu0 0.0
        %467 = vmatpush.msra.mxu0 0.0
        %468 = vmatpush.msra.mxu0 0.0
        %469 = vmatpush.msra.mxu0 0.0
        %470 = vmatpush.msra.mxu0 0.0
        %471 = vmatpush.msra.mxu0 0.0
        %472 = vmatpush.msra.mxu0 0.0
        %473 = vmatpush.msra.mxu0 0.0
        %474 = vmatpush.msra.mxu0 0.0
        %475 = vmatpush.msra.mxu0 0.0
        %476 = vmatpush.msra.mxu0 0.0
        %477 = vmatpush.msra.mxu0 0.0
        %478 = vmatpush.msra.mxu0 0.0
        %479 = vmatpush.msra.mxu0 %v359
        %480 = vmatmul.f32.gmra.mxu0 %v369
        %v481 = vpop.f32.mrf.mxu0
        %v482 = vadd.f32 %v363, %v481
        %483 = vmatmul.f32.gmra.mxu0 %v372
        %v484 = vpop.f32.mrf.mxu0
        %v485 = vadd.f32 %v363, %v484
        %486 = vmatmul.f32.gmra.mxu0 %v375
        %v487 = vpop.f32.mrf.mxu0
        %v488 = vadd.f32 %v363, %v487
        %489 = vmatmul.f32.gmra.mxu0 %v378
        %v490 = vpop.f32.mrf.mxu0
        %v491 = vadd.f32 %v363, %v490
        %492 = vmatmul.f32.gmra.mxu0 %v381
        %v493 = vpop.f32.mrf.mxu0
        %v494 = vadd.f32 %v363, %v493
        %495 = vmatmul.f32.gmra.mxu0 %v384
        %v496 = vpop.f32.mrf.mxu0
        %v497 = vadd.f32 %v363, %v496
        %498 = vmatmul.f32.gmra.mxu0 %v387
        %v499 = vpop.f32.mrf.mxu0
        %v500 = vadd.f32 %v363, %v499
        %501 = vmatmul.f32.gmra.mxu0 %v390
        %v502 = vpop.f32.mrf.mxu0
        %v503 = vadd.f32 %v363, %v502
        %504 = vmatmul.f32.gmra.mxu0 %v393
        %v505 = vpop.f32.mrf.mxu0
        %v506 = vadd.f32 %v363, %v505
        %507 = vmatmul.f32.gmra.mxu0 %v396
        %v508 = vpop.f32.mrf.mxu0
        %v509 = vadd.f32 %v363, %v508
        %510 = vmatmul.f32.gmra.mxu0 %v399
        %v511 = vpop.f32.mrf.mxu0
        %v512 = vadd.f32 %v363, %v511
        %513 = vmatmul.f32.gmra.mxu0 %v402
        %v514 = vpop.f32.mrf.mxu0
        %v515 = vadd.f32 %v363, %v514
        %516 = vmatmul.f32.gmra.mxu0 %v405
        %v517 = vpop.f32.mrf.mxu0
        %v518 = vadd.f32 %v363, %v517
        %519 = vmatmul.f32.gmra.mxu0 %v408
        %v520 = vpop.f32.mrf.mxu0
        %v521 = vadd.f32 %v363, %v520
        %522 = vmatmul.f32.gmra.mxu0 %v411
        %v523 = vpop.f32.mrf.mxu0
        %v524 = vadd.f32 %v363, %v523
        %525 = vmatmul.f32.gmra.mxu0 %v414
        %v526 = vpop.f32.mrf.mxu0
        %v527 = vadd.f32 %v363, %v526
        %528 = vmatmul.f32.gmra.mxu0 %v417
        %v529 = vpop.f32.mrf.mxu0
        %v530 = vadd.f32 %v363, %v529
        %531 = vmatmul.f32.gmra.mxu0 %v420
        %v532 = vpop.f32.mrf.mxu0
        %v533 = vadd.f32 %v363, %v532
        %534 = vmatmul.f32.gmra.mxu0 %v423
        %v535 = vpop.f32.mrf.mxu0
        %v536 = vadd.f32 %v363, %v535
        %537 = vmatmul.f32.gmra.mxu0 %v426
        %v538 = vpop.f32.mrf.mxu0
        %v539 = vadd.f32 %v363, %v538
        %540 = vmatmul.f32.gmra.mxu0 %v429
        %v541 = vpop.f32.mrf.mxu0
        %v542 = vadd.f32 %v363, %v541
        %543 = vmatmul.f32.gmra.mxu0 %v432
        %v544 = vpop.f32.mrf.mxu0
        %v545 = vadd.f32 %v363, %v544
        %546 = vmatmul.f32.gmra.mxu0 %v435
        %v547 = vpop.f32.mrf.mxu0
        %v548 = vadd.f32 %v363, %v547
        %549 = vmatmul.f32.gmra.mxu0 %v438
        %v550 = vpop.f32.mrf.mxu0
        %v551 = vadd.f32 %v363, %v550
        %552 = vmatmul.f32.gmra.mxu0 %v441
        %v553 = vpop.f32.mrf.mxu0
        %v554 = vadd.f32 %v363, %v553
        %555 = vmatmul.f32.gmra.mxu0 %v444
        %v556 = vpop.f32.mrf.mxu0
        %v557 = vadd.f32 %v363, %v556
        %558 = vmatmul.f32.gmra.mxu0 %v447
        %v559 = vpop.f32.mrf.mxu0
        %v560 = vadd.f32 %v363, %v559
        %561 = vmatmul.f32.gmra.mxu0 %v450
        %v562 = vpop.f32.mrf.mxu0
        %v563 = vadd.f32 %v363, %v562
        %564 = vmatmul.f32.gmra.mxu0 %v453
        %v565 = vpop.f32.mrf.mxu0
        %v566 = vadd.f32 %v363, %v565
        %567 = vmatmul.f32.gmra.mxu0 %v456
        %v568 = vpop.f32.mrf.mxu0
        %v569 = vadd.f32 %v363, %v568
        %570 = vmatmul.f32.gmra.mxu0 %v459
        %v571 = vpop.f32.mrf.mxu0
        %v572 = vadd.f32 %v363, %v571
        %573 = vmatmul.f32.gmra.mxu0 %v462
        %v574 = vpop.f32.mrf.mxu0
        %v575 = vadd.f32 %v363, %v574
        %576 = vdwg.mxu0
        %577 = vmatpush.msra.mxu0 0.0
        %578 = vmatpush.msra.mxu0 0.0
        %579 = vmatpush.msra.mxu0 0.0
        %580 = vmatpush.msra.mxu0 0.0
        %581 = vmatpush.msra.mxu0 0.0
        %582 = vmatpush.msra.mxu0 0.0
        %583 = vmatpush.msra.mxu0 0.0
        %584 = vmatpush.msra.mxu0 0.0
        %585 = vmatpush.msra.mxu0 0.0
        %586 = vmatpush.msra.mxu0 0.0
        %587 = vmatpush.msra.mxu0 0.0
        %588 = vmatpush.msra.mxu0 0.0
        %589 = vmatpush.msra.mxu0 0.0
        %590 = vmatpush.msra.mxu0 0.0
        %591 = vmatpush.msra.mxu0 0.0
        %592 = vmatpush.msra.mxu0 %v360
        %593 = vmatmul.f32.gmra.mxu0 %v369
        %v594 = vpop.f32.mrf.mxu0
        %v595 = vadd.f32 %v364, %v594
        %596 = vmatmul.f32.gmra.mxu0 %v372
        %v597 = vpop.f32.mrf.mxu0
        %v598 = vadd.f32 %v364, %v597
        %599 = vmatmul.f32.gmra.mxu0 %v375
        %v600 = vpop.f32.mrf.mxu0
        %v601 = vadd.f32 %v364, %v600
        %602 = vmatmul.f32.gmra.mxu0 %v378
        %v603 = vpop.f32.mrf.mxu0
        %v604 = vadd.f32 %v364, %v603
        %605 = vmatmul.f32.gmra.mxu0 %v381
        %v606 = vpop.f32.mrf.mxu0
        %v607 = vadd.f32 %v364, %v606
        %608 = vmatmul.f32.gmra.mxu0 %v384
        %v609 = vpop.f32.mrf.mxu0
        %v610 = vadd.f32 %v364, %v609
        %611 = vmatmul.f32.gmra.mxu0 %v387
        %v612 = vpop.f32.mrf.mxu0
        %v613 = vadd.f32 %v364, %v612
        %614 = vmatmul.f32.gmra.mxu0 %v390
        %v615 = vpop.f32.mrf.mxu0
        %v616 = vadd.f32 %v364, %v615
        %617 = vmatmul.f32.gmra.mxu0 %v393
        %v618 = vpop.f32.mrf.mxu0
        %v619 = vadd.f32 %v364, %v618
        %620 = vmatmul.f32.gmra.mxu0 %v396
        %v621 = vpop.f32.mrf.mxu0
        %v622 = vadd.f32 %v364, %v621
        %623 = vmatmul.f32.gmra.mxu0 %v399
        %v624 = vpop.f32.mrf.mxu0
        %v625 = vadd.f32 %v364, %v624
        %626 = vmatmul.f32.gmra.mxu0 %v402
        %v627 = vpop.f32.mrf.mxu0
        %v628 = vadd.f32 %v364, %v627
        %629 = vmatmul.f32.gmra.mxu0 %v405
        %v630 = vpop.f32.mrf.mxu0
        %v631 = vadd.f32 %v364, %v630
        %632 = vmatmul.f32.gmra.mxu0 %v408
        %v633 = vpop.f32.mrf.mxu0
        %v634 = vadd.f32 %v364, %v633
        %635 = vmatmul.f32.gmra.mxu0 %v411
        %v636 = vpop.f32.mrf.mxu0
        %v637 = vadd.f32 %v364, %v636
        %638 = vmatmul.f32.gmra.mxu0 %v414
        %v639 = vpop.f32.mrf.mxu0
        %v640 = vadd.f32 %v364, %v639
        %641 = vmatmul.f32.gmra.mxu0 %v417
        %v642 = vpop.f32.mrf.mxu0
        %v643 = vadd.f32 %v364, %v642
        %644 = vmatmul.f32.gmra.mxu0 %v420
        %v645 = vpop.f32.mrf.mxu0
        %v646 = vadd.f32 %v364, %v645
        %647 = vmatmul.f32.gmra.mxu0 %v423
        %v648 = vpop.f32.mrf.mxu0
        %v649 = vadd.f32 %v364, %v648
        %650 = vmatmul.f32.gmra.mxu0 %v426
        %v651 = vpop.f32.mrf.mxu0
        %v652 = vadd.f32 %v364, %v651
        %653 = vmatmul.f32.gmra.mxu0 %v429
        %v654 = vpop.f32.mrf.mxu0
        %v655 = vadd.f32 %v364, %v654
        %656 = vmatmul.f32.gmra.mxu0 %v432
        %v657 = vpop.f32.mrf.mxu0
        %v658 = vadd.f32 %v364, %v657
        %659 = vmatmul.f32.gmra.mxu0 %v435
        %v660 = vpop.f32.mrf.mxu0
        %v661 = vadd.f32 %v364, %v660
        %662 = vmatmul.f32.gmra.mxu0 %v438
        %v663 = vpop.f32.mrf.mxu0
        %v664 = vadd.f32 %v364, %v663
        %665 = vmatmul.f32.gmra.mxu0 %v441
        %v666 = vpop.f32.mrf.mxu0
        %v667 = vadd.f32 %v364, %v666
        %668 = vmatmul.f32.gmra.mxu0 %v444
        %v669 = vpop.f32.mrf.mxu0
        %v670 = vadd.f32 %v364, %v669
        %671 = vmatmul.f32.gmra.mxu0 %v447
        %v672 = vpop.f32.mrf.mxu0
        %v673 = vadd.f32 %v364, %v672
        %674 = vmatmul.f32.gmra.mxu0 %v450
        %v675 = vpop.f32.mrf.mxu0
        %v676 = vadd.f32 %v364, %v675
        %677 = vmatmul.f32.gmra.mxu0 %v453
        %v678 = vpop.f32.mrf.mxu0
        %v679 = vadd.f32 %v364, %v678
        %680 = vmatmul.f32.gmra.mxu0 %v456
        %v681 = vpop.f32.mrf.mxu0
        %v682 = vadd.f32 %v364, %v681
        %683 = vmatmul.f32.gmra.mxu0 %v459
        %v684 = vpop.f32.mrf.mxu0
        %v685 = vadd.f32 %v364, %v684
        %686 = vmatmul.f32.gmra.mxu0 %v462
        %v687 = vpop.f32.mrf.mxu0
        %v688 = vadd.f32 %v364, %v687
        %689 = vdwg.mxu0
        %v690 = vmax.f32 %v482, 0.0
        %v691 = vmax.f32 %v595, 0.0
        %v692 = vmax.f32 %v485, 0.0
        %v693 = vmax.f32 %v598, 0.0
        %v694 = vmax.f32 %v488, 0.0
        %v695 = vmax.f32 %v601, 0.0
        %v696 = vmax.f32 %v491, 0.0
        %v697 = vmax.f32 %v604, 0.0
        %v698 = vmax.f32 %v494, 0.0
        %v699 = vmax.f32 %v607, 0.0
        %v700 = vmax.f32 %v497, 0.0
        %v701 = vmax.f32 %v610, 0.0
        %v702 = vmax.f32 %v500, 0.0
        %v703 = vmax.f32 %v613, 0.0
        %v704 = vmax.f32 %v503, 0.0
        %v705 = vmax.f32 %v616, 0.0
        %v706 = vmax.f32 %v506, 0.0
        %v707 = vmax.f32 %v619, 0.0
        %v708 = vmax.f32 %v509, 0.0
        %v709 = vmax.f32 %v622, 0.0
        %v710 = vmax.f32 %v512, 0.0
        %v711 = vmax.f32 %v625, 0.0
        %v712 = vmax.f32 %v515, 0.0
        %v713 = vmax.f32 %v628, 0.0
        %v714 = vmax.f32 %v518, 0.0
        %v715 = vmax.f32 %v631, 0.0
        %v716 = vmax.f32 %v521, 0.0
        %v717 = vmax.f32 %v634, 0.0
        %v718 = vmax.f32 %v524, 0.0
        %v719 = vmax.f32 %v637, 0.0
        %v720 = vmax.f32 %v527, 0.0
        %v721 = vmax.f32 %v640, 0.0
        %v722 = vmax.f32 %v530, 0.0
        %v723 = vmax.f32 %v643, 0.0
        %v724 = vmax.f32 %v533, 0.0
        %v725 = vmax.f32 %v646, 0.0
        %v726 = vmax.f32 %v536, 0.0
        %v727 = vmax.f32 %v649, 0.0
        %v728 = vmax.f32 %v539, 0.0
        %v729 = vmax.f32 %v652, 0.0
        %v730 = vmax.f32 %v542, 0.0
        %v731 = vmax.f32 %v655, 0.0
        %v732 = vmax.f32 %v545, 0.0
        %v733 = vmax.f32 %v658, 0.0
        %v734 = vmax.f32 %v548, 0.0
        %v735 = vmax.f32 %v661, 0.0
        %v736 = vmax.f32 %v551, 0.0
        %v737 = vmax.f32 %v664, 0.0
        %v738 = vmax.f32 %v554, 0.0
        %v739 = vmax.f32 %v667, 0.0
        %v740 = vmax.f32 %v557, 0.0
        %v741 = vmax.f32 %v670, 0.0
        %v742 = vmax.f32 %v560, 0.0
        %v743 = vmax.f32 %v673, 0.0
        %v744 = vmax.f32 %v563, 0.0
        %v745 = vmax.f32 %v676, 0.0
        %v746 = vmax.f32 %v566, 0.0
        %v747 = vmax.f32 %v679, 0.0
        %v748 = vmax.f32 %v569, 0.0
        %v749 = vmax.f32 %v682, 0.0
        %v750 = vmax.f32 %v572, 0.0
        %v751 = vmax.f32 %v685, 0.0
        %v752 = vmax.f32 %v575, 0.0
        %v753 = vmax.f32 %v688, 0.0
        %v754 = vld [vmem:[#allocation5] sm:$0xff]
        %v755 = vld [vmem:[#allocation5 + $0x8] sm:$0xff]
        %v756 = vld [vmem:[#allocation5 + $0x10] sm:$0xff]
        %v757 = vld [vmem:[#allocation5 + $0x18] sm:$0xff]
        %v758 = vld [vmem:[#allocation5 + $0x20] sm:$0xff]
        %v759 = vld [vmem:[#allocation5 + $0x28] sm:$0xff]
        %v760 = vld [vmem:[#allocation5 + $0x30] sm:$0xff]
        %v761 = vld [vmem:[#allocation5 + $0x38] sm:$0xff]
        %v762 = vld [vmem:[#allocation5 + $0x40] sm:$0xff]
        %v763 = vld [vmem:[#allocation5 + $0x48] sm:$0xff]
        %v764 = vld [vmem:[#allocation5 + $0x50] sm:$0xff]
        %v765 = vld [vmem:[#allocation5 + $0x58] sm:$0xff]
        %v766 = vld [vmem:[#allocation5 + $0x60] sm:$0xff]
        %v767 = vld [vmem:[#allocation5 + $0x68] sm:$0xff]
        %v768 = vld [vmem:[#allocation5 + $0x70] sm:$0xff]
        %v769 = vld [vmem:[#allocation5 + $0x78] sm:$0xff]
        %v770 = vld [vmem:[#allocation5 + $0x80] sm:$0xff]
        %v771 = vld [vmem:[#allocation5 + $0x88] sm:$0xff]
        %v772 = vld [vmem:[#allocation5 + $0x90] sm:$0xff]
        %v773 = vld [vmem:[#allocation5 + $0x98] sm:$0xff]
        %v774 = vld [vmem:[#allocation5 + $0xa0] sm:$0xff]
        %v775 = vld [vmem:[#allocation5 + $0xa8] sm:$0xff]
        %v776 = vld [vmem:[#allocation5 + $0xb0] sm:$0xff]
        %v777 = vld [vmem:[#allocation5 + $0xb8] sm:$0xff]
        %v778 = vld [vmem:[#allocation5 + $0xc0] sm:$0xff]
        %v779 = vld [vmem:[#allocation5 + $0xc8] sm:$0xff]
        %v780 = vld [vmem:[#allocation5 + $0xd0] sm:$0xff]
        %v781 = vld [vmem:[#allocation5 + $0xd8] sm:$0xff]
        %v782 = vld [vmem:[#allocation5 + $0xe0] sm:$0xff]
        %v783 = vld [vmem:[#allocation5 + $0xe8] sm:$0xff]
        %v784 = vld [vmem:[#allocation5 + $0xf0] sm:$0xff]
        %v785 = vld [vmem:[#allocation5 + $0xf8] sm:$0xff]
        %v786 = vld [vmem:[#allocation5 + $0x100] sm:$0xff]
        %v787 = vld [vmem:[#allocation5 + $0x108] sm:$0xff]
        %v788 = vld [vmem:[#allocation5 + $0x110] sm:$0xff]
        %v789 = vld [vmem:[#allocation5 + $0x118] sm:$0xff]
        %v790 = vld [vmem:[#allocation5 + $0x120] sm:$0xff]
        %v791 = vld [vmem:[#allocation5 + $0x128] sm:$0xff]
        %v792 = vld [vmem:[#allocation5 + $0x130] sm:$0xff]
        %v793 = vld [vmem:[#allocation5 + $0x138] sm:$0xff]
        %v794 = vld [vmem:[#allocation5 + $0x140] sm:$0xff]
        %v795 = vld [vmem:[#allocation5 + $0x148] sm:$0xff]
        %v796 = vld [vmem:[#allocation5 + $0x150] sm:$0xff]
        %v797 = vld [vmem:[#allocation5 + $0x158] sm:$0xff]
        %v798 = vld [vmem:[#allocation5 + $0x160] sm:$0xff]
        %v799 = vld [vmem:[#allocation5 + $0x168] sm:$0xff]
        %v800 = vld [vmem:[#allocation5 + $0x170] sm:$0xff]
        %v801 = vld [vmem:[#allocation5 + $0x178] sm:$0xff]
        %v802 = vld [vmem:[#allocation5 + $0x180] sm:$0xff]
        %v803 = vld [vmem:[#allocation5 + $0x188] sm:$0xff]
        %v804 = vld [vmem:[#allocation5 + $0x190] sm:$0xff]
        %v805 = vld [vmem:[#allocation5 + $0x198] sm:$0xff]
        %v806 = vld [vmem:[#allocation5 + $0x1a0] sm:$0xff]
        %v807 = vld [vmem:[#allocation5 + $0x1a8] sm:$0xff]
        %v808 = vld [vmem:[#allocation5 + $0x1b0] sm:$0xff]
        %v809 = vld [vmem:[#allocation5 + $0x1b8] sm:$0xff]
        %v810 = vld [vmem:[#allocation5 + $0x1c0] sm:$0xff]
        %v811 = vld [vmem:[#allocation5 + $0x1c8] sm:$0xff]
        %v812 = vld [vmem:[#allocation5 + $0x1d0] sm:$0xff]
        %v813 = vld [vmem:[#allocation5 + $0x1d8] sm:$0xff]
        %v814 = vld [vmem:[#allocation5 + $0x1e0] sm:$0xff]
        %v815 = vld [vmem:[#allocation5 + $0x1e8] sm:$0xff]
        %v816 = vld [vmem:[#allocation5 + $0x1f0] sm:$0xff]
        %v817 = vld [vmem:[#allocation5 + $0x1f8] sm:$0xff]
        %v818 = vld [vmem:[%s4] sm:$0x3]
        %v820 = vperm.slane %v818, 0
        %v821 = vperm.slane %v818, 1
        %824 = vmatpush.msra.mxu0 %v784
        %825 = vmatpush.msra.mxu0 %v782
        %826 = vmatpush.msra.mxu0 %v780
        %827 = vmatpush.msra.mxu0 %v778
        %828 = vmatpush.msra.mxu0 %v776
        %829 = vmatpush.msra.mxu0 %v774
        %830 = vmatpush.msra.mxu0 %v772
        %831 = vmatpush.msra.mxu0 %v770
        %832 = vmatpush.msra.mxu0 %v768
        %833 = vmatpush.msra.mxu0 %v766
        %834 = vmatpush.msra.mxu0 %v764
        %835 = vmatpush.msra.mxu0 %v762
        %836 = vmatpush.msra.mxu0 %v760
        %837 = vmatpush.msra.mxu0 %v758
        %838 = vmatpush.msra.mxu0 %v756
        %839 = vmatpush.msra.mxu0 %v754
        %840 = vmatmul.f32.gmra.mxu0 %v690
        %v841 = vpop.f32.mrf.mxu0
        %v842 = vadd.f32 %v820, %v841
        %843 = vmatmul.f32.gmra.mxu0 %v692
        %v844 = vpop.f32.mrf.mxu0
        %v845 = vadd.f32 %v820, %v844
        %846 = vmatmul.f32.gmra.mxu0 %v694
        %v847 = vpop.f32.mrf.mxu0
        %v848 = vadd.f32 %v820, %v847
        %849 = vmatmul.f32.gmra.mxu0 %v696
        %v850 = vpop.f32.mrf.mxu0
        %v851 = vadd.f32 %v820, %v850
        %852 = vmatmul.f32.gmra.mxu0 %v698
        %v853 = vpop.f32.mrf.mxu0
        %v854 = vadd.f32 %v820, %v853
        %855 = vmatmul.f32.gmra.mxu0 %v700
        %v856 = vpop.f32.mrf.mxu0
        %v857 = vadd.f32 %v820, %v856
        %858 = vmatmul.f32.gmra.mxu0 %v702
        %v859 = vpop.f32.mrf.mxu0
        %v860 = vadd.f32 %v820, %v859
        %861 = vmatmul.f32.gmra.mxu0 %v704
        %v862 = vpop.f32.mrf.mxu0
        %v863 = vadd.f32 %v820, %v862
        %864 = vmatmul.f32.gmra.mxu0 %v706
        %v865 = vpop.f32.mrf.mxu0
        %v866 = vadd.f32 %v820, %v865
        %867 = vmatmul.f32.gmra.mxu0 %v708
        %v868 = vpop.f32.mrf.mxu0
        %v869 = vadd.f32 %v820, %v868
        %870 = vmatmul.f32.gmra.mxu0 %v710
        %v871 = vpop.f32.mrf.mxu0
        %v872 = vadd.f32 %v820, %v871
        %873 = vmatmul.f32.gmra.mxu0 %v712
        %v874 = vpop.f32.mrf.mxu0
        %v875 = vadd.f32 %v820, %v874
        %876 = vmatmul.f32.gmra.mxu0 %v714
        %v877 = vpop.f32.mrf.mxu0
        %v878 = vadd.f32 %v820, %v877
        %879 = vmatmul.f32.gmra.mxu0 %v716
        %v880 = vpop.f32.mrf.mxu0
        %v881 = vadd.f32 %v820, %v880
        %882 = vmatmul.f32.gmra.mxu0 %v718
        %v883 = vpop.f32.mrf.mxu0
        %v884 = vadd.f32 %v820, %v883
        %885 = vmatmul.f32.gmra.mxu0 %v720
        %v886 = vpop.f32.mrf.mxu0
        %v887 = vadd.f32 %v820, %v886
        %888 = vmatmul.f32.gmra.mxu0 %v722
        %v889 = vpop.f32.mrf.mxu0
        %v890 = vadd.f32 %v820, %v889
        %891 = vmatmul.f32.gmra.mxu0 %v724
        %v892 = vpop.f32.mrf.mxu0
        %v893 = vadd.f32 %v820, %v892
        %894 = vmatmul.f32.gmra.mxu0 %v726
        %v895 = vpop.f32.mrf.mxu0
        %v896 = vadd.f32 %v820, %v895
        %897 = vmatmul.f32.gmra.mxu0 %v728
        %v898 = vpop.f32.mrf.mxu0
        %v899 = vadd.f32 %v820, %v898
        %900 = vmatmul.f32.gmra.mxu0 %v730
        %v901 = vpop.f32.mrf.mxu0
        %v902 = vadd.f32 %v820, %v901
        %903 = vmatmul.f32.gmra.mxu0 %v732
        %v904 = vpop.f32.mrf.mxu0
        %v905 = vadd.f32 %v820, %v904
        %906 = vmatmul.f32.gmra.mxu0 %v734
        %v907 = vpop.f32.mrf.mxu0
        %v908 = vadd.f32 %v820, %v907
        %909 = vmatmul.f32.gmra.mxu0 %v736
        %v910 = vpop.f32.mrf.mxu0
        %v911 = vadd.f32 %v820, %v910
        %912 = vmatmul.f32.gmra.mxu0 %v738
        %v913 = vpop.f32.mrf.mxu0
        %v914 = vadd.f32 %v820, %v913
        %915 = vmatmul.f32.gmra.mxu0 %v740
        %v916 = vpop.f32.mrf.mxu0
        %v917 = vadd.f32 %v820, %v916
        %918 = vmatmul.f32.gmra.mxu0 %v742
        %v919 = vpop.f32.mrf.mxu0
        %v920 = vadd.f32 %v820, %v919
        %921 = vmatmul.f32.gmra.mxu0 %v744
        %v922 = vpop.f32.mrf.mxu0
        %v923 = vadd.f32 %v820, %v922
        %924 = vmatmul.f32.gmra.mxu0 %v746
        %v925 = vpop.f32.mrf.mxu0
        %v926 = vadd.f32 %v820, %v925
        %927 = vmatmul.f32.gmra.mxu0 %v748
        %v928 = vpop.f32.mrf.mxu0
        %v929 = vadd.f32 %v820, %v928
        %930 = vmatmul.f32.gmra.mxu0 %v750
        %v931 = vpop.f32.mrf.mxu0
        %v932 = vadd.f32 %v820, %v931
        %933 = vmatmul.f32.gmra.mxu0 %v752
        %v934 = vpop.f32.mrf.mxu0
        %v935 = vadd.f32 %v820, %v934
        %936 = vdwg.mxu0
        %937 = vmatpush.msra.mxu0 %v816
        %938 = vmatpush.msra.mxu0 %v814
        %939 = vmatpush.msra.mxu0 %v812
        %940 = vmatpush.msra.mxu0 %v810
        %941 = vmatpush.msra.mxu0 %v808
        %942 = vmatpush.msra.mxu0 %v806
        %943 = vmatpush.msra.mxu0 %v804
        %944 = vmatpush.msra.mxu0 %v802
        %945 = vmatpush.msra.mxu0 %v800
        %946 = vmatpush.msra.mxu0 %v798
        %947 = vmatpush.msra.mxu0 %v796
        %948 = vmatpush.msra.mxu0 %v794
        %949 = vmatpush.msra.mxu0 %v792
        %950 = vmatpush.msra.mxu0 %v790
        %951 = vmatpush.msra.mxu0 %v788
        %952 = vmatpush.msra.mxu0 %v786
        %953 = vmatmul.f32.gmra.mxu0 %v691
        %v954 = vpop.f32.mrf.mxu0
        %v955 = vadd.f32 %v842, %v954
        %956 = vmatmul.f32.gmra.mxu0 %v693
        %v957 = vpop.f32.mrf.mxu0
        %v958 = vadd.f32 %v845, %v957
        %959 = vmatmul.f32.gmra.mxu0 %v695
        %v960 = vpop.f32.mrf.mxu0
        %v961 = vadd.f32 %v848, %v960
        %962 = vmatmul.f32.gmra.mxu0 %v697
        %v963 = vpop.f32.mrf.mxu0
        %v964 = vadd.f32 %v851, %v963
        %965 = vmatmul.f32.gmra.mxu0 %v699
        %v966 = vpop.f32.mrf.mxu0
        %v967 = vadd.f32 %v854, %v966
        %968 = vmatmul.f32.gmra.mxu0 %v701
        %v969 = vpop.f32.mrf.mxu0
        %v970 = vadd.f32 %v857, %v969
        %971 = vmatmul.f32.gmra.mxu0 %v703
        %v972 = vpop.f32.mrf.mxu0
        %v973 = vadd.f32 %v860, %v972
        %974 = vmatmul.f32.gmra.mxu0 %v705
        %v975 = vpop.f32.mrf.mxu0
        %v976 = vadd.f32 %v863, %v975
        %977 = vmatmul.f32.gmra.mxu0 %v707
        %v978 = vpop.f32.mrf.mxu0
        %v979 = vadd.f32 %v866, %v978
        %980 = vmatmul.f32.gmra.mxu0 %v709
        %v981 = vpop.f32.mrf.mxu0
        %v982 = vadd.f32 %v869, %v981
        %983 = vmatmul.f32.gmra.mxu0 %v711
        %v984 = vpop.f32.mrf.mxu0
        %v985 = vadd.f32 %v872, %v984
        %986 = vmatmul.f32.gmra.mxu0 %v713
        %v987 = vpop.f32.mrf.mxu0
        %v988 = vadd.f32 %v875, %v987
        %989 = vmatmul.f32.gmra.mxu0 %v715
        %v990 = vpop.f32.mrf.mxu0
        %v991 = vadd.f32 %v878, %v990
        %992 = vmatmul.f32.gmra.mxu0 %v717
        %v993 = vpop.f32.mrf.mxu0
        %v994 = vadd.f32 %v881, %v993
        %995 = vmatmul.f32.gmra.mxu0 %v719
        %v996 = vpop.f32.mrf.mxu0
        %v997 = vadd.f32 %v884, %v996
        %998 = vmatmul.f32.gmra.mxu0 %v721
        %v999 = vpop.f32.mrf.mxu0
        %v1000 = vadd.f32 %v887, %v999
        %1001 = vmatmul.f32.gmra.mxu0 %v723
        %v1002 = vpop.f32.mrf.mxu0
        %v1003 = vadd.f32 %v890, %v1002
        %1004 = vmatmul.f32.gmra.mxu0 %v725
        %v1005 = vpop.f32.mrf.mxu0
        %v1006 = vadd.f32 %v893, %v1005
        %1007 = vmatmul.f32.gmra.mxu0 %v727
        %v1008 = vpop.f32.mrf.mxu0
        %v1009 = vadd.f32 %v896, %v1008
        %1010 = vmatmul.f32.gmra.mxu0 %v729
        %v1011 = vpop.f32.mrf.mxu0
        %v1012 = vadd.f32 %v899, %v1011
        %1013 = vmatmul.f32.gmra.mxu0 %v731
        %v1014 = vpop.f32.mrf.mxu0
        %v1015 = vadd.f32 %v902, %v1014
        %1016 = vmatmul.f32.gmra.mxu0 %v733
        %v1017 = vpop.f32.mrf.mxu0
        %v1018 = vadd.f32 %v905, %v1017
        %1019 = vmatmul.f32.gmra.mxu0 %v735
        %v1020 = vpop.f32.mrf.mxu0
        %v1021 = vadd.f32 %v908, %v1020
        %1022 = vmatmul.f32.gmra.mxu0 %v737
        %v1023 = vpop.f32.mrf.mxu0
        %v1024 = vadd.f32 %v911, %v1023
        %1025 = vmatmul.f32.gmra.mxu0 %v739
        %v1026 = vpop.f32.mrf.mxu0
        %v1027 = vadd.f32 %v914, %v1026
        %1028 = vmatmul.f32.gmra.mxu0 %v741
        %v1029 = vpop.f32.mrf.mxu0
        %v1030 = vadd.f32 %v917, %v1029
        %1031 = vmatmul.f32.gmra.mxu0 %v743
        %v1032 = vpop.f32.mrf.mxu0
        %v1033 = vadd.f32 %v920, %v1032
        %1034 = vmatmul.f32.gmra.mxu0 %v745
        %v1035 = vpop.f32.mrf.mxu0
        %v1036 = vadd.f32 %v923, %v1035
        %1037 = vmatmul.f32.gmra.mxu0 %v747
        %v1038 = vpop.f32.mrf.mxu0
        %v1039 = vadd.f32 %v926, %v1038
        %1040 = vmatmul.f32.gmra.mxu0 %v749
        %v1041 = vpop.f32.mrf.mxu0
        %v1042 = vadd.f32 %v929, %v1041
        %1043 = vmatmul.f32.gmra.mxu0 %v751
        %v1044 = vpop.f32.mrf.mxu0
        %v1045 = vadd.f32 %v932, %v1044
        %1046 = vmatmul.f32.gmra.mxu0 %v753
        %v1047 = vpop.f32.mrf.mxu0
        %v1048 = vadd.f32 %v935, %v1047
        %1049 = vdwg.mxu0
        %1050 = vmatpush.msra.mxu0 %v785
        %1051 = vmatpush.msra.mxu0 %v783
        %1052 = vmatpush.msra.mxu0 %v781
        %1053 = vmatpush.msra.mxu0 %v779
        %1054 = vmatpush.msra.mxu0 %v777
        %1055 = vmatpush.msra.mxu0 %v775
        %1056 = vmatpush.msra.mxu0 %v773
        %1057 = vmatpush.msra.mxu0 %v771
        %1058 = vmatpush.msra.mxu0 %v769
        %1059 = vmatpush.msra.mxu0 %v767
        %1060 = vmatpush.msra.mxu0 %v765
        %1061 = vmatpush.msra.mxu0 %v763
        %1062 = vmatpush.msra.mxu0 %v761
        %1063 = vmatpush.msra.mxu0 %v759
        %1064 = vmatpush.msra.mxu0 %v757
        %1065 = vmatpush.msra.mxu0 %v755
        %1066 = vmatmul.f32.gmra.mxu0 %v690
        %v1067 = vpop.f32.mrf.mxu0
        %v1068 = vadd.f32 %v821, %v1067
        %1069 = vmatmul.f32.gmra.mxu0 %v692
        %v1070 = vpop.f32.mrf.mxu0
        %v1071 = vadd.f32 %v821, %v1070
        %1072 = vmatmul.f32.gmra.mxu0 %v694
        %v1073 = vpop.f32.mrf.mxu0
        %v1074 = vadd.f32 %v821, %v1073
        %1075 = vmatmul.f32.gmra.mxu0 %v696
        %v1076 = vpop.f32.mrf.mxu0
        %v1077 = vadd.f32 %v821, %v1076
        %1078 = vmatmul.f32.gmra.mxu0 %v698
        %v1079 = vpop.f32.mrf.mxu0
        %v1080 = vadd.f32 %v821, %v1079
        %1081 = vmatmul.f32.gmra.mxu0 %v700
        %v1082 = vpop.f32.mrf.mxu0
        %v1083 = vadd.f32 %v821, %v1082
        %1084 = vmatmul.f32.gmra.mxu0 %v702
        %v1085 = vpop.f32.mrf.mxu0
        %v1086 = vadd.f32 %v821, %v1085
        %1087 = vmatmul.f32.gmra.mxu0 %v704
        %v1088 = vpop.f32.mrf.mxu0
        %v1089 = vadd.f32 %v821, %v1088
        %1090 = vmatmul.f32.gmra.mxu0 %v706
        %v1091 = vpop.f32.mrf.mxu0
        %v1092 = vadd.f32 %v821, %v1091
        %1093 = vmatmul.f32.gmra.mxu0 %v708
        %v1094 = vpop.f32.mrf.mxu0
        %v1095 = vadd.f32 %v821, %v1094
        %1096 = vmatmul.f32.gmra.mxu0 %v710
        %v1097 = vpop.f32.mrf.mxu0
        %v1098 = vadd.f32 %v821, %v1097
        %1099 = vmatmul.f32.gmra.mxu0 %v712
        %v1100 = vpop.f32.mrf.mxu0
        %v1101 = vadd.f32 %v821, %v1100
        %1102 = vmatmul.f32.gmra.mxu0 %v714
        %v1103 = vpop.f32.mrf.mxu0
        %v1104 = vadd.f32 %v821, %v1103
        %1105 = vmatmul.f32.gmra.mxu0 %v716
        %v1106 = vpop.f32.mrf.mxu0
        %v1107 = vadd.f32 %v821, %v1106
        %1108 = vmatmul.f32.gmra.mxu0 %v718
        %v1109 = vpop.f32.mrf.mxu0
        %v1110 = vadd.f32 %v821, %v1109
        %1111 = vmatmul.f32.gmra.mxu0 %v720
        %v1112 = vpop.f32.mrf.mxu0
        %v1113 = vadd.f32 %v821, %v1112
        %1114 = vmatmul.f32.gmra.mxu0 %v722
        %v1115 = vpop.f32.mrf.mxu0
        %v1116 = vadd.f32 %v821, %v1115
        %1117 = vmatmul.f32.gmra.mxu0 %v724
        %v1118 = vpop.f32.mrf.mxu0
        %v1119 = vadd.f32 %v821, %v1118
        %1120 = vmatmul.f32.gmra.mxu0 %v726
        %v1121 = vpop.f32.mrf.mxu0
        %v1122 = vadd.f32 %v821, %v1121
        %1123 = vmatmul.f32.gmra.mxu0 %v728
        %v1124 = vpop.f32.mrf.mxu0
        %v1125 = vadd.f32 %v821, %v1124
        %1126 = vmatmul.f32.gmra.mxu0 %v730
        %v1127 = vpop.f32.mrf.mxu0
        %v1128 = vadd.f32 %v821, %v1127
        %1129 = vmatmul.f32.gmra.mxu0 %v732
        %v1130 = vpop.f32.mrf.mxu0
        %v1131 = vadd.f32 %v821, %v1130
        %1132 = vmatmul.f32.gmra.mxu0 %v734
        %v1133 = vpop.f32.mrf.mxu0
        %v1134 = vadd.f32 %v821, %v1133
        %1135 = vmatmul.f32.gmra.mxu0 %v736
        %v1136 = vpop.f32.mrf.mxu0
        %v1137 = vadd.f32 %v821, %v1136
        %1138 = vmatmul.f32.gmra.mxu0 %v738
        %v1139 = vpop.f32.mrf.mxu0
        %v1140 = vadd.f32 %v821, %v1139
        %1141 = vmatmul.f32.gmra.mxu0 %v740
        %v1142 = vpop.f32.mrf.mxu0
        %v1143 = vadd.f32 %v821, %v1142
        %1144 = vmatmul.f32.gmra.mxu0 %v742
        %v1145 = vpop.f32.mrf.mxu0
        %v1146 = vadd.f32 %v821, %v1145
        %1147 = vmatmul.f32.gmra.mxu0 %v744
        %v1148 = vpop.f32.mrf.mxu0
        %v1149 = vadd.f32 %v821, %v1148
        %1150 = vmatmul.f32.gmra.mxu0 %v746
        %v1151 = vpop.f32.mrf.mxu0
        %v1152 = vadd.f32 %v821, %v1151
        %1153 = vmatmul.f32.gmra.mxu0 %v748
        %v1154 = vpop.f32.mrf.mxu0
        %v1155 = vadd.f32 %v821, %v1154
        %1156 = vmatmul.f32.gmra.mxu0 %v750
        %v1157 = vpop.f32.mrf.mxu0
        %v1158 = vadd.f32 %v821, %v1157
        %1159 = vmatmul.f32.gmra.mxu0 %v752
        %v1160 = vpop.f32.mrf.mxu0
        %v1161 = vadd.f32 %v821, %v1160
        %1162 = vdwg.mxu0
        %1163 = vmatpush.msra.mxu0 %v817
        %1164 = vmatpush.msra.mxu0 %v815
        %1165 = vmatpush.msra.mxu0 %v813
        %1166 = vmatpush.msra.mxu0 %v811
        %1167 = vmatpush.msra.mxu0 %v809
        %1168 = vmatpush.msra.mxu0 %v807
        %1169 = vmatpush.msra.mxu0 %v805
        %1170 = vmatpush.msra.mxu0 %v803
        %1171 = vmatpush.msra.mxu0 %v801
        %1172 = vmatpush.msra.mxu0 %v799
        %1173 = vmatpush.msra.mxu0 %v797
        %1174 = vmatpush.msra.mxu0 %v795
        %1175 = vmatpush.msra.mxu0 %v793
        %1176 = vmatpush.msra.mxu0 %v791
        %1177 = vmatpush.msra.mxu0 %v789
        %1178 = vmatpush.msra.mxu0 %v787
        %1179 = vmatmul.f32.gmra.mxu0 %v691
        %v1180 = vpop.f32.mrf.mxu0
        %v1181 = vadd.f32 %v1068, %v1180
        %1182 = vmatmul.f32.gmra.mxu0 %v693
        %v1183 = vpop.f32.mrf.mxu0
        %v1184 = vadd.f32 %v1071, %v1183
        %1185 = vmatmul.f32.gmra.mxu0 %v695
        %v1186 = vpop.f32.mrf.mxu0
        %v1187 = vadd.f32 %v1074, %v1186
        %1188 = vmatmul.f32.gmra.mxu0 %v697
        %v1189 = vpop.f32.mrf.mxu0
        %v1190 = vadd.f32 %v1077, %v1189
        %1191 = vmatmul.f32.gmra.mxu0 %v699
        %v1192 = vpop.f32.mrf.mxu0
        %v1193 = vadd.f32 %v1080, %v1192
        %1194 = vmatmul.f32.gmra.mxu0 %v701
        %v1195 = vpop.f32.mrf.mxu0
        %v1196 = vadd.f32 %v1083, %v1195
        %1197 = vmatmul.f32.gmra.mxu0 %v703
        %v1198 = vpop.f32.mrf.mxu0
        %v1199 = vadd.f32 %v1086, %v1198
        %1200 = vmatmul.f32.gmra.mxu0 %v705
        %v1201 = vpop.f32.mrf.mxu0
        %v1202 = vadd.f32 %v1089, %v1201
        %1203 = vmatmul.f32.gmra.mxu0 %v707
        %v1204 = vpop.f32.mrf.mxu0
        %v1205 = vadd.f32 %v1092, %v1204
        %1206 = vmatmul.f32.gmra.mxu0 %v709
        %v1207 = vpop.f32.mrf.mxu0
        %v1208 = vadd.f32 %v1095, %v1207
        %1209 = vmatmul.f32.gmra.mxu0 %v711
        %v1210 = vpop.f32.mrf.mxu0
        %v1211 = vadd.f32 %v1098, %v1210
        %1212 = vmatmul.f32.gmra.mxu0 %v713
        %v1213 = vpop.f32.mrf.mxu0
        %v1214 = vadd.f32 %v1101, %v1213
        %1215 = vmatmul.f32.gmra.mxu0 %v715
        %v1216 = vpop.f32.mrf.mxu0
        %v1217 = vadd.f32 %v1104, %v1216
        %1218 = vmatmul.f32.gmra.mxu0 %v717
        %v1219 = vpop.f32.mrf.mxu0
        %v1220 = vadd.f32 %v1107, %v1219
        %1221 = vmatmul.f32.gmra.mxu0 %v719
        %v1222 = vpop.f32.mrf.mxu0
        %v1223 = vadd.f32 %v1110, %v1222
        %1224 = vmatmul.f32.gmra.mxu0 %v721
        %v1225 = vpop.f32.mrf.mxu0
        %v1226 = vadd.f32 %v1113, %v1225
        %1227 = vmatmul.f32.gmra.mxu0 %v723
        %v1228 = vpop.f32.mrf.mxu0
        %v1229 = vadd.f32 %v1116, %v1228
        %1230 = vmatmul.f32.gmra.mxu0 %v725
        %v1231 = vpop.f32.mrf.mxu0
        %v1232 = vadd.f32 %v1119, %v1231
        %1233 = vmatmul.f32.gmra.mxu0 %v727
        %v1234 = vpop.f32.mrf.mxu0
        %v1235 = vadd.f32 %v1122, %v1234
        %1236 = vmatmul.f32.gmra.mxu0 %v729
        %v1237 = vpop.f32.mrf.mxu0
        %v1238 = vadd.f32 %v1125, %v1237
        %1239 = vmatmul.f32.gmra.mxu0 %v731
        %v1240 = vpop.f32.mrf.mxu0
        %v1241 = vadd.f32 %v1128, %v1240
        %1242 = vmatmul.f32.gmra.mxu0 %v733
        %v1243 = vpop.f32.mrf.mxu0
        %v1244 = vadd.f32 %v1131, %v1243
        %1245 = vmatmul.f32.gmra.mxu0 %v735
        %v1246 = vpop.f32.mrf.mxu0
        %v1247 = vadd.f32 %v1134, %v1246
        %1248 = vmatmul.f32.gmra.mxu0 %v737
        %v1249 = vpop.f32.mrf.mxu0
        %v1250 = vadd.f32 %v1137, %v1249
        %1251 = vmatmul.f32.gmra.mxu0 %v739
        %v1252 = vpop.f32.mrf.mxu0
        %v1253 = vadd.f32 %v1140, %v1252
        %1254 = vmatmul.f32.gmra.mxu0 %v741
        %v1255 = vpop.f32.mrf.mxu0
        %v1256 = vadd.f32 %v1143, %v1255
        %1257 = vmatmul.f32.gmra.mxu0 %v743
        %v1258 = vpop.f32.mrf.mxu0
        %v1259 = vadd.f32 %v1146, %v1258
        %1260 = vmatmul.f32.gmra.mxu0 %v745
        %v1261 = vpop.f32.mrf.mxu0
        %v1262 = vadd.f32 %v1149, %v1261
        %1263 = vmatmul.f32.gmra.mxu0 %v747
        %v1264 = vpop.f32.mrf.mxu0
        %v1265 = vadd.f32 %v1152, %v1264
        %1266 = vmatmul.f32.gmra.mxu0 %v749
        %v1267 = vpop.f32.mrf.mxu0
        %v1268 = vadd.f32 %v1155, %v1267
        %1269 = vmatmul.f32.gmra.mxu0 %v751
        %v1270 = vpop.f32.mrf.mxu0
        %v1271 = vadd.f32 %v1158, %v1270
        %1272 = vmatmul.f32.gmra.mxu0 %v753
        %v1273 = vpop.f32.mrf.mxu0
        %v1274 = vadd.f32 %v1161, %v1273
        %1275 = vdwg.mxu0
        %v1276 = vmax.f32 %v955, 0.0
        %v1277 = vmax.f32 %v1181, 0.0
        %v1278 = vmax.f32 %v958, 0.0
        %v1279 = vmax.f32 %v1184, 0.0
        %v1280 = vmax.f32 %v961, 0.0
        %v1281 = vmax.f32 %v1187, 0.0
        %v1282 = vmax.f32 %v964, 0.0
        %v1283 = vmax.f32 %v1190, 0.0
        %v1284 = vmax.f32 %v967, 0.0
        %v1285 = vmax.f32 %v1193, 0.0
        %v1286 = vmax.f32 %v970, 0.0
        %v1287 = vmax.f32 %v1196, 0.0
        %v1288 = vmax.f32 %v973, 0.0
        %v1289 = vmax.f32 %v1199, 0.0
        %v1290 = vmax.f32 %v976, 0.0
        %v1291 = vmax.f32 %v1202, 0.0
        %v1292 = vmax.f32 %v979, 0.0
        %v1293 = vmax.f32 %v1205, 0.0
        %v1294 = vmax.f32 %v982, 0.0
        %v1295 = vmax.f32 %v1208, 0.0
        %v1296 = vmax.f32 %v985, 0.0
        %v1297 = vmax.f32 %v1211, 0.0
        %v1298 = vmax.f32 %v988, 0.0
        %v1299 = vmax.f32 %v1214, 0.0
        %v1300 = vmax.f32 %v991, 0.0
        %v1301 = vmax.f32 %v1217, 0.0
        %v1302 = vmax.f32 %v994, 0.0
        %v1303 = vmax.f32 %v1220, 0.0
        %v1304 = vmax.f32 %v997, 0.0
        %v1305 = vmax.f32 %v1223, 0.0
        %v1306 = vmax.f32 %v1000, 0.0
        %v1307 = vmax.f32 %v1226, 0.0
        %v1308 = vmax.f32 %v1003, 0.0
        %v1309 = vmax.f32 %v1229, 0.0
        %v1310 = vmax.f32 %v1006, 0.0
        %v1311 = vmax.f32 %v1232, 0.0
        %v1312 = vmax.f32 %v1009, 0.0
        %v1313 = vmax.f32 %v1235, 0.0
        %v1314 = vmax.f32 %v1012, 0.0
        %v1315 = vmax.f32 %v1238, 0.0
        %v1316 = vmax.f32 %v1015, 0.0
        %v1317 = vmax.f32 %v1241, 0.0
        %v1318 = vmax.f32 %v1018, 0.0
        %v1319 = vmax.f32 %v1244, 0.0
        %v1320 = vmax.f32 %v1021, 0.0
        %v1321 = vmax.f32 %v1247, 0.0
        %v1322 = vmax.f32 %v1024, 0.0
        %v1323 = vmax.f32 %v1250, 0.0
        %v1324 = vmax.f32 %v1027, 0.0
        %v1325 = vmax.f32 %v1253, 0.0
        %v1326 = vmax.f32 %v1030, 0.0
        %v1327 = vmax.f32 %v1256, 0.0
        %v1328 = vmax.f32 %v1033, 0.0
        %v1329 = vmax.f32 %v1259, 0.0
        %v1330 = vmax.f32 %v1036, 0.0
        %v1331 = vmax.f32 %v1262, 0.0
        %v1332 = vmax.f32 %v1039, 0.0
        %v1333 = vmax.f32 %v1265, 0.0
        %v1334 = vmax.f32 %v1042, 0.0
        %v1335 = vmax.f32 %v1268, 0.0
        %v1336 = vmax.f32 %v1045, 0.0
        %v1337 = vmax.f32 %v1271, 0.0
        %v1338 = vmax.f32 %v1048, 0.0
        %v1339 = vmax.f32 %v1274, 0.0
        %s1340 = scalar_lea.vmem [#allocation5], 512
        %v1341 = vld [vmem:[%s1340] sm:$0xff]
        %v1342 = vld [vmem:[%s1340 + $0x8] sm:$0xff]
        %v1343 = vld [vmem:[%s1340 + $0x10] sm:$0xff]
        %v1344 = vld [vmem:[%s1340 + $0x18] sm:$0xff]
        %v1345 = vld [vmem:[%s1340 + $0x20] sm:$0xff]
        %v1346 = vld [vmem:[%s1340 + $0x28] sm:$0xff]
        %v1347 = vld [vmem:[%s1340 + $0x30] sm:$0xff]
        %v1348 = vld [vmem:[%s1340 + $0x38] sm:$0xff]
        %v1349 = vld [vmem:[%s1340 + $0x40] sm:$0xff]
        %v1350 = vld [vmem:[%s1340 + $0x48] sm:$0xff]
        %v1351 = vld [vmem:[%s1340 + $0x50] sm:$0xff]
        %v1352 = vld [vmem:[%s1340 + $0x58] sm:$0xff]
        %v1353 = vld [vmem:[%s1340 + $0x60] sm:$0xff]
        %v1354 = vld [vmem:[%s1340 + $0x68] sm:$0xff]
        %v1355 = vld [vmem:[%s1340 + $0x70] sm:$0xff]
        %v1356 = vld [vmem:[%s1340 + $0x78] sm:$0xff]
        %v1357 = vld [vmem:[%s1340 + $0x80] sm:$0xff]
        %v1358 = vld [vmem:[%s1340 + $0x88] sm:$0xff]
        %v1359 = vld [vmem:[%s1340 + $0x90] sm:$0xff]
        %v1360 = vld [vmem:[%s1340 + $0x98] sm:$0xff]
        %v1361 = vld [vmem:[%s1340 + $0xa0] sm:$0xff]
        %v1362 = vld [vmem:[%s1340 + $0xa8] sm:$0xff]
        %v1363 = vld [vmem:[%s1340 + $0xb0] sm:$0xff]
        %v1364 = vld [vmem:[%s1340 + $0xb8] sm:$0xff]
        %v1365 = vld [vmem:[%s1340 + $0xc0] sm:$0xff]
        %v1366 = vld [vmem:[%s1340 + $0xc8] sm:$0xff]
        %v1367 = vld [vmem:[%s1340 + $0xd0] sm:$0xff]
        %v1368 = vld [vmem:[%s1340 + $0xd8] sm:$0xff]
        %v1369 = vld [vmem:[%s1340 + $0xe0] sm:$0xff]
        %v1370 = vld [vmem:[%s1340 + $0xe8] sm:$0xff]
        %v1371 = vld [vmem:[%s1340 + $0xf0] sm:$0xff]
        %v1372 = vld [vmem:[%s1340 + $0xf8] sm:$0xff]
        %v1373 = vld [vmem:[%s1340 + $0x100] sm:$0xff]
        %v1374 = vld [vmem:[%s1340 + $0x108] sm:$0xff]
        %v1375 = vld [vmem:[%s1340 + $0x110] sm:$0xff]
        %v1376 = vld [vmem:[%s1340 + $0x118] sm:$0xff]
        %v1377 = vld [vmem:[%s1340 + $0x120] sm:$0xff]
        %v1378 = vld [vmem:[%s1340 + $0x128] sm:$0xff]
        %v1379 = vld [vmem:[%s1340 + $0x130] sm:$0xff]
        %v1380 = vld [vmem:[%s1340 + $0x138] sm:$0xff]
        %v1381 = vld [vmem:[%s1340 + $0x140] sm:$0xff]
        %v1382 = vld [vmem:[%s1340 + $0x148] sm:$0xff]
        %v1383 = vld [vmem:[%s1340 + $0x150] sm:$0xff]
        %v1384 = vld [vmem:[%s1340 + $0x158] sm:$0xff]
        %v1385 = vld [vmem:[%s1340 + $0x160] sm:$0xff]
        %v1386 = vld [vmem:[%s1340 + $0x168] sm:$0xff]
        %v1387 = vld [vmem:[%s1340 + $0x170] sm:$0xff]
        %v1388 = vld [vmem:[%s1340 + $0x178] sm:$0xff]
        %v1389 = vld [vmem:[%s1340 + $0x180] sm:$0xff]
        %v1390 = vld [vmem:[%s1340 + $0x188] sm:$0xff]
        %v1391 = vld [vmem:[%s1340 + $0x190] sm:$0xff]
        %v1392 = vld [vmem:[%s1340 + $0x198] sm:$0xff]
        %v1393 = vld [vmem:[%s1340 + $0x1a0] sm:$0xff]
        %v1394 = vld [vmem:[%s1340 + $0x1a8] sm:$0xff]
        %v1395 = vld [vmem:[%s1340 + $0x1b0] sm:$0xff]
        %v1396 = vld [vmem:[%s1340 + $0x1b8] sm:$0xff]
        %v1397 = vld [vmem:[%s1340 + $0x1c0] sm:$0xff]
        %v1398 = vld [vmem:[%s1340 + $0x1c8] sm:$0xff]
        %v1399 = vld [vmem:[%s1340 + $0x1d0] sm:$0xff]
        %v1400 = vld [vmem:[%s1340 + $0x1d8] sm:$0xff]
        %v1401 = vld [vmem:[%s1340 + $0x1e0] sm:$0xff]
        %v1402 = vld [vmem:[%s1340 + $0x1e8] sm:$0xff]
        %v1403 = vld [vmem:[%s1340 + $0x1f0] sm:$0xff]
        %v1404 = vld [vmem:[%s1340 + $0x1f8] sm:$0xff]
        %s1405 = scalar_lea.vmem %s4, 2
        %v1406 = vld [vmem:[%s1405] sm:$0x3]
        %v1408 = vperm.slane %v1406, 0
        %v1409 = vperm.slane %v1406, 1
        %1412 = vmatpush.msra.mxu0 %v1371
        %1413 = vmatpush.msra.mxu0 %v1369
        %1414 = vmatpush.msra.mxu0 %v1367
        %1415 = vmatpush.msra.mxu0 %v1365
        %1416 = vmatpush.msra.mxu0 %v1363
        %1417 = vmatpush.msra.mxu0 %v1361
        %1418 = vmatpush.msra.mxu0 %v1359
        %1419 = vmatpush.msra.mxu0 %v1357
        %1420 = vmatpush.msra.mxu0 %v1355
        %1421 = vmatpush.msra.mxu0 %v1353
        %1422 = vmatpush.msra.mxu0 %v1351
        %1423 = vmatpush.msra.mxu0 %v1349
        %1424 = vmatpush.msra.mxu0 %v1347
        %1425 = vmatpush.msra.mxu0 %v1345
        %1426 = vmatpush.msra.mxu0 %v1343
        %1427 = vmatpush.msra.mxu0 %v1341
        %1428 = vmatmul.f32.gmra.mxu0 %v1276
        %v1429 = vpop.f32.mrf.mxu0
        %v1430 = vadd.f32 %v1408, %v1429
        %1431 = vmatmul.f32.gmra.mxu0 %v1278
        %v1432 = vpop.f32.mrf.mxu0
        %v1433 = vadd.f32 %v1408, %v1432
        %1434 = vmatmul.f32.gmra.mxu0 %v1280
        %v1435 = vpop.f32.mrf.mxu0
        %v1436 = vadd.f32 %v1408, %v1435
        %1437 = vmatmul.f32.gmra.mxu0 %v1282
        %v1438 = vpop.f32.mrf.mxu0
        %v1439 = vadd.f32 %v1408, %v1438
        %1440 = vmatmul.f32.gmra.mxu0 %v1284
        %v1441 = vpop.f32.mrf.mxu0
        %v1442 = vadd.f32 %v1408, %v1441
        %1443 = vmatmul.f32.gmra.mxu0 %v1286
        %v1444 = vpop.f32.mrf.mxu0
        %v1445 = vadd.f32 %v1408, %v1444
        %1446 = vmatmul.f32.gmra.mxu0 %v1288
        %v1447 = vpop.f32.mrf.mxu0
        %v1448 = vadd.f32 %v1408, %v1447
        %1449 = vmatmul.f32.gmra.mxu0 %v1290
        %v1450 = vpop.f32.mrf.mxu0
        %v1451 = vadd.f32 %v1408, %v1450
        %1452 = vmatmul.f32.gmra.mxu0 %v1292
        %v1453 = vpop.f32.mrf.mxu0
        %v1454 = vadd.f32 %v1408, %v1453
        %1455 = vmatmul.f32.gmra.mxu0 %v1294
        %v1456 = vpop.f32.mrf.mxu0
        %v1457 = vadd.f32 %v1408, %v1456
        %1458 = vmatmul.f32.gmra.mxu0 %v1296
        %v1459 = vpop.f32.mrf.mxu0
        %v1460 = vadd.f32 %v1408, %v1459
        %1461 = vmatmul.f32.gmra.mxu0 %v1298
        %v1462 = vpop.f32.mrf.mxu0
        %v1463 = vadd.f32 %v1408, %v1462
        %1464 = vmatmul.f32.gmra.mxu0 %v1300
        %v1465 = vpop.f32.mrf.mxu0
        %v1466 = vadd.f32 %v1408, %v1465
        %1467 = vmatmul.f32.gmra.mxu0 %v1302
        %v1468 = vpop.f32.mrf.mxu0
        %v1469 = vadd.f32 %v1408, %v1468
        %1470 = vmatmul.f32.gmra.mxu0 %v1304
        %v1471 = vpop.f32.mrf.mxu0
        %v1472 = vadd.f32 %v1408, %v1471
        %1473 = vmatmul.f32.gmra.mxu0 %v1306
        %v1474 = vpop.f32.mrf.mxu0
        %v1475 = vadd.f32 %v1408, %v1474
        %1476 = vmatmul.f32.gmra.mxu0 %v1308
        %v1477 = vpop.f32.mrf.mxu0
        %v1478 = vadd.f32 %v1408, %v1477
        %1479 = vmatmul.f32.gmra.mxu0 %v1310
        %v1480 = vpop.f32.mrf.mxu0
        %v1481 = vadd.f32 %v1408, %v1480
        %1482 = vmatmul.f32.gmra.mxu0 %v1312
        %v1483 = vpop.f32.mrf.mxu0
        %v1484 = vadd.f32 %v1408, %v1483
        %1485 = vmatmul.f32.gmra.mxu0 %v1314
        %v1486 = vpop.f32.mrf.mxu0
        %v1487 = vadd.f32 %v1408, %v1486
        %1488 = vmatmul.f32.gmra.mxu0 %v1316
        %v1489 = vpop.f32.mrf.mxu0
        %v1490 = vadd.f32 %v1408, %v1489
        %1491 = vmatmul.f32.gmra.mxu0 %v1318
        %v1492 = vpop.f32.mrf.mxu0
        %v1493 = vadd.f32 %v1408, %v1492
        %1494 = vmatmul.f32.gmra.mxu0 %v1320
        %v1495 = vpop.f32.mrf.mxu0
        %v1496 = vadd.f32 %v1408, %v1495
        %1497 = vmatmul.f32.gmra.mxu0 %v1322
        %v1498 = vpop.f32.mrf.mxu0
        %v1499 = vadd.f32 %v1408, %v1498
        %1500 = vmatmul.f32.gmra.mxu0 %v1324
        %v1501 = vpop.f32.mrf.mxu0
        %v1502 = vadd.f32 %v1408, %v1501
        %1503 = vmatmul.f32.gmra.mxu0 %v1326
        %v1504 = vpop.f32.mrf.mxu0
        %v1505 = vadd.f32 %v1408, %v1504
        %1506 = vmatmul.f32.gmra.mxu0 %v1328
        %v1507 = vpop.f32.mrf.mxu0
        %v1508 = vadd.f32 %v1408, %v1507
        %1509 = vmatmul.f32.gmra.mxu0 %v1330
        %v1510 = vpop.f32.mrf.mxu0
        %v1511 = vadd.f32 %v1408, %v1510
        %1512 = vmatmul.f32.gmra.mxu0 %v1332
        %v1513 = vpop.f32.mrf.mxu0
        %v1514 = vadd.f32 %v1408, %v1513
        %1515 = vmatmul.f32.gmra.mxu0 %v1334
        %v1516 = vpop.f32.mrf.mxu0
        %v1517 = vadd.f32 %v1408, %v1516
        %1518 = vmatmul.f32.gmra.mxu0 %v1336
        %v1519 = vpop.f32.mrf.mxu0
        %v1520 = vadd.f32 %v1408, %v1519
        %1521 = vmatmul.f32.gmra.mxu0 %v1338
        %v1522 = vpop.f32.mrf.mxu0
        %v1523 = vadd.f32 %v1408, %v1522
        %1524 = vdwg.mxu0
        %1525 = vmatpush.msra.mxu0 %v1403
        %1526 = vmatpush.msra.mxu0 %v1401
        %1527 = vmatpush.msra.mxu0 %v1399
        %1528 = vmatpush.msra.mxu0 %v1397
        %1529 = vmatpush.msra.mxu0 %v1395
        %1530 = vmatpush.msra.mxu0 %v1393
        %1531 = vmatpush.msra.mxu0 %v1391
        %1532 = vmatpush.msra.mxu0 %v1389
        %1533 = vmatpush.msra.mxu0 %v1387
        %1534 = vmatpush.msra.mxu0 %v1385
        %1535 = vmatpush.msra.mxu0 %v1383
        %1536 = vmatpush.msra.mxu0 %v1381
        %1537 = vmatpush.msra.mxu0 %v1379
        %1538 = vmatpush.msra.mxu0 %v1377
        %1539 = vmatpush.msra.mxu0 %v1375
        %1540 = vmatpush.msra.mxu0 %v1373
        %1541 = vmatmul.f32.gmra.mxu0 %v1277
        %v1542 = vpop.f32.mrf.mxu0
        %v1543 = vadd.f32 %v1430, %v1542
        %1544 = vmatmul.f32.gmra.mxu0 %v1279
        %v1545 = vpop.f32.mrf.mxu0
        %v1546 = vadd.f32 %v1433, %v1545
        %1547 = vmatmul.f32.gmra.mxu0 %v1281
        %v1548 = vpop.f32.mrf.mxu0
        %v1549 = vadd.f32 %v1436, %v1548
        %1550 = vmatmul.f32.gmra.mxu0 %v1283
        %v1551 = vpop.f32.mrf.mxu0
        %v1552 = vadd.f32 %v1439, %v1551
        %1553 = vmatmul.f32.gmra.mxu0 %v1285
        %v1554 = vpop.f32.mrf.mxu0
        %v1555 = vadd.f32 %v1442, %v1554
        %1556 = vmatmul.f32.gmra.mxu0 %v1287
        %v1557 = vpop.f32.mrf.mxu0
        %v1558 = vadd.f32 %v1445, %v1557
        %1559 = vmatmul.f32.gmra.mxu0 %v1289
        %v1560 = vpop.f32.mrf.mxu0
        %v1561 = vadd.f32 %v1448, %v1560
        %1562 = vmatmul.f32.gmra.mxu0 %v1291
        %v1563 = vpop.f32.mrf.mxu0
        %v1564 = vadd.f32 %v1451, %v1563
        %1565 = vmatmul.f32.gmra.mxu0 %v1293
        %v1566 = vpop.f32.mrf.mxu0
        %v1567 = vadd.f32 %v1454, %v1566
        %1568 = vmatmul.f32.gmra.mxu0 %v1295
        %v1569 = vpop.f32.mrf.mxu0
        %v1570 = vadd.f32 %v1457, %v1569
        %1571 = vmatmul.f32.gmra.mxu0 %v1297
        %v1572 = vpop.f32.mrf.mxu0
        %v1573 = vadd.f32 %v1460, %v1572
        %1574 = vmatmul.f32.gmra.mxu0 %v1299
        %v1575 = vpop.f32.mrf.mxu0
        %v1576 = vadd.f32 %v1463, %v1575
        %1577 = vmatmul.f32.gmra.mxu0 %v1301
        %v1578 = vpop.f32.mrf.mxu0
        %v1579 = vadd.f32 %v1466, %v1578
        %1580 = vmatmul.f32.gmra.mxu0 %v1303
        %v1581 = vpop.f32.mrf.mxu0
        %v1582 = vadd.f32 %v1469, %v1581
        %1583 = vmatmul.f32.gmra.mxu0 %v1305
        %v1584 = vpop.f32.mrf.mxu0
        %v1585 = vadd.f32 %v1472, %v1584
        %1586 = vmatmul.f32.gmra.mxu0 %v1307
        %v1587 = vpop.f32.mrf.mxu0
        %v1588 = vadd.f32 %v1475, %v1587
        %1589 = vmatmul.f32.gmra.mxu0 %v1309
        %v1590 = vpop.f32.mrf.mxu0
        %v1591 = vadd.f32 %v1478, %v1590
        %1592 = vmatmul.f32.gmra.mxu0 %v1311
        %v1593 = vpop.f32.mrf.mxu0
        %v1594 = vadd.f32 %v1481, %v1593
        %1595 = vmatmul.f32.gmra.mxu0 %v1313
        %v1596 = vpop.f32.mrf.mxu0
        %v1597 = vadd.f32 %v1484, %v1596
        %1598 = vmatmul.f32.gmra.mxu0 %v1315
        %v1599 = vpop.f32.mrf.mxu0
        %v1600 = vadd.f32 %v1487, %v1599
        %1601 = vmatmul.f32.gmra.mxu0 %v1317
        %v1602 = vpop.f32.mrf.mxu0
        %v1603 = vadd.f32 %v1490, %v1602
        %1604 = vmatmul.f32.gmra.mxu0 %v1319
        %v1605 = vpop.f32.mrf.mxu0
        %v1606 = vadd.f32 %v1493, %v1605
        %1607 = vmatmul.f32.gmra.mxu0 %v1321
        %v1608 = vpop.f32.mrf.mxu0
        %v1609 = vadd.f32 %v1496, %v1608
        %1610 = vmatmul.f32.gmra.mxu0 %v1323
        %v1611 = vpop.f32.mrf.mxu0
        %v1612 = vadd.f32 %v1499, %v1611
        %1613 = vmatmul.f32.gmra.mxu0 %v1325
        %v1614 = vpop.f32.mrf.mxu0
        %v1615 = vadd.f32 %v1502, %v1614
        %1616 = vmatmul.f32.gmra.mxu0 %v1327
        %v1617 = vpop.f32.mrf.mxu0
        %v1618 = vadd.f32 %v1505, %v1617
        %1619 = vmatmul.f32.gmra.mxu0 %v1329
        %v1620 = vpop.f32.mrf.mxu0
        %v1621 = vadd.f32 %v1508, %v1620
        %1622 = vmatmul.f32.gmra.mxu0 %v1331
        %v1623 = vpop.f32.mrf.mxu0
        %v1624 = vadd.f32 %v1511, %v1623
        %1625 = vmatmul.f32.gmra.mxu0 %v1333
        %v1626 = vpop.f32.mrf.mxu0
        %v1627 = vadd.f32 %v1514, %v1626
        %1628 = vmatmul.f32.gmra.mxu0 %v1335
        %v1629 = vpop.f32.mrf.mxu0
        %v1630 = vadd.f32 %v1517, %v1629
        %1631 = vmatmul.f32.gmra.mxu0 %v1337
        %v1632 = vpop.f32.mrf.mxu0
        %v1633 = vadd.f32 %v1520, %v1632
        %1634 = vmatmul.f32.gmra.mxu0 %v1339
        %v1635 = vpop.f32.mrf.mxu0
        %v1636 = vadd.f32 %v1523, %v1635
        %1637 = vdwg.mxu0
        %1638 = vmatpush.msra.mxu0 %v1372
        %1639 = vmatpush.msra.mxu0 %v1370
        %1640 = vmatpush.msra.mxu0 %v1368
        %1641 = vmatpush.msra.mxu0 %v1366
        %1642 = vmatpush.msra.mxu0 %v1364
        %1643 = vmatpush.msra.mxu0 %v1362
        %1644 = vmatpush.msra.mxu0 %v1360
        %1645 = vmatpush.msra.mxu0 %v1358
        %1646 = vmatpush.msra.mxu0 %v1356
        %1647 = vmatpush.msra.mxu0 %v1354
        %1648 = vmatpush.msra.mxu0 %v1352
        %1649 = vmatpush.msra.mxu0 %v1350
        %1650 = vmatpush.msra.mxu0 %v1348
        %1651 = vmatpush.msra.mxu0 %v1346
        %1652 = vmatpush.msra.mxu0 %v1344
        %1653 = vmatpush.msra.mxu0 %v1342
        %1654 = vmatmul.f32.gmra.mxu0 %v1276
        %v1655 = vpop.f32.mrf.mxu0
        %v1656 = vadd.f32 %v1409, %v1655
        %1657 = vmatmul.f32.gmra.mxu0 %v1278
        %v1658 = vpop.f32.mrf.mxu0
        %v1659 = vadd.f32 %v1409, %v1658
        %1660 = vmatmul.f32.gmra.mxu0 %v1280
        %v1661 = vpop.f32.mrf.mxu0
        %v1662 = vadd.f32 %v1409, %v1661
        %1663 = vmatmul.f32.gmra.mxu0 %v1282
        %v1664 = vpop.f32.mrf.mxu0
        %v1665 = vadd.f32 %v1409, %v1664
        %1666 = vmatmul.f32.gmra.mxu0 %v1284
        %v1667 = vpop.f32.mrf.mxu0
        %v1668 = vadd.f32 %v1409, %v1667
        %1669 = vmatmul.f32.gmra.mxu0 %v1286
        %v1670 = vpop.f32.mrf.mxu0
        %v1671 = vadd.f32 %v1409, %v1670
        %1672 = vmatmul.f32.gmra.mxu0 %v1288
        %v1673 = vpop.f32.mrf.mxu0
        %v1674 = vadd.f32 %v1409, %v1673
        %1675 = vmatmul.f32.gmra.mxu0 %v1290
        %v1676 = vpop.f32.mrf.mxu0
        %v1677 = vadd.f32 %v1409, %v1676
        %1678 = vmatmul.f32.gmra.mxu0 %v1292
        %v1679 = vpop.f32.mrf.mxu0
        %v1680 = vadd.f32 %v1409, %v1679
        %1681 = vmatmul.f32.gmra.mxu0 %v1294
        %v1682 = vpop.f32.mrf.mxu0
        %v1683 = vadd.f32 %v1409, %v1682
        %1684 = vmatmul.f32.gmra.mxu0 %v1296
        %v1685 = vpop.f32.mrf.mxu0
        %v1686 = vadd.f32 %v1409, %v1685
        %1687 = vmatmul.f32.gmra.mxu0 %v1298
        %v1688 = vpop.f32.mrf.mxu0
        %v1689 = vadd.f32 %v1409, %v1688
        %1690 = vmatmul.f32.gmra.mxu0 %v1300
        %v1691 = vpop.f32.mrf.mxu0
        %v1692 = vadd.f32 %v1409, %v1691
        %1693 = vmatmul.f32.gmra.mxu0 %v1302
        %v1694 = vpop.f32.mrf.mxu0
        %v1695 = vadd.f32 %v1409, %v1694
        %1696 = vmatmul.f32.gmra.mxu0 %v1304
        %v1697 = vpop.f32.mrf.mxu0
        %v1698 = vadd.f32 %v1409, %v1697
        %1699 = vmatmul.f32.gmra.mxu0 %v1306
        %v1700 = vpop.f32.mrf.mxu0
        %v1701 = vadd.f32 %v1409, %v1700
        %1702 = vmatmul.f32.gmra.mxu0 %v1308
        %v1703 = vpop.f32.mrf.mxu0
        %v1704 = vadd.f32 %v1409, %v1703
        %1705 = vmatmul.f32.gmra.mxu0 %v1310
        %v1706 = vpop.f32.mrf.mxu0
        %v1707 = vadd.f32 %v1409, %v1706
        %1708 = vmatmul.f32.gmra.mxu0 %v1312
        %v1709 = vpop.f32.mrf.mxu0
        %v1710 = vadd.f32 %v1409, %v1709
        %1711 = vmatmul.f32.gmra.mxu0 %v1314
        %v1712 = vpop.f32.mrf.mxu0
        %v1713 = vadd.f32 %v1409, %v1712
        %1714 = vmatmul.f32.gmra.mxu0 %v1316
        %v1715 = vpop.f32.mrf.mxu0
        %v1716 = vadd.f32 %v1409, %v1715
        %1717 = vmatmul.f32.gmra.mxu0 %v1318
        %v1718 = vpop.f32.mrf.mxu0
        %v1719 = vadd.f32 %v1409, %v1718
        %1720 = vmatmul.f32.gmra.mxu0 %v1320
        %v1721 = vpop.f32.mrf.mxu0
        %v1722 = vadd.f32 %v1409, %v1721
        %1723 = vmatmul.f32.gmra.mxu0 %v1322
        %v1724 = vpop.f32.mrf.mxu0
        %v1725 = vadd.f32 %v1409, %v1724
        %1726 = vmatmul.f32.gmra.mxu0 %v1324
        %v1727 = vpop.f32.mrf.mxu0
        %v1728 = vadd.f32 %v1409, %v1727
        %1729 = vmatmul.f32.gmra.mxu0 %v1326
        %v1730 = vpop.f32.mrf.mxu0
        %v1731 = vadd.f32 %v1409, %v1730
        %1732 = vmatmul.f32.gmra.mxu0 %v1328
        %v1733 = vpop.f32.mrf.mxu0
        %v1734 = vadd.f32 %v1409, %v1733
        %1735 = vmatmul.f32.gmra.mxu0 %v1330
        %v1736 = vpop.f32.mrf.mxu0
        %v1737 = vadd.f32 %v1409, %v1736
        %1738 = vmatmul.f32.gmra.mxu0 %v1332
        %v1739 = vpop.f32.mrf.mxu0
        %v1740 = vadd.f32 %v1409, %v1739
        %1741 = vmatmul.f32.gmra.mxu0 %v1334
        %v1742 = vpop.f32.mrf.mxu0
        %v1743 = vadd.f32 %v1409, %v1742
        %1744 = vmatmul.f32.gmra.mxu0 %v1336
        %v1745 = vpop.f32.mrf.mxu0
        %v1746 = vadd.f32 %v1409, %v1745
        %1747 = vmatmul.f32.gmra.mxu0 %v1338
        %v1748 = vpop.f32.mrf.mxu0
        %v1749 = vadd.f32 %v1409, %v1748
        %1750 = vdwg.mxu0
        %1751 = vmatpush.msra.mxu0 %v1404
        %1752 = vmatpush.msra.mxu0 %v1402
        %1753 = vmatpush.msra.mxu0 %v1400
        %1754 = vmatpush.msra.mxu0 %v1398
        %1755 = vmatpush.msra.mxu0 %v1396
        %1756 = vmatpush.msra.mxu0 %v1394
        %1757 = vmatpush.msra.mxu0 %v1392
        %1758 = vmatpush.msra.mxu0 %v1390
        %1759 = vmatpush.msra.mxu0 %v1388
        %1760 = vmatpush.msra.mxu0 %v1386
        %1761 = vmatpush.msra.mxu0 %v1384
        %1762 = vmatpush.msra.mxu0 %v1382
        %1763 = vmatpush.msra.mxu0 %v1380
        %1764 = vmatpush.msra.mxu0 %v1378
        %1765 = vmatpush.msra.mxu0 %v1376
        %1766 = vmatpush.msra.mxu0 %v1374
        %1767 = vmatmul.f32.gmra.mxu0 %v1277
        %v1768 = vpop.f32.mrf.mxu0
        %v1769 = vadd.f32 %v1656, %v1768
        %1770 = vmatmul.f32.gmra.mxu0 %v1279
        %v1771 = vpop.f32.mrf.mxu0
        %v1772 = vadd.f32 %v1659, %v1771
        %1773 = vmatmul.f32.gmra.mxu0 %v1281
        %v1774 = vpop.f32.mrf.mxu0
        %v1775 = vadd.f32 %v1662, %v1774
        %1776 = vmatmul.f32.gmra.mxu0 %v1283
        %v1777 = vpop.f32.mrf.mxu0
        %v1778 = vadd.f32 %v1665, %v1777
        %1779 = vmatmul.f32.gmra.mxu0 %v1285
        %v1780 = vpop.f32.mrf.mxu0
        %v1781 = vadd.f32 %v1668, %v1780
        %1782 = vmatmul.f32.gmra.mxu0 %v1287
        %v1783 = vpop.f32.mrf.mxu0
        %v1784 = vadd.f32 %v1671, %v1783
        %1785 = vmatmul.f32.gmra.mxu0 %v1289
        %v1786 = vpop.f32.mrf.mxu0
        %v1787 = vadd.f32 %v1674, %v1786
        %1788 = vmatmul.f32.gmra.mxu0 %v1291
        %v1789 = vpop.f32.mrf.mxu0
        %v1790 = vadd.f32 %v1677, %v1789
        %1791 = vmatmul.f32.gmra.mxu0 %v1293
        %v1792 = vpop.f32.mrf.mxu0
        %v1793 = vadd.f32 %v1680, %v1792
        %1794 = vmatmul.f32.gmra.mxu0 %v1295
        %v1795 = vpop.f32.mrf.mxu0
        %v1796 = vadd.f32 %v1683, %v1795
        %1797 = vmatmul.f32.gmra.mxu0 %v1297
        %v1798 = vpop.f32.mrf.mxu0
        %v1799 = vadd.f32 %v1686, %v1798
        %1800 = vmatmul.f32.gmra.mxu0 %v1299
        %v1801 = vpop.f32.mrf.mxu0
        %v1802 = vadd.f32 %v1689, %v1801
        %1803 = vmatmul.f32.gmra.mxu0 %v1301
        %v1804 = vpop.f32.mrf.mxu0
        %v1805 = vadd.f32 %v1692, %v1804
        %1806 = vmatmul.f32.gmra.mxu0 %v1303
        %v1807 = vpop.f32.mrf.mxu0
        %v1808 = vadd.f32 %v1695, %v1807
        %1809 = vmatmul.f32.gmra.mxu0 %v1305
        %v1810 = vpop.f32.mrf.mxu0
        %v1811 = vadd.f32 %v1698, %v1810
        %1812 = vmatmul.f32.gmra.mxu0 %v1307
        %v1813 = vpop.f32.mrf.mxu0
        %v1814 = vadd.f32 %v1701, %v1813
        %1815 = vmatmul.f32.gmra.mxu0 %v1309
        %v1816 = vpop.f32.mrf.mxu0
        %v1817 = vadd.f32 %v1704, %v1816
        %1818 = vmatmul.f32.gmra.mxu0 %v1311
        %v1819 = vpop.f32.mrf.mxu0
        %v1820 = vadd.f32 %v1707, %v1819
        %1821 = vmatmul.f32.gmra.mxu0 %v1313
        %v1822 = vpop.f32.mrf.mxu0
        %v1823 = vadd.f32 %v1710, %v1822
        %1824 = vmatmul.f32.gmra.mxu0 %v1315
        %v1825 = vpop.f32.mrf.mxu0
        %v1826 = vadd.f32 %v1713, %v1825
        %1827 = vmatmul.f32.gmra.mxu0 %v1317
        %v1828 = vpop.f32.mrf.mxu0
        %v1829 = vadd.f32 %v1716, %v1828
        %1830 = vmatmul.f32.gmra.mxu0 %v1319
        %v1831 = vpop.f32.mrf.mxu0
        %v1832 = vadd.f32 %v1719, %v1831
        %1833 = vmatmul.f32.gmra.mxu0 %v1321
        %v1834 = vpop.f32.mrf.mxu0
        %v1835 = vadd.f32 %v1722, %v1834
        %1836 = vmatmul.f32.gmra.mxu0 %v1323
        %v1837 = vpop.f32.mrf.mxu0
        %v1838 = vadd.f32 %v1725, %v1837
        %1839 = vmatmul.f32.gmra.mxu0 %v1325
        %v1840 = vpop.f32.mrf.mxu0
        %v1841 = vadd.f32 %v1728, %v1840
        %1842 = vmatmul.f32.gmra.mxu0 %v1327
        %v1843 = vpop.f32.mrf.mxu0
        %v1844 = vadd.f32 %v1731, %v1843
        %1845 = vmatmul.f32.gmra.mxu0 %v1329
        %v1846 = vpop.f32.mrf.mxu0
        %v1847 = vadd.f32 %v1734, %v1846
        %1848 = vmatmul.f32.gmra.mxu0 %v1331
        %v1849 = vpop.f32.mrf.mxu0
        %v1850 = vadd.f32 %v1737, %v1849
        %1851 = vmatmul.f32.gmra.mxu0 %v1333
        %v1852 = vpop.f32.mrf.mxu0
        %v1853 = vadd.f32 %v1740, %v1852
        %1854 = vmatmul.f32.gmra.mxu0 %v1335
        %v1855 = vpop.f32.mrf.mxu0
        %v1856 = vadd.f32 %v1743, %v1855
        %1857 = vmatmul.f32.gmra.mxu0 %v1337
        %v1858 = vpop.f32.mrf.mxu0
        %v1859 = vadd.f32 %v1746, %v1858
        %1860 = vmatmul.f32.gmra.mxu0 %v1339
        %v1861 = vpop.f32.mrf.mxu0
        %v1862 = vadd.f32 %v1749, %v1861
        %1863 = vdwg.mxu0
        %v1864 = vmax.f32 %v1543, 0.0
        %v1865 = vmax.f32 %v1769, 0.0
        %v1866 = vmax.f32 %v1546, 0.0
        %v1867 = vmax.f32 %v1772, 0.0
        %v1868 = vmax.f32 %v1549, 0.0
        %v1869 = vmax.f32 %v1775, 0.0
        %v1870 = vmax.f32 %v1552, 0.0
        %v1871 = vmax.f32 %v1778, 0.0
        %v1872 = vmax.f32 %v1555, 0.0
        %v1873 = vmax.f32 %v1781, 0.0
        %v1874 = vmax.f32 %v1558, 0.0
        %v1875 = vmax.f32 %v1784, 0.0
        %v1876 = vmax.f32 %v1561, 0.0
        %v1877 = vmax.f32 %v1787, 0.0
        %v1878 = vmax.f32 %v1564, 0.0
        %v1879 = vmax.f32 %v1790, 0.0
        %v1880 = vmax.f32 %v1567, 0.0
        %v1881 = vmax.f32 %v1793, 0.0
        %v1882 = vmax.f32 %v1570, 0.0
        %v1883 = vmax.f32 %v1796, 0.0
        %v1884 = vmax.f32 %v1573, 0.0
        %v1885 = vmax.f32 %v1799, 0.0
        %v1886 = vmax.f32 %v1576, 0.0
        %v1887 = vmax.f32 %v1802, 0.0
        %v1888 = vmax.f32 %v1579, 0.0
        %v1889 = vmax.f32 %v1805, 0.0
        %v1890 = vmax.f32 %v1582, 0.0
        %v1891 = vmax.f32 %v1808, 0.0
        %v1892 = vmax.f32 %v1585, 0.0
        %v1893 = vmax.f32 %v1811, 0.0
        %v1894 = vmax.f32 %v1588, 0.0
        %v1895 = vmax.f32 %v1814, 0.0
        %v1896 = vmax.f32 %v1591, 0.0
        %v1897 = vmax.f32 %v1817, 0.0
        %v1898 = vmax.f32 %v1594, 0.0
        %v1899 = vmax.f32 %v1820, 0.0
        %v1900 = vmax.f32 %v1597, 0.0
        %v1901 = vmax.f32 %v1823, 0.0
        %v1902 = vmax.f32 %v1600, 0.0
        %v1903 = vmax.f32 %v1826, 0.0
        %v1904 = vmax.f32 %v1603, 0.0
        %v1905 = vmax.f32 %v1829, 0.0
        %v1906 = vmax.f32 %v1606, 0.0
        %v1907 = vmax.f32 %v1832, 0.0
        %v1908 = vmax.f32 %v1609, 0.0
        %v1909 = vmax.f32 %v1835, 0.0
        %v1910 = vmax.f32 %v1612, 0.0
        %v1911 = vmax.f32 %v1838, 0.0
        %v1912 = vmax.f32 %v1615, 0.0
        %v1913 = vmax.f32 %v1841, 0.0
        %v1914 = vmax.f32 %v1618, 0.0
        %v1915 = vmax.f32 %v1844, 0.0
        %v1916 = vmax.f32 %v1621, 0.0
        %v1917 = vmax.f32 %v1847, 0.0
        %v1918 = vmax.f32 %v1624, 0.0
        %v1919 = vmax.f32 %v1850, 0.0
        %v1920 = vmax.f32 %v1627, 0.0
        %v1921 = vmax.f32 %v1853, 0.0
        %v1922 = vmax.f32 %v1630, 0.0
        %v1923 = vmax.f32 %v1856, 0.0
        %v1924 = vmax.f32 %v1633, 0.0
        %v1925 = vmax.f32 %v1859, 0.0
        %v1926 = vmax.f32 %v1636, 0.0
        %v1927 = vmax.f32 %v1862, 0.0
        %s1928 = scalar_lea.vmem [#allocation5], 1024
        %v1929 = vld [vmem:[%s1928] sm:$0xff]
        %v1930 = vld [vmem:[%s1928 + $0x8] sm:$0xff]
        %v1931 = vld [vmem:[%s1928 + $0x10] sm:$0xff]
        %v1932 = vld [vmem:[%s1928 + $0x18] sm:$0xff]
        %v1933 = vld [vmem:[%s1928 + $0x20] sm:$0xff]
        %v1934 = vld [vmem:[%s1928 + $0x28] sm:$0xff]
        %v1935 = vld [vmem:[%s1928 + $0x30] sm:$0xff]
        %v1936 = vld [vmem:[%s1928 + $0x38] sm:$0xff]
        %v1937 = vld [vmem:[%s1928 + $0x40] sm:$0xff]
        %v1938 = vld [vmem:[%s1928 + $0x48] sm:$0xff]
        %v1939 = vld [vmem:[%s1928 + $0x50] sm:$0xff]
        %v1940 = vld [vmem:[%s1928 + $0x58] sm:$0xff]
        %v1941 = vld [vmem:[%s1928 + $0x60] sm:$0xff]
        %v1942 = vld [vmem:[%s1928 + $0x68] sm:$0xff]
        %v1943 = vld [vmem:[%s1928 + $0x70] sm:$0xff]
        %v1944 = vld [vmem:[%s1928 + $0x78] sm:$0xff]
        %v1945 = vld [vmem:[%s1928 + $0x80] sm:$0xff]
        %v1946 = vld [vmem:[%s1928 + $0x88] sm:$0xff]
        %v1947 = vld [vmem:[%s1928 + $0x90] sm:$0xff]
        %v1948 = vld [vmem:[%s1928 + $0x98] sm:$0xff]
        %v1949 = vld [vmem:[%s1928 + $0xa0] sm:$0xff]
        %v1950 = vld [vmem:[%s1928 + $0xa8] sm:$0xff]
        %v1951 = vld [vmem:[%s1928 + $0xb0] sm:$0xff]
        %v1952 = vld [vmem:[%s1928 + $0xb8] sm:$0xff]
        %v1953 = vld [vmem:[%s1928 + $0xc0] sm:$0xff]
        %v1954 = vld [vmem:[%s1928 + $0xc8] sm:$0xff]
        %v1955 = vld [vmem:[%s1928 + $0xd0] sm:$0xff]
        %v1956 = vld [vmem:[%s1928 + $0xd8] sm:$0xff]
        %v1957 = vld [vmem:[%s1928 + $0xe0] sm:$0xff]
        %v1958 = vld [vmem:[%s1928 + $0xe8] sm:$0xff]
        %v1959 = vld [vmem:[%s1928 + $0xf0] sm:$0xff]
        %v1960 = vld [vmem:[%s1928 + $0xf8] sm:$0xff]
        %v1961 = vld [vmem:[%s1928 + $0x100] sm:$0xff]
        %v1962 = vld [vmem:[%s1928 + $0x108] sm:$0xff]
        %v1963 = vld [vmem:[%s1928 + $0x110] sm:$0xff]
        %v1964 = vld [vmem:[%s1928 + $0x118] sm:$0xff]
        %v1965 = vld [vmem:[%s1928 + $0x120] sm:$0xff]
        %v1966 = vld [vmem:[%s1928 + $0x128] sm:$0xff]
        %v1967 = vld [vmem:[%s1928 + $0x130] sm:$0xff]
        %v1968 = vld [vmem:[%s1928 + $0x138] sm:$0xff]
        %v1969 = vld [vmem:[%s1928 + $0x140] sm:$0xff]
        %v1970 = vld [vmem:[%s1928 + $0x148] sm:$0xff]
        %v1971 = vld [vmem:[%s1928 + $0x150] sm:$0xff]
        %v1972 = vld [vmem:[%s1928 + $0x158] sm:$0xff]
        %v1973 = vld [vmem:[%s1928 + $0x160] sm:$0xff]
        %v1974 = vld [vmem:[%s1928 + $0x168] sm:$0xff]
        %v1975 = vld [vmem:[%s1928 + $0x170] sm:$0xff]
        %v1976 = vld [vmem:[%s1928 + $0x178] sm:$0xff]
        %v1977 = vld [vmem:[%s1928 + $0x180] sm:$0xff]
        %v1978 = vld [vmem:[%s1928 + $0x188] sm:$0xff]
        %v1979 = vld [vmem:[%s1928 + $0x190] sm:$0xff]
        %v1980 = vld [vmem:[%s1928 + $0x198] sm:$0xff]
        %v1981 = vld [vmem:[%s1928 + $0x1a0] sm:$0xff]
        %v1982 = vld [vmem:[%s1928 + $0x1a8] sm:$0xff]
        %v1983 = vld [vmem:[%s1928 + $0x1b0] sm:$0xff]
        %v1984 = vld [vmem:[%s1928 + $0x1b8] sm:$0xff]
        %v1985 = vld [vmem:[%s1928 + $0x1c0] sm:$0xff]
        %v1986 = vld [vmem:[%s1928 + $0x1c8] sm:$0xff]
        %v1987 = vld [vmem:[%s1928 + $0x1d0] sm:$0xff]
        %v1988 = vld [vmem:[%s1928 + $0x1d8] sm:$0xff]
        %v1989 = vld [vmem:[%s1928 + $0x1e0] sm:$0xff]
        %v1990 = vld [vmem:[%s1928 + $0x1e8] sm:$0xff]
        %v1991 = vld [vmem:[%s1928 + $0x1f0] sm:$0xff]
        %v1992 = vld [vmem:[%s1928 + $0x1f8] sm:$0xff]
        %s1993 = scalar_lea.vmem %s4, 4
        %v1994 = vld [vmem:[%s1993] sm:$0x3]
        %v1996 = vperm.slane %v1994, 0
        %v1997 = vperm.slane %v1994, 1
        %2000 = vmatpush.msra.mxu0 %v1959
        %2001 = vmatpush.msra.mxu0 %v1957
        %2002 = vmatpush.msra.mxu0 %v1955
        %2003 = vmatpush.msra.mxu0 %v1953
        %2004 = vmatpush.msra.mxu0 %v1951
        %2005 = vmatpush.msra.mxu0 %v1949
        %2006 = vmatpush.msra.mxu0 %v1947
        %2007 = vmatpush.msra.mxu0 %v1945
        %2008 = vmatpush.msra.mxu0 %v1943
        %2009 = vmatpush.msra.mxu0 %v1941
        %2010 = vmatpush.msra.mxu0 %v1939
        %2011 = vmatpush.msra.mxu0 %v1937
        %2012 = vmatpush.msra.mxu0 %v1935
        %2013 = vmatpush.msra.mxu0 %v1933
        %2014 = vmatpush.msra.mxu0 %v1931
        %2015 = vmatpush.msra.mxu0 %v1929
        %2016 = vmatmul.f32.gmra.mxu0 %v1864
        %v2017 = vpop.f32.mrf.mxu0
        %v2018 = vadd.f32 %v1996, %v2017
        %2019 = vmatmul.f32.gmra.mxu0 %v1866
        %v2020 = vpop.f32.mrf.mxu0
        %v2021 = vadd.f32 %v1996, %v2020
        %2022 = vmatmul.f32.gmra.mxu0 %v1868
        %v2023 = vpop.f32.mrf.mxu0
        %v2024 = vadd.f32 %v1996, %v2023
        %2025 = vmatmul.f32.gmra.mxu0 %v1870
        %v2026 = vpop.f32.mrf.mxu0
        %v2027 = vadd.f32 %v1996, %v2026
        %2028 = vmatmul.f32.gmra.mxu0 %v1872
        %v2029 = vpop.f32.mrf.mxu0
        %v2030 = vadd.f32 %v1996, %v2029
        %2031 = vmatmul.f32.gmra.mxu0 %v1874
        %v2032 = vpop.f32.mrf.mxu0
        %v2033 = vadd.f32 %v1996, %v2032
        %2034 = vmatmul.f32.gmra.mxu0 %v1876
        %v2035 = vpop.f32.mrf.mxu0
        %v2036 = vadd.f32 %v1996, %v2035
        %2037 = vmatmul.f32.gmra.mxu0 %v1878
        %v2038 = vpop.f32.mrf.mxu0
        %v2039 = vadd.f32 %v1996, %v2038
        %2040 = vmatmul.f32.gmra.mxu0 %v1880
        %v2041 = vpop.f32.mrf.mxu0
        %v2042 = vadd.f32 %v1996, %v2041
        %2043 = vmatmul.f32.gmra.mxu0 %v1882
        %v2044 = vpop.f32.mrf.mxu0
        %v2045 = vadd.f32 %v1996, %v2044
        %2046 = vmatmul.f32.gmra.mxu0 %v1884
        %v2047 = vpop.f32.mrf.mxu0
        %v2048 = vadd.f32 %v1996, %v2047
        %2049 = vmatmul.f32.gmra.mxu0 %v1886
        %v2050 = vpop.f32.mrf.mxu0
        %v2051 = vadd.f32 %v1996, %v2050
        %2052 = vmatmul.f32.gmra.mxu0 %v1888
        %v2053 = vpop.f32.mrf.mxu0
        %v2054 = vadd.f32 %v1996, %v2053
        %2055 = vmatmul.f32.gmra.mxu0 %v1890
        %v2056 = vpop.f32.mrf.mxu0
        %v2057 = vadd.f32 %v1996, %v2056
        %2058 = vmatmul.f32.gmra.mxu0 %v1892
        %v2059 = vpop.f32.mrf.mxu0
        %v2060 = vadd.f32 %v1996, %v2059
        %2061 = vmatmul.f32.gmra.mxu0 %v1894
        %v2062 = vpop.f32.mrf.mxu0
        %v2063 = vadd.f32 %v1996, %v2062
        %2064 = vmatmul.f32.gmra.mxu0 %v1896
        %v2065 = vpop.f32.mrf.mxu0
        %v2066 = vadd.f32 %v1996, %v2065
        %2067 = vmatmul.f32.gmra.mxu0 %v1898
        %v2068 = vpop.f32.mrf.mxu0
        %v2069 = vadd.f32 %v1996, %v2068
        %2070 = vmatmul.f32.gmra.mxu0 %v1900
        %v2071 = vpop.f32.mrf.mxu0
        %v2072 = vadd.f32 %v1996, %v2071
        %2073 = vmatmul.f32.gmra.mxu0 %v1902
        %v2074 = vpop.f32.mrf.mxu0
        %v2075 = vadd.f32 %v1996, %v2074
        %2076 = vmatmul.f32.gmra.mxu0 %v1904
        %v2077 = vpop.f32.mrf.mxu0
        %v2078 = vadd.f32 %v1996, %v2077
        %2079 = vmatmul.f32.gmra.mxu0 %v1906
        %v2080 = vpop.f32.mrf.mxu0
        %v2081 = vadd.f32 %v1996, %v2080
        %2082 = vmatmul.f32.gmra.mxu0 %v1908
        %v2083 = vpop.f32.mrf.mxu0
        %v2084 = vadd.f32 %v1996, %v2083
        %2085 = vmatmul.f32.gmra.mxu0 %v1910
        %v2086 = vpop.f32.mrf.mxu0
        %v2087 = vadd.f32 %v1996, %v2086
        %2088 = vmatmul.f32.gmra.mxu0 %v1912
        %v2089 = vpop.f32.mrf.mxu0
        %v2090 = vadd.f32 %v1996, %v2089
        %2091 = vmatmul.f32.gmra.mxu0 %v1914
        %v2092 = vpop.f32.mrf.mxu0
        %v2093 = vadd.f32 %v1996, %v2092
        %2094 = vmatmul.f32.gmra.mxu0 %v1916
        %v2095 = vpop.f32.mrf.mxu0
        %v2096 = vadd.f32 %v1996, %v2095
        %2097 = vmatmul.f32.gmra.mxu0 %v1918
        %v2098 = vpop.f32.mrf.mxu0
        %v2099 = vadd.f32 %v1996, %v2098
        %2100 = vmatmul.f32.gmra.mxu0 %v1920
        %v2101 = vpop.f32.mrf.mxu0
        %v2102 = vadd.f32 %v1996, %v2101
        %2103 = vmatmul.f32.gmra.mxu0 %v1922
        %v2104 = vpop.f32.mrf.mxu0
        %v2105 = vadd.f32 %v1996, %v2104
        %2106 = vmatmul.f32.gmra.mxu0 %v1924
        %v2107 = vpop.f32.mrf.mxu0
        %v2108 = vadd.f32 %v1996, %v2107
        %2109 = vmatmul.f32.gmra.mxu0 %v1926
        %v2110 = vpop.f32.mrf.mxu0
        %v2111 = vadd.f32 %v1996, %v2110
        %2112 = vdwg.mxu0
        %2113 = vmatpush.msra.mxu0 %v1991
        %2114 = vmatpush.msra.mxu0 %v1989
        %2115 = vmatpush.msra.mxu0 %v1987
        %2116 = vmatpush.msra.mxu0 %v1985
        %2117 = vmatpush.msra.mxu0 %v1983
        %2118 = vmatpush.msra.mxu0 %v1981
        %2119 = vmatpush.msra.mxu0 %v1979
        %2120 = vmatpush.msra.mxu0 %v1977
        %2121 = vmatpush.msra.mxu0 %v1975
        %2122 = vmatpush.msra.mxu0 %v1973
        %2123 = vmatpush.msra.mxu0 %v1971
        %2124 = vmatpush.msra.mxu0 %v1969
        %2125 = vmatpush.msra.mxu0 %v1967
        %2126 = vmatpush.msra.mxu0 %v1965
        %2127 = vmatpush.msra.mxu0 %v1963
        %2128 = vmatpush.msra.mxu0 %v1961
        %2129 = vmatmul.f32.gmra.mxu0 %v1865
        %v2130 = vpop.f32.mrf.mxu0
        %v2131 = vadd.f32 %v2018, %v2130
        %2132 = vmatmul.f32.gmra.mxu0 %v1867
        %v2133 = vpop.f32.mrf.mxu0
        %v2134 = vadd.f32 %v2021, %v2133
        %2135 = vmatmul.f32.gmra.mxu0 %v1869
        %v2136 = vpop.f32.mrf.mxu0
        %v2137 = vadd.f32 %v2024, %v2136
        %2138 = vmatmul.f32.gmra.mxu0 %v1871
        %v2139 = vpop.f32.mrf.mxu0
        %v2140 = vadd.f32 %v2027, %v2139
        %2141 = vmatmul.f32.gmra.mxu0 %v1873
        %v2142 = vpop.f32.mrf.mxu0
        %v2143 = vadd.f32 %v2030, %v2142
        %2144 = vmatmul.f32.gmra.mxu0 %v1875
        %v2145 = vpop.f32.mrf.mxu0
        %v2146 = vadd.f32 %v2033, %v2145
        %2147 = vmatmul.f32.gmra.mxu0 %v1877
        %v2148 = vpop.f32.mrf.mxu0
        %v2149 = vadd.f32 %v2036, %v2148
        %2150 = vmatmul.f32.gmra.mxu0 %v1879
        %v2151 = vpop.f32.mrf.mxu0
        %v2152 = vadd.f32 %v2039, %v2151
        %2153 = vmatmul.f32.gmra.mxu0 %v1881
        %v2154 = vpop.f32.mrf.mxu0
        %v2155 = vadd.f32 %v2042, %v2154
        %2156 = vmatmul.f32.gmra.mxu0 %v1883
        %v2157 = vpop.f32.mrf.mxu0
        %v2158 = vadd.f32 %v2045, %v2157
        %2159 = vmatmul.f32.gmra.mxu0 %v1885
        %v2160 = vpop.f32.mrf.mxu0
        %v2161 = vadd.f32 %v2048, %v2160
        %2162 = vmatmul.f32.gmra.mxu0 %v1887
        %v2163 = vpop.f32.mrf.mxu0
        %v2164 = vadd.f32 %v2051, %v2163
        %2165 = vmatmul.f32.gmra.mxu0 %v1889
        %v2166 = vpop.f32.mrf.mxu0
        %v2167 = vadd.f32 %v2054, %v2166
        %2168 = vmatmul.f32.gmra.mxu0 %v1891
        %v2169 = vpop.f32.mrf.mxu0
        %v2170 = vadd.f32 %v2057, %v2169
        %2171 = vmatmul.f32.gmra.mxu0 %v1893
        %v2172 = vpop.f32.mrf.mxu0
        %v2173 = vadd.f32 %v2060, %v2172
        %2174 = vmatmul.f32.gmra.mxu0 %v1895
        %v2175 = vpop.f32.mrf.mxu0
        %v2176 = vadd.f32 %v2063, %v2175
        %2177 = vmatmul.f32.gmra.mxu0 %v1897
        %v2178 = vpop.f32.mrf.mxu0
        %v2179 = vadd.f32 %v2066, %v2178
        %2180 = vmatmul.f32.gmra.mxu0 %v1899
        %v2181 = vpop.f32.mrf.mxu0
        %v2182 = vadd.f32 %v2069, %v2181
        %2183 = vmatmul.f32.gmra.mxu0 %v1901
        %v2184 = vpop.f32.mrf.mxu0
        %v2185 = vadd.f32 %v2072, %v2184
        %2186 = vmatmul.f32.gmra.mxu0 %v1903
        %v2187 = vpop.f32.mrf.mxu0
        %v2188 = vadd.f32 %v2075, %v2187
        %2189 = vmatmul.f32.gmra.mxu0 %v1905
        %v2190 = vpop.f32.mrf.mxu0
        %v2191 = vadd.f32 %v2078, %v2190
        %2192 = vmatmul.f32.gmra.mxu0 %v1907
        %v2193 = vpop.f32.mrf.mxu0
        %v2194 = vadd.f32 %v2081, %v2193
        %2195 = vmatmul.f32.gmra.mxu0 %v1909
        %v2196 = vpop.f32.mrf.mxu0
        %v2197 = vadd.f32 %v2084, %v2196
        %2198 = vmatmul.f32.gmra.mxu0 %v1911
        %v2199 = vpop.f32.mrf.mxu0
        %v2200 = vadd.f32 %v2087, %v2199
        %2201 = vmatmul.f32.gmra.mxu0 %v1913
        %v2202 = vpop.f32.mrf.mxu0
        %v2203 = vadd.f32 %v2090, %v2202
        %2204 = vmatmul.f32.gmra.mxu0 %v1915
        %v2205 = vpop.f32.mrf.mxu0
        %v2206 = vadd.f32 %v2093, %v2205
        %2207 = vmatmul.f32.gmra.mxu0 %v1917
        %v2208 = vpop.f32.mrf.mxu0
        %v2209 = vadd.f32 %v2096, %v2208
        %2210 = vmatmul.f32.gmra.mxu0 %v1919
        %v2211 = vpop.f32.mrf.mxu0
        %v2212 = vadd.f32 %v2099, %v2211
        %2213 = vmatmul.f32.gmra.mxu0 %v1921
        %v2214 = vpop.f32.mrf.mxu0
        %v2215 = vadd.f32 %v2102, %v2214
        %2216 = vmatmul.f32.gmra.mxu0 %v1923
        %v2217 = vpop.f32.mrf.mxu0
        %v2218 = vadd.f32 %v2105, %v2217
        %2219 = vmatmul.f32.gmra.mxu0 %v1925
        %v2220 = vpop.f32.mrf.mxu0
        %v2221 = vadd.f32 %v2108, %v2220
        %2222 = vmatmul.f32.gmra.mxu0 %v1927
        %v2223 = vpop.f32.mrf.mxu0
        %v2224 = vadd.f32 %v2111, %v2223
        %2225 = vdwg.mxu0
        %2226 = vmatpush.msra.mxu0 %v1960
        %2227 = vmatpush.msra.mxu0 %v1958
        %2228 = vmatpush.msra.mxu0 %v1956
        %2229 = vmatpush.msra.mxu0 %v1954
        %2230 = vmatpush.msra.mxu0 %v1952
        %2231 = vmatpush.msra.mxu0 %v1950
        %2232 = vmatpush.msra.mxu0 %v1948
        %2233 = vmatpush.msra.mxu0 %v1946
        %2234 = vmatpush.msra.mxu0 %v1944
        %2235 = vmatpush.msra.mxu0 %v1942
        %2236 = vmatpush.msra.mxu0 %v1940
        %2237 = vmatpush.msra.mxu0 %v1938
        %2238 = vmatpush.msra.mxu0 %v1936
        %2239 = vmatpush.msra.mxu0 %v1934
        %2240 = vmatpush.msra.mxu0 %v1932
        %2241 = vmatpush.msra.mxu0 %v1930
        %2242 = vmatmul.f32.gmra.mxu0 %v1864
        %v2243 = vpop.f32.mrf.mxu0
        %v2244 = vadd.f32 %v1997, %v2243
        %2245 = vmatmul.f32.gmra.mxu0 %v1866
        %v2246 = vpop.f32.mrf.mxu0
        %v2247 = vadd.f32 %v1997, %v2246
        %2248 = vmatmul.f32.gmra.mxu0 %v1868
        %v2249 = vpop.f32.mrf.mxu0
        %v2250 = vadd.f32 %v1997, %v2249
        %2251 = vmatmul.f32.gmra.mxu0 %v1870
        %v2252 = vpop.f32.mrf.mxu0
        %v2253 = vadd.f32 %v1997, %v2252
        %2254 = vmatmul.f32.gmra.mxu0 %v1872
        %v2255 = vpop.f32.mrf.mxu0
        %v2256 = vadd.f32 %v1997, %v2255
        %2257 = vmatmul.f32.gmra.mxu0 %v1874
        %v2258 = vpop.f32.mrf.mxu0
        %v2259 = vadd.f32 %v1997, %v2258
        %2260 = vmatmul.f32.gmra.mxu0 %v1876
        %v2261 = vpop.f32.mrf.mxu0
        %v2262 = vadd.f32 %v1997, %v2261
        %2263 = vmatmul.f32.gmra.mxu0 %v1878
        %v2264 = vpop.f32.mrf.mxu0
        %v2265 = vadd.f32 %v1997, %v2264
        %2266 = vmatmul.f32.gmra.mxu0 %v1880
        %v2267 = vpop.f32.mrf.mxu0
        %v2268 = vadd.f32 %v1997, %v2267
        %2269 = vmatmul.f32.gmra.mxu0 %v1882
        %v2270 = vpop.f32.mrf.mxu0
        %v2271 = vadd.f32 %v1997, %v2270
        %2272 = vmatmul.f32.gmra.mxu0 %v1884
        %v2273 = vpop.f32.mrf.mxu0
        %v2274 = vadd.f32 %v1997, %v2273
        %2275 = vmatmul.f32.gmra.mxu0 %v1886
        %v2276 = vpop.f32.mrf.mxu0
        %v2277 = vadd.f32 %v1997, %v2276
        %2278 = vmatmul.f32.gmra.mxu0 %v1888
        %v2279 = vpop.f32.mrf.mxu0
        %v2280 = vadd.f32 %v1997, %v2279
        %2281 = vmatmul.f32.gmra.mxu0 %v1890
        %v2282 = vpop.f32.mrf.mxu0
        %v2283 = vadd.f32 %v1997, %v2282
        %2284 = vmatmul.f32.gmra.mxu0 %v1892
        %v2285 = vpop.f32.mrf.mxu0
        %v2286 = vadd.f32 %v1997, %v2285
        %2287 = vmatmul.f32.gmra.mxu0 %v1894
        %v2288 = vpop.f32.mrf.mxu0
        %v2289 = vadd.f32 %v1997, %v2288
        %2290 = vmatmul.f32.gmra.mxu0 %v1896
        %v2291 = vpop.f32.mrf.mxu0
        %v2292 = vadd.f32 %v1997, %v2291
        %2293 = vmatmul.f32.gmra.mxu0 %v1898
        %v2294 = vpop.f32.mrf.mxu0
        %v2295 = vadd.f32 %v1997, %v2294
        %2296 = vmatmul.f32.gmra.mxu0 %v1900
        %v2297 = vpop.f32.mrf.mxu0
        %v2298 = vadd.f32 %v1997, %v2297
        %2299 = vmatmul.f32.gmra.mxu0 %v1902
        %v2300 = vpop.f32.mrf.mxu0
        %v2301 = vadd.f32 %v1997, %v2300
        %2302 = vmatmul.f32.gmra.mxu0 %v1904
        %v2303 = vpop.f32.mrf.mxu0
        %v2304 = vadd.f32 %v1997, %v2303
        %2305 = vmatmul.f32.gmra.mxu0 %v1906
        %v2306 = vpop.f32.mrf.mxu0
        %v2307 = vadd.f32 %v1997, %v2306
        %2308 = vmatmul.f32.gmra.mxu0 %v1908
        %v2309 = vpop.f32.mrf.mxu0
        %v2310 = vadd.f32 %v1997, %v2309
        %2311 = vmatmul.f32.gmra.mxu0 %v1910
        %v2312 = vpop.f32.mrf.mxu0
        %v2313 = vadd.f32 %v1997, %v2312
        %2314 = vmatmul.f32.gmra.mxu0 %v1912
        %v2315 = vpop.f32.mrf.mxu0
        %v2316 = vadd.f32 %v1997, %v2315
        %2317 = vmatmul.f32.gmra.mxu0 %v1914
        %v2318 = vpop.f32.mrf.mxu0
        %v2319 = vadd.f32 %v1997, %v2318
        %2320 = vmatmul.f32.gmra.mxu0 %v1916
        %v2321 = vpop.f32.mrf.mxu0
        %v2322 = vadd.f32 %v1997, %v2321
        %2323 = vmatmul.f32.gmra.mxu0 %v1918
        %v2324 = vpop.f32.mrf.mxu0
        %v2325 = vadd.f32 %v1997, %v2324
        %2326 = vmatmul.f32.gmra.mxu0 %v1920
        %v2327 = vpop.f32.mrf.mxu0
        %v2328 = vadd.f32 %v1997, %v2327
        %2329 = vmatmul.f32.gmra.mxu0 %v1922
        %v2330 = vpop.f32.mrf.mxu0
        %v2331 = vadd.f32 %v1997, %v2330
        %2332 = vmatmul.f32.gmra.mxu0 %v1924
        %v2333 = vpop.f32.mrf.mxu0
        %v2334 = vadd.f32 %v1997, %v2333
        %2335 = vmatmul.f32.gmra.mxu0 %v1926
        %v2336 = vpop.f32.mrf.mxu0
        %v2337 = vadd.f32 %v1997, %v2336
        %2338 = vdwg.mxu0
        %2339 = vmatpush.msra.mxu0 %v1992
        %2340 = vmatpush.msra.mxu0 %v1990
        %2341 = vmatpush.msra.mxu0 %v1988
        %2342 = vmatpush.msra.mxu0 %v1986
        %2343 = vmatpush.msra.mxu0 %v1984
        %2344 = vmatpush.msra.mxu0 %v1982
        %2345 = vmatpush.msra.mxu0 %v1980
        %2346 = vmatpush.msra.mxu0 %v1978
        %2347 = vmatpush.msra.mxu0 %v1976
        %2348 = vmatpush.msra.mxu0 %v1974
        %2349 = vmatpush.msra.mxu0 %v1972
        %2350 = vmatpush.msra.mxu0 %v1970
        %2351 = vmatpush.msra.mxu0 %v1968
        %2352 = vmatpush.msra.mxu0 %v1966
        %2353 = vmatpush.msra.mxu0 %v1964
        %2354 = vmatpush.msra.mxu0 %v1962
        %2355 = vmatmul.f32.gmra.mxu0 %v1865
        %v2356 = vpop.f32.mrf.mxu0
        %v2357 = vadd.f32 %v2244, %v2356
        %2358 = vmatmul.f32.gmra.mxu0 %v1867
        %v2359 = vpop.f32.mrf.mxu0
        %v2360 = vadd.f32 %v2247, %v2359
        %2361 = vmatmul.f32.gmra.mxu0 %v1869
        %v2362 = vpop.f32.mrf.mxu0
        %v2363 = vadd.f32 %v2250, %v2362
        %2364 = vmatmul.f32.gmra.mxu0 %v1871
        %v2365 = vpop.f32.mrf.mxu0
        %v2366 = vadd.f32 %v2253, %v2365
        %2367 = vmatmul.f32.gmra.mxu0 %v1873
        %v2368 = vpop.f32.mrf.mxu0
        %v2369 = vadd.f32 %v2256, %v2368
        %2370 = vmatmul.f32.gmra.mxu0 %v1875
        %v2371 = vpop.f32.mrf.mxu0
        %v2372 = vadd.f32 %v2259, %v2371
        %2373 = vmatmul.f32.gmra.mxu0 %v1877
        %v2374 = vpop.f32.mrf.mxu0
        %v2375 = vadd.f32 %v2262, %v2374
        %2376 = vmatmul.f32.gmra.mxu0 %v1879
        %v2377 = vpop.f32.mrf.mxu0
        %v2378 = vadd.f32 %v2265, %v2377
        %2379 = vmatmul.f32.gmra.mxu0 %v1881
        %v2380 = vpop.f32.mrf.mxu0
        %v2381 = vadd.f32 %v2268, %v2380
        %2382 = vmatmul.f32.gmra.mxu0 %v1883
        %v2383 = vpop.f32.mrf.mxu0
        %v2384 = vadd.f32 %v2271, %v2383
        %2385 = vmatmul.f32.gmra.mxu0 %v1885
        %v2386 = vpop.f32.mrf.mxu0
        %v2387 = vadd.f32 %v2274, %v2386
        %2388 = vmatmul.f32.gmra.mxu0 %v1887
        %v2389 = vpop.f32.mrf.mxu0
        %v2390 = vadd.f32 %v2277, %v2389
        %2391 = vmatmul.f32.gmra.mxu0 %v1889
        %v2392 = vpop.f32.mrf.mxu0
        %v2393 = vadd.f32 %v2280, %v2392
        %2394 = vmatmul.f32.gmra.mxu0 %v1891
        %v2395 = vpop.f32.mrf.mxu0
        %v2396 = vadd.f32 %v2283, %v2395
        %2397 = vmatmul.f32.gmra.mxu0 %v1893
        %v2398 = vpop.f32.mrf.mxu0
        %v2399 = vadd.f32 %v2286, %v2398
        %2400 = vmatmul.f32.gmra.mxu0 %v1895
        %v2401 = vpop.f32.mrf.mxu0
        %v2402 = vadd.f32 %v2289, %v2401
        %2403 = vmatmul.f32.gmra.mxu0 %v1897
        %v2404 = vpop.f32.mrf.mxu0
        %v2405 = vadd.f32 %v2292, %v2404
        %2406 = vmatmul.f32.gmra.mxu0 %v1899
        %v2407 = vpop.f32.mrf.mxu0
        %v2408 = vadd.f32 %v2295, %v2407
        %2409 = vmatmul.f32.gmra.mxu0 %v1901
        %v2410 = vpop.f32.mrf.mxu0
        %v2411 = vadd.f32 %v2298, %v2410
        %2412 = vmatmul.f32.gmra.mxu0 %v1903
        %v2413 = vpop.f32.mrf.mxu0
        %v2414 = vadd.f32 %v2301, %v2413
        %2415 = vmatmul.f32.gmra.mxu0 %v1905
        %v2416 = vpop.f32.mrf.mxu0
        %v2417 = vadd.f32 %v2304, %v2416
        %2418 = vmatmul.f32.gmra.mxu0 %v1907
        %v2419 = vpop.f32.mrf.mxu0
        %v2420 = vadd.f32 %v2307, %v2419
        %2421 = vmatmul.f32.gmra.mxu0 %v1909
        %v2422 = vpop.f32.mrf.mxu0
        %v2423 = vadd.f32 %v2310, %v2422
        %2424 = vmatmul.f32.gmra.mxu0 %v1911
        %v2425 = vpop.f32.mrf.mxu0
        %v2426 = vadd.f32 %v2313, %v2425
        %2427 = vmatmul.f32.gmra.mxu0 %v1913
        %v2428 = vpop.f32.mrf.mxu0
        %v2429 = vadd.f32 %v2316, %v2428
        %2430 = vmatmul.f32.gmra.mxu0 %v1915
        %v2431 = vpop.f32.mrf.mxu0
        %v2432 = vadd.f32 %v2319, %v2431
        %2433 = vmatmul.f32.gmra.mxu0 %v1917
        %v2434 = vpop.f32.mrf.mxu0
        %v2435 = vadd.f32 %v2322, %v2434
        %2436 = vmatmul.f32.gmra.mxu0 %v1919
        %v2437 = vpop.f32.mrf.mxu0
        %v2438 = vadd.f32 %v2325, %v2437
        %2439 = vmatmul.f32.gmra.mxu0 %v1921
        %v2440 = vpop.f32.mrf.mxu0
        %v2441 = vadd.f32 %v2328, %v2440
        %2442 = vmatmul.f32.gmra.mxu0 %v1923
        %v2443 = vpop.f32.mrf.mxu0
        %v2444 = vadd.f32 %v2331, %v2443
        %2445 = vmatmul.f32.gmra.mxu0 %v1925
        %v2446 = vpop.f32.mrf.mxu0
        %v2447 = vadd.f32 %v2334, %v2446
        %2448 = vmatmul.f32.gmra.mxu0 %v1927
        %v2449 = vpop.f32.mrf.mxu0
        %v2450 = vadd.f32 %v2337, %v2449
        %2451 = vdwg.mxu0
        %v2452 = vmax.f32 %v2131, 0.0
        %v2453 = vmax.f32 %v2357, 0.0
        %v2454 = vmax.f32 %v2134, 0.0
        %v2455 = vmax.f32 %v2360, 0.0
        %v2456 = vmax.f32 %v2137, 0.0
        %v2457 = vmax.f32 %v2363, 0.0
        %v2458 = vmax.f32 %v2140, 0.0
        %v2459 = vmax.f32 %v2366, 0.0
        %v2460 = vmax.f32 %v2143, 0.0
        %v2461 = vmax.f32 %v2369, 0.0
        %v2462 = vmax.f32 %v2146, 0.0
        %v2463 = vmax.f32 %v2372, 0.0
        %v2464 = vmax.f32 %v2149, 0.0
        %v2465 = vmax.f32 %v2375, 0.0
        %v2466 = vmax.f32 %v2152, 0.0
        %v2467 = vmax.f32 %v2378, 0.0
        %v2468 = vmax.f32 %v2155, 0.0
        %v2469 = vmax.f32 %v2381, 0.0
        %v2470 = vmax.f32 %v2158, 0.0
        %v2471 = vmax.f32 %v2384, 0.0
        %v2472 = vmax.f32 %v2161, 0.0
        %v2473 = vmax.f32 %v2387, 0.0
        %v2474 = vmax.f32 %v2164, 0.0
        %v2475 = vmax.f32 %v2390, 0.0
        %v2476 = vmax.f32 %v2167, 0.0
        %v2477 = vmax.f32 %v2393, 0.0
        %v2478 = vmax.f32 %v2170, 0.0
        %v2479 = vmax.f32 %v2396, 0.0
        %v2480 = vmax.f32 %v2173, 0.0
        %v2481 = vmax.f32 %v2399, 0.0
        %v2482 = vmax.f32 %v2176, 0.0
        %v2483 = vmax.f32 %v2402, 0.0
        %v2484 = vmax.f32 %v2179, 0.0
        %v2485 = vmax.f32 %v2405, 0.0
        %v2486 = vmax.f32 %v2182, 0.0
        %v2487 = vmax.f32 %v2408, 0.0
        %v2488 = vmax.f32 %v2185, 0.0
        %v2489 = vmax.f32 %v2411, 0.0
        %v2490 = vmax.f32 %v2188, 0.0
        %v2491 = vmax.f32 %v2414, 0.0
        %v2492 = vmax.f32 %v2191, 0.0
        %v2493 = vmax.f32 %v2417, 0.0
        %v2494 = vmax.f32 %v2194, 0.0
        %v2495 = vmax.f32 %v2420, 0.0
        %v2496 = vmax.f32 %v2197, 0.0
        %v2497 = vmax.f32 %v2423, 0.0
        %v2498 = vmax.f32 %v2200, 0.0
        %v2499 = vmax.f32 %v2426, 0.0
        %v2500 = vmax.f32 %v2203, 0.0
        %v2501 = vmax.f32 %v2429, 0.0
        %v2502 = vmax.f32 %v2206, 0.0
        %v2503 = vmax.f32 %v2432, 0.0
        %v2504 = vmax.f32 %v2209, 0.0
        %v2505 = vmax.f32 %v2435, 0.0
        %v2506 = vmax.f32 %v2212, 0.0
        %v2507 = vmax.f32 %v2438, 0.0
        %v2508 = vmax.f32 %v2215, 0.0
        %v2509 = vmax.f32 %v2441, 0.0
        %v2510 = vmax.f32 %v2218, 0.0
        %v2511 = vmax.f32 %v2444, 0.0
        %v2512 = vmax.f32 %v2221, 0.0
        %v2513 = vmax.f32 %v2447, 0.0
        %v2514 = vmax.f32 %v2224, 0.0
        %v2515 = vmax.f32 %v2450, 0.0
        %s2516 = scalar_lea.vmem [#allocation5], 1536
        %v2517 = vld [vmem:[%s2516] sm:$0xff]
        %v2518 = vld [vmem:[%s2516 + $0x8] sm:$0xff]
        %v2519 = vld [vmem:[%s2516 + $0x10] sm:$0xff]
        %v2520 = vld [vmem:[%s2516 + $0x18] sm:$0xff]
        %v2521 = vld [vmem:[%s2516 + $0x20] sm:$0xff]
        %v2522 = vld [vmem:[%s2516 + $0x28] sm:$0xff]
        %v2523 = vld [vmem:[%s2516 + $0x30] sm:$0xff]
        %v2524 = vld [vmem:[%s2516 + $0x38] sm:$0xff]
        %v2525 = vld [vmem:[%s2516 + $0x40] sm:$0xff]
        %v2526 = vld [vmem:[%s2516 + $0x48] sm:$0xff]
        %v2527 = vld [vmem:[%s2516 + $0x50] sm:$0xff]
        %v2528 = vld [vmem:[%s2516 + $0x58] sm:$0xff]
        %v2529 = vld [vmem:[%s2516 + $0x60] sm:$0xff]
        %v2530 = vld [vmem:[%s2516 + $0x68] sm:$0xff]
        %v2531 = vld [vmem:[%s2516 + $0x70] sm:$0xff]
        %v2532 = vld [vmem:[%s2516 + $0x78] sm:$0xff]
        %v2533 = vld [vmem:[%s2516 + $0x80] sm:$0xff]
        %v2534 = vld [vmem:[%s2516 + $0x88] sm:$0xff]
        %v2535 = vld [vmem:[%s2516 + $0x90] sm:$0xff]
        %v2536 = vld [vmem:[%s2516 + $0x98] sm:$0xff]
        %v2537 = vld [vmem:[%s2516 + $0xa0] sm:$0xff]
        %v2538 = vld [vmem:[%s2516 + $0xa8] sm:$0xff]
        %v2539 = vld [vmem:[%s2516 + $0xb0] sm:$0xff]
        %v2540 = vld [vmem:[%s2516 + $0xb8] sm:$0xff]
        %v2541 = vld [vmem:[%s2516 + $0xc0] sm:$0xff]
        %v2542 = vld [vmem:[%s2516 + $0xc8] sm:$0xff]
        %v2543 = vld [vmem:[%s2516 + $0xd0] sm:$0xff]
        %v2544 = vld [vmem:[%s2516 + $0xd8] sm:$0xff]
        %v2545 = vld [vmem:[%s2516 + $0xe0] sm:$0xff]
        %v2546 = vld [vmem:[%s2516 + $0xe8] sm:$0xff]
        %v2547 = vld [vmem:[%s2516 + $0xf0] sm:$0xff]
        %v2548 = vld [vmem:[%s2516 + $0xf8] sm:$0xff]
        %v2549 = vld [vmem:[%s2516 + $0x100] sm:$0xff]
        %v2550 = vld [vmem:[%s2516 + $0x108] sm:$0xff]
        %v2551 = vld [vmem:[%s2516 + $0x110] sm:$0xff]
        %v2552 = vld [vmem:[%s2516 + $0x118] sm:$0xff]
        %v2553 = vld [vmem:[%s2516 + $0x120] sm:$0xff]
        %v2554 = vld [vmem:[%s2516 + $0x128] sm:$0xff]
        %v2555 = vld [vmem:[%s2516 + $0x130] sm:$0xff]
        %v2556 = vld [vmem:[%s2516 + $0x138] sm:$0xff]
        %v2557 = vld [vmem:[%s2516 + $0x140] sm:$0xff]
        %v2558 = vld [vmem:[%s2516 + $0x148] sm:$0xff]
        %v2559 = vld [vmem:[%s2516 + $0x150] sm:$0xff]
        %v2560 = vld [vmem:[%s2516 + $0x158] sm:$0xff]
        %v2561 = vld [vmem:[%s2516 + $0x160] sm:$0xff]
        %v2562 = vld [vmem:[%s2516 + $0x168] sm:$0xff]
        %v2563 = vld [vmem:[%s2516 + $0x170] sm:$0xff]
        %v2564 = vld [vmem:[%s2516 + $0x178] sm:$0xff]
        %v2565 = vld [vmem:[%s2516 + $0x180] sm:$0xff]
        %v2566 = vld [vmem:[%s2516 + $0x188] sm:$0xff]
        %v2567 = vld [vmem:[%s2516 + $0x190] sm:$0xff]
        %v2568 = vld [vmem:[%s2516 + $0x198] sm:$0xff]
        %v2569 = vld [vmem:[%s2516 + $0x1a0] sm:$0xff]
        %v2570 = vld [vmem:[%s2516 + $0x1a8] sm:$0xff]
        %v2571 = vld [vmem:[%s2516 + $0x1b0] sm:$0xff]
        %v2572 = vld [vmem:[%s2516 + $0x1b8] sm:$0xff]
        %v2573 = vld [vmem:[%s2516 + $0x1c0] sm:$0xff]
        %v2574 = vld [vmem:[%s2516 + $0x1c8] sm:$0xff]
        %v2575 = vld [vmem:[%s2516 + $0x1d0] sm:$0xff]
        %v2576 = vld [vmem:[%s2516 + $0x1d8] sm:$0xff]
        %v2577 = vld [vmem:[%s2516 + $0x1e0] sm:$0xff]
        %v2578 = vld [vmem:[%s2516 + $0x1e8] sm:$0xff]
        %v2579 = vld [vmem:[%s2516 + $0x1f0] sm:$0xff]
        %v2580 = vld [vmem:[%s2516 + $0x1f8] sm:$0xff]
        %s2581 = scalar_lea.vmem %s4, 6
        %v2582 = vld [vmem:[%s2581] sm:$0x3]
        %v2584 = vperm.slane %v2582, 0
        %v2585 = vperm.slane %v2582, 1
        %2588 = vmatpush.msra.mxu0 %v2547
        %2589 = vmatpush.msra.mxu0 %v2545
        %2590 = vmatpush.msra.mxu0 %v2543
        %2591 = vmatpush.msra.mxu0 %v2541
        %2592 = vmatpush.msra.mxu0 %v2539
        %2593 = vmatpush.msra.mxu0 %v2537
        %2594 = vmatpush.msra.mxu0 %v2535
        %2595 = vmatpush.msra.mxu0 %v2533
        %2596 = vmatpush.msra.mxu0 %v2531
        %2597 = vmatpush.msra.mxu0 %v2529
        %2598 = vmatpush.msra.mxu0 %v2527
        %2599 = vmatpush.msra.mxu0 %v2525
        %2600 = vmatpush.msra.mxu0 %v2523
        %2601 = vmatpush.msra.mxu0 %v2521
        %2602 = vmatpush.msra.mxu0 %v2519
        %2603 = vmatpush.msra.mxu0 %v2517
        %2604 = vmatmul.f32.gmra.mxu0 %v2452
        %v2605 = vpop.f32.mrf.mxu0
        %v2606 = vadd.f32 %v2584, %v2605
        %2607 = vmatmul.f32.gmra.mxu0 %v2454
        %v2608 = vpop.f32.mrf.mxu0
        %v2609 = vadd.f32 %v2584, %v2608
        %2610 = vmatmul.f32.gmra.mxu0 %v2456
        %v2611 = vpop.f32.mrf.mxu0
        %v2612 = vadd.f32 %v2584, %v2611
        %2613 = vmatmul.f32.gmra.mxu0 %v2458
        %v2614 = vpop.f32.mrf.mxu0
        %v2615 = vadd.f32 %v2584, %v2614
        %2616 = vmatmul.f32.gmra.mxu0 %v2460
        %v2617 = vpop.f32.mrf.mxu0
        %v2618 = vadd.f32 %v2584, %v2617
        %2619 = vmatmul.f32.gmra.mxu0 %v2462
        %v2620 = vpop.f32.mrf.mxu0
        %v2621 = vadd.f32 %v2584, %v2620
        %2622 = vmatmul.f32.gmra.mxu0 %v2464
        %v2623 = vpop.f32.mrf.mxu0
        %v2624 = vadd.f32 %v2584, %v2623
        %2625 = vmatmul.f32.gmra.mxu0 %v2466
        %v2626 = vpop.f32.mrf.mxu0
        %v2627 = vadd.f32 %v2584, %v2626
        %2628 = vmatmul.f32.gmra.mxu0 %v2468
        %v2629 = vpop.f32.mrf.mxu0
        %v2630 = vadd.f32 %v2584, %v2629
        %2631 = vmatmul.f32.gmra.mxu0 %v2470
        %v2632 = vpop.f32.mrf.mxu0
        %v2633 = vadd.f32 %v2584, %v2632
        %2634 = vmatmul.f32.gmra.mxu0 %v2472
        %v2635 = vpop.f32.mrf.mxu0
        %v2636 = vadd.f32 %v2584, %v2635
        %2637 = vmatmul.f32.gmra.mxu0 %v2474
        %v2638 = vpop.f32.mrf.mxu0
        %v2639 = vadd.f32 %v2584, %v2638
        %2640 = vmatmul.f32.gmra.mxu0 %v2476
        %v2641 = vpop.f32.mrf.mxu0
        %v2642 = vadd.f32 %v2584, %v2641
        %2643 = vmatmul.f32.gmra.mxu0 %v2478
        %v2644 = vpop.f32.mrf.mxu0
        %v2645 = vadd.f32 %v2584, %v2644
        %2646 = vmatmul.f32.gmra.mxu0 %v2480
        %v2647 = vpop.f32.mrf.mxu0
        %v2648 = vadd.f32 %v2584, %v2647
        %2649 = vmatmul.f32.gmra.mxu0 %v2482
        %v2650 = vpop.f32.mrf.mxu0
        %v2651 = vadd.f32 %v2584, %v2650
        %2652 = vmatmul.f32.gmra.mxu0 %v2484
        %v2653 = vpop.f32.mrf.mxu0
        %v2654 = vadd.f32 %v2584, %v2653
        %2655 = vmatmul.f32.gmra.mxu0 %v2486
        %v2656 = vpop.f32.mrf.mxu0
        %v2657 = vadd.f32 %v2584, %v2656
        %2658 = vmatmul.f32.gmra.mxu0 %v2488
        %v2659 = vpop.f32.mrf.mxu0
        %v2660 = vadd.f32 %v2584, %v2659
        %2661 = vmatmul.f32.gmra.mxu0 %v2490
        %v2662 = vpop.f32.mrf.mxu0
        %v2663 = vadd.f32 %v2584, %v2662
        %2664 = vmatmul.f32.gmra.mxu0 %v2492
        %v2665 = vpop.f32.mrf.mxu0
        %v2666 = vadd.f32 %v2584, %v2665
        %2667 = vmatmul.f32.gmra.mxu0 %v2494
        %v2668 = vpop.f32.mrf.mxu0
        %v2669 = vadd.f32 %v2584, %v2668
        %2670 = vmatmul.f32.gmra.mxu0 %v2496
        %v2671 = vpop.f32.mrf.mxu0
        %v2672 = vadd.f32 %v2584, %v2671
        %2673 = vmatmul.f32.gmra.mxu0 %v2498
        %v2674 = vpop.f32.mrf.mxu0
        %v2675 = vadd.f32 %v2584, %v2674
        %2676 = vmatmul.f32.gmra.mxu0 %v2500
        %v2677 = vpop.f32.mrf.mxu0
        %v2678 = vadd.f32 %v2584, %v2677
        %2679 = vmatmul.f32.gmra.mxu0 %v2502
        %v2680 = vpop.f32.mrf.mxu0
        %v2681 = vadd.f32 %v2584, %v2680
        %2682 = vmatmul.f32.gmra.mxu0 %v2504
        %v2683 = vpop.f32.mrf.mxu0
        %v2684 = vadd.f32 %v2584, %v2683
        %2685 = vmatmul.f32.gmra.mxu0 %v2506
        %v2686 = vpop.f32.mrf.mxu0
        %v2687 = vadd.f32 %v2584, %v2686
        %2688 = vmatmul.f32.gmra.mxu0 %v2508
        %v2689 = vpop.f32.mrf.mxu0
        %v2690 = vadd.f32 %v2584, %v2689
        %2691 = vmatmul.f32.gmra.mxu0 %v2510
        %v2692 = vpop.f32.mrf.mxu0
        %v2693 = vadd.f32 %v2584, %v2692
        %2694 = vmatmul.f32.gmra.mxu0 %v2512
        %v2695 = vpop.f32.mrf.mxu0
        %v2696 = vadd.f32 %v2584, %v2695
        %2697 = vmatmul.f32.gmra.mxu0 %v2514
        %v2698 = vpop.f32.mrf.mxu0
        %v2699 = vadd.f32 %v2584, %v2698
        %2700 = vdwg.mxu0
        %2701 = vmatpush.msra.mxu0 %v2579
        %2702 = vmatpush.msra.mxu0 %v2577
        %2703 = vmatpush.msra.mxu0 %v2575
        %2704 = vmatpush.msra.mxu0 %v2573
        %2705 = vmatpush.msra.mxu0 %v2571
        %2706 = vmatpush.msra.mxu0 %v2569
        %2707 = vmatpush.msra.mxu0 %v2567
        %2708 = vmatpush.msra.mxu0 %v2565
        %2709 = vmatpush.msra.mxu0 %v2563
        %2710 = vmatpush.msra.mxu0 %v2561
        %2711 = vmatpush.msra.mxu0 %v2559
        %2712 = vmatpush.msra.mxu0 %v2557
        %2713 = vmatpush.msra.mxu0 %v2555
        %2714 = vmatpush.msra.mxu0 %v2553
        %2715 = vmatpush.msra.mxu0 %v2551
        %2716 = vmatpush.msra.mxu0 %v2549
        %2717 = vmatmul.f32.gmra.mxu0 %v2453
        %v2718 = vpop.f32.mrf.mxu0
        %v2719 = vadd.f32 %v2606, %v2718
        %2720 = vmatmul.f32.gmra.mxu0 %v2455
        %v2721 = vpop.f32.mrf.mxu0
        %v2722 = vadd.f32 %v2609, %v2721
        %2723 = vmatmul.f32.gmra.mxu0 %v2457
        %v2724 = vpop.f32.mrf.mxu0
        %v2725 = vadd.f32 %v2612, %v2724
        %2726 = vmatmul.f32.gmra.mxu0 %v2459
        %v2727 = vpop.f32.mrf.mxu0
        %v2728 = vadd.f32 %v2615, %v2727
        %2729 = vmatmul.f32.gmra.mxu0 %v2461
        %v2730 = vpop.f32.mrf.mxu0
        %v2731 = vadd.f32 %v2618, %v2730
        %2732 = vmatmul.f32.gmra.mxu0 %v2463
        %v2733 = vpop.f32.mrf.mxu0
        %v2734 = vadd.f32 %v2621, %v2733
        %2735 = vmatmul.f32.gmra.mxu0 %v2465
        %v2736 = vpop.f32.mrf.mxu0
        %v2737 = vadd.f32 %v2624, %v2736
        %2738 = vmatmul.f32.gmra.mxu0 %v2467
        %v2739 = vpop.f32.mrf.mxu0
        %v2740 = vadd.f32 %v2627, %v2739
        %2741 = vmatmul.f32.gmra.mxu0 %v2469
        %v2742 = vpop.f32.mrf.mxu0
        %v2743 = vadd.f32 %v2630, %v2742
        %2744 = vmatmul.f32.gmra.mxu0 %v2471
        %v2745 = vpop.f32.mrf.mxu0
        %v2746 = vadd.f32 %v2633, %v2745
        %2747 = vmatmul.f32.gmra.mxu0 %v2473
        %v2748 = vpop.f32.mrf.mxu0
        %v2749 = vadd.f32 %v2636, %v2748
        %2750 = vmatmul.f32.gmra.mxu0 %v2475
        %v2751 = vpop.f32.mrf.mxu0
        %v2752 = vadd.f32 %v2639, %v2751
        %2753 = vmatmul.f32.gmra.mxu0 %v2477
        %v2754 = vpop.f32.mrf.mxu0
        %v2755 = vadd.f32 %v2642, %v2754
        %2756 = vmatmul.f32.gmra.mxu0 %v2479
        %v2757 = vpop.f32.mrf.mxu0
        %v2758 = vadd.f32 %v2645, %v2757
        %2759 = vmatmul.f32.gmra.mxu0 %v2481
        %v2760 = vpop.f32.mrf.mxu0
        %v2761 = vadd.f32 %v2648, %v2760
        %2762 = vmatmul.f32.gmra.mxu0 %v2483
        %v2763 = vpop.f32.mrf.mxu0
        %v2764 = vadd.f32 %v2651, %v2763
        %2765 = vmatmul.f32.gmra.mxu0 %v2485
        %v2766 = vpop.f32.mrf.mxu0
        %v2767 = vadd.f32 %v2654, %v2766
        %2768 = vmatmul.f32.gmra.mxu0 %v2487
        %v2769 = vpop.f32.mrf.mxu0
        %v2770 = vadd.f32 %v2657, %v2769
        %2771 = vmatmul.f32.gmra.mxu0 %v2489
        %v2772 = vpop.f32.mrf.mxu0
        %v2773 = vadd.f32 %v2660, %v2772
        %2774 = vmatmul.f32.gmra.mxu0 %v2491
        %v2775 = vpop.f32.mrf.mxu0
        %v2776 = vadd.f32 %v2663, %v2775
        %2777 = vmatmul.f32.gmra.mxu0 %v2493
        %v2778 = vpop.f32.mrf.mxu0
        %v2779 = vadd.f32 %v2666, %v2778
        %2780 = vmatmul.f32.gmra.mxu0 %v2495
        %v2781 = vpop.f32.mrf.mxu0
        %v2782 = vadd.f32 %v2669, %v2781
        %2783 = vmatmul.f32.gmra.mxu0 %v2497
        %v2784 = vpop.f32.mrf.mxu0
        %v2785 = vadd.f32 %v2672, %v2784
        %2786 = vmatmul.f32.gmra.mxu0 %v2499
        %v2787 = vpop.f32.mrf.mxu0
        %v2788 = vadd.f32 %v2675, %v2787
        %2789 = vmatmul.f32.gmra.mxu0 %v2501
        %v2790 = vpop.f32.mrf.mxu0
        %v2791 = vadd.f32 %v2678, %v2790
        %2792 = vmatmul.f32.gmra.mxu0 %v2503
        %v2793 = vpop.f32.mrf.mxu0
        %v2794 = vadd.f32 %v2681, %v2793
        %2795 = vmatmul.f32.gmra.mxu0 %v2505
        %v2796 = vpop.f32.mrf.mxu0
        %v2797 = vadd.f32 %v2684, %v2796
        %2798 = vmatmul.f32.gmra.mxu0 %v2507
        %v2799 = vpop.f32.mrf.mxu0
        %v2800 = vadd.f32 %v2687, %v2799
        %2801 = vmatmul.f32.gmra.mxu0 %v2509
        %v2802 = vpop.f32.mrf.mxu0
        %v2803 = vadd.f32 %v2690, %v2802
        %2804 = vmatmul.f32.gmra.mxu0 %v2511
        %v2805 = vpop.f32.mrf.mxu0
        %v2806 = vadd.f32 %v2693, %v2805
        %2807 = vmatmul.f32.gmra.mxu0 %v2513
        %v2808 = vpop.f32.mrf.mxu0
        %v2809 = vadd.f32 %v2696, %v2808
        %2810 = vmatmul.f32.gmra.mxu0 %v2515
        %v2811 = vpop.f32.mrf.mxu0
        %v2812 = vadd.f32 %v2699, %v2811
        %2813 = vdwg.mxu0
        %2814 = vmatpush.msra.mxu0 %v2548
        %2815 = vmatpush.msra.mxu0 %v2546
        %2816 = vmatpush.msra.mxu0 %v2544
        %2817 = vmatpush.msra.mxu0 %v2542
        %2818 = vmatpush.msra.mxu0 %v2540
        %2819 = vmatpush.msra.mxu0 %v2538
        %2820 = vmatpush.msra.mxu0 %v2536
        %2821 = vmatpush.msra.mxu0 %v2534
        %2822 = vmatpush.msra.mxu0 %v2532
        %2823 = vmatpush.msra.mxu0 %v2530
        %2824 = vmatpush.msra.mxu0 %v2528
        %2825 = vmatpush.msra.mxu0 %v2526
        %2826 = vmatpush.msra.mxu0 %v2524
        %2827 = vmatpush.msra.mxu0 %v2522
        %2828 = vmatpush.msra.mxu0 %v2520
        %2829 = vmatpush.msra.mxu0 %v2518
        %2830 = vmatmul.f32.gmra.mxu0 %v2452
        %v2831 = vpop.f32.mrf.mxu0
        %v2832 = vadd.f32 %v2585, %v2831
        %2833 = vmatmul.f32.gmra.mxu0 %v2454
        %v2834 = vpop.f32.mrf.mxu0
        %v2835 = vadd.f32 %v2585, %v2834
        %2836 = vmatmul.f32.gmra.mxu0 %v2456
        %v2837 = vpop.f32.mrf.mxu0
        %v2838 = vadd.f32 %v2585, %v2837
        %2839 = vmatmul.f32.gmra.mxu0 %v2458
        %v2840 = vpop.f32.mrf.mxu0
        %v2841 = vadd.f32 %v2585, %v2840
        %2842 = vmatmul.f32.gmra.mxu0 %v2460
        %v2843 = vpop.f32.mrf.mxu0
        %v2844 = vadd.f32 %v2585, %v2843
        %2845 = vmatmul.f32.gmra.mxu0 %v2462
        %v2846 = vpop.f32.mrf.mxu0
        %v2847 = vadd.f32 %v2585, %v2846
        %2848 = vmatmul.f32.gmra.mxu0 %v2464
        %v2849 = vpop.f32.mrf.mxu0
        %v2850 = vadd.f32 %v2585, %v2849
        %2851 = vmatmul.f32.gmra.mxu0 %v2466
        %v2852 = vpop.f32.mrf.mxu0
        %v2853 = vadd.f32 %v2585, %v2852
        %2854 = vmatmul.f32.gmra.mxu0 %v2468
        %v2855 = vpop.f32.mrf.mxu0
        %v2856 = vadd.f32 %v2585, %v2855
        %2857 = vmatmul.f32.gmra.mxu0 %v2470
        %v2858 = vpop.f32.mrf.mxu0
        %v2859 = vadd.f32 %v2585, %v2858
        %2860 = vmatmul.f32.gmra.mxu0 %v2472
        %v2861 = vpop.f32.mrf.mxu0
        %v2862 = vadd.f32 %v2585, %v2861
        %2863 = vmatmul.f32.gmra.mxu0 %v2474
        %v2864 = vpop.f32.mrf.mxu0
        %v2865 = vadd.f32 %v2585, %v2864
        %2866 = vmatmul.f32.gmra.mxu0 %v2476
        %v2867 = vpop.f32.mrf.mxu0
        %v2868 = vadd.f32 %v2585, %v2867
        %2869 = vmatmul.f32.gmra.mxu0 %v2478
        %v2870 = vpop.f32.mrf.mxu0
        %v2871 = vadd.f32 %v2585, %v2870
        %2872 = vmatmul.f32.gmra.mxu0 %v2480
        %v2873 = vpop.f32.mrf.mxu0
        %v2874 = vadd.f32 %v2585, %v2873
        %2875 = vmatmul.f32.gmra.mxu0 %v2482
        %v2876 = vpop.f32.mrf.mxu0
        %v2877 = vadd.f32 %v2585, %v2876
        %2878 = vmatmul.f32.gmra.mxu0 %v2484
        %v2879 = vpop.f32.mrf.mxu0
        %v2880 = vadd.f32 %v2585, %v2879
        %2881 = vmatmul.f32.gmra.mxu0 %v2486
        %v2882 = vpop.f32.mrf.mxu0
        %v2883 = vadd.f32 %v2585, %v2882
        %2884 = vmatmul.f32.gmra.mxu0 %v2488
        %v2885 = vpop.f32.mrf.mxu0
        %v2886 = vadd.f32 %v2585, %v2885
        %2887 = vmatmul.f32.gmra.mxu0 %v2490
        %v2888 = vpop.f32.mrf.mxu0
        %v2889 = vadd.f32 %v2585, %v2888
        %2890 = vmatmul.f32.gmra.mxu0 %v2492
        %v2891 = vpop.f32.mrf.mxu0
        %v2892 = vadd.f32 %v2585, %v2891
        %2893 = vmatmul.f32.gmra.mxu0 %v2494
        %v2894 = vpop.f32.mrf.mxu0
        %v2895 = vadd.f32 %v2585, %v2894
        %2896 = vmatmul.f32.gmra.mxu0 %v2496
        %v2897 = vpop.f32.mrf.mxu0
        %v2898 = vadd.f32 %v2585, %v2897
        %2899 = vmatmul.f32.gmra.mxu0 %v2498
        %v2900 = vpop.f32.mrf.mxu0
        %v2901 = vadd.f32 %v2585, %v2900
        %2902 = vmatmul.f32.gmra.mxu0 %v2500
        %v2903 = vpop.f32.mrf.mxu0
        %v2904 = vadd.f32 %v2585, %v2903
        %2905 = vmatmul.f32.gmra.mxu0 %v2502
        %v2906 = vpop.f32.mrf.mxu0
        %v2907 = vadd.f32 %v2585, %v2906
        %2908 = vmatmul.f32.gmra.mxu0 %v2504
        %v2909 = vpop.f32.mrf.mxu0
        %v2910 = vadd.f32 %v2585, %v2909
        %2911 = vmatmul.f32.gmra.mxu0 %v2506
        %v2912 = vpop.f32.mrf.mxu0
        %v2913 = vadd.f32 %v2585, %v2912
        %2914 = vmatmul.f32.gmra.mxu0 %v2508
        %v2915 = vpop.f32.mrf.mxu0
        %v2916 = vadd.f32 %v2585, %v2915
        %2917 = vmatmul.f32.gmra.mxu0 %v2510
        %v2918 = vpop.f32.mrf.mxu0
        %v2919 = vadd.f32 %v2585, %v2918
        %2920 = vmatmul.f32.gmra.mxu0 %v2512
        %v2921 = vpop.f32.mrf.mxu0
        %v2922 = vadd.f32 %v2585, %v2921
        %2923 = vmatmul.f32.gmra.mxu0 %v2514
        %v2924 = vpop.f32.mrf.mxu0
        %v2925 = vadd.f32 %v2585, %v2924
        %2926 = vdwg.mxu0
        %2927 = vmatpush.msra.mxu0 %v2580
        %2928 = vmatpush.msra.mxu0 %v2578
        %2929 = vmatpush.msra.mxu0 %v2576
        %2930 = vmatpush.msra.mxu0 %v2574
        %2931 = vmatpush.msra.mxu0 %v2572
        %2932 = vmatpush.msra.mxu0 %v2570
        %2933 = vmatpush.msra.mxu0 %v2568
        %2934 = vmatpush.msra.mxu0 %v2566
        %2935 = vmatpush.msra.mxu0 %v2564
        %2936 = vmatpush.msra.mxu0 %v2562
        %2937 = vmatpush.msra.mxu0 %v2560
        %2938 = vmatpush.msra.mxu0 %v2558
        %2939 = vmatpush.msra.mxu0 %v2556
        %2940 = vmatpush.msra.mxu0 %v2554
        %2941 = vmatpush.msra.mxu0 %v2552
        %2942 = vmatpush.msra.mxu0 %v2550
        %2943 = vmatmul.f32.gmra.mxu0 %v2453
        %v2944 = vpop.f32.mrf.mxu0
        %v2945 = vadd.f32 %v2832, %v2944
        %2946 = vmatmul.f32.gmra.mxu0 %v2455
        %v2947 = vpop.f32.mrf.mxu0
        %v2948 = vadd.f32 %v2835, %v2947
        %2949 = vmatmul.f32.gmra.mxu0 %v2457
        %v2950 = vpop.f32.mrf.mxu0
        %v2951 = vadd.f32 %v2838, %v2950
        %2952 = vmatmul.f32.gmra.mxu0 %v2459
        %v2953 = vpop.f32.mrf.mxu0
        %v2954 = vadd.f32 %v2841, %v2953
        %2955 = vmatmul.f32.gmra.mxu0 %v2461
        %v2956 = vpop.f32.mrf.mxu0
        %v2957 = vadd.f32 %v2844, %v2956
        %2958 = vmatmul.f32.gmra.mxu0 %v2463
        %v2959 = vpop.f32.mrf.mxu0
        %v2960 = vadd.f32 %v2847, %v2959
        %2961 = vmatmul.f32.gmra.mxu0 %v2465
        %v2962 = vpop.f32.mrf.mxu0
        %v2963 = vadd.f32 %v2850, %v2962
        %2964 = vmatmul.f32.gmra.mxu0 %v2467
        %v2965 = vpop.f32.mrf.mxu0
        %v2966 = vadd.f32 %v2853, %v2965
        %2967 = vmatmul.f32.gmra.mxu0 %v2469
        %v2968 = vpop.f32.mrf.mxu0
        %v2969 = vadd.f32 %v2856, %v2968
        %2970 = vmatmul.f32.gmra.mxu0 %v2471
        %v2971 = vpop.f32.mrf.mxu0
        %v2972 = vadd.f32 %v2859, %v2971
        %2973 = vmatmul.f32.gmra.mxu0 %v2473
        %v2974 = vpop.f32.mrf.mxu0
        %v2975 = vadd.f32 %v2862, %v2974
        %2976 = vmatmul.f32.gmra.mxu0 %v2475
        %v2977 = vpop.f32.mrf.mxu0
        %v2978 = vadd.f32 %v2865, %v2977
        %2979 = vmatmul.f32.gmra.mxu0 %v2477
        %v2980 = vpop.f32.mrf.mxu0
        %v2981 = vadd.f32 %v2868, %v2980
        %2982 = vmatmul.f32.gmra.mxu0 %v2479
        %v2983 = vpop.f32.mrf.mxu0
        %v2984 = vadd.f32 %v2871, %v2983
        %2985 = vmatmul.f32.gmra.mxu0 %v2481
        %v2986 = vpop.f32.mrf.mxu0
        %v2987 = vadd.f32 %v2874, %v2986
        %2988 = vmatmul.f32.gmra.mxu0 %v2483
        %v2989 = vpop.f32.mrf.mxu0
        %v2990 = vadd.f32 %v2877, %v2989
        %2991 = vmatmul.f32.gmra.mxu0 %v2485
        %v2992 = vpop.f32.mrf.mxu0
        %v2993 = vadd.f32 %v2880, %v2992
        %2994 = vmatmul.f32.gmra.mxu0 %v2487
        %v2995 = vpop.f32.mrf.mxu0
        %v2996 = vadd.f32 %v2883, %v2995
        %2997 = vmatmul.f32.gmra.mxu0 %v2489
        %v2998 = vpop.f32.mrf.mxu0
        %v2999 = vadd.f32 %v2886, %v2998
        %3000 = vmatmul.f32.gmra.mxu0 %v2491
        %v3001 = vpop.f32.mrf.mxu0
        %v3002 = vadd.f32 %v2889, %v3001
        %3003 = vmatmul.f32.gmra.mxu0 %v2493
        %v3004 = vpop.f32.mrf.mxu0
        %v3005 = vadd.f32 %v2892, %v3004
        %3006 = vmatmul.f32.gmra.mxu0 %v2495
        %v3007 = vpop.f32.mrf.mxu0
        %v3008 = vadd.f32 %v2895, %v3007
        %3009 = vmatmul.f32.gmra.mxu0 %v2497
        %v3010 = vpop.f32.mrf.mxu0
        %v3011 = vadd.f32 %v2898, %v3010
        %3012 = vmatmul.f32.gmra.mxu0 %v2499
        %v3013 = vpop.f32.mrf.mxu0
        %v3014 = vadd.f32 %v2901, %v3013
        %3015 = vmatmul.f32.gmra.mxu0 %v2501
        %v3016 = vpop.f32.mrf.mxu0
        %v3017 = vadd.f32 %v2904, %v3016
        %3018 = vmatmul.f32.gmra.mxu0 %v2503
        %v3019 = vpop.f32.mrf.mxu0
        %v3020 = vadd.f32 %v2907, %v3019
        %3021 = vmatmul.f32.gmra.mxu0 %v2505
        %v3022 = vpop.f32.mrf.mxu0
        %v3023 = vadd.f32 %v2910, %v3022
        %3024 = vmatmul.f32.gmra.mxu0 %v2507
        %v3025 = vpop.f32.mrf.mxu0
        %v3026 = vadd.f32 %v2913, %v3025
        %3027 = vmatmul.f32.gmra.mxu0 %v2509
        %v3028 = vpop.f32.mrf.mxu0
        %v3029 = vadd.f32 %v2916, %v3028
        %3030 = vmatmul.f32.gmra.mxu0 %v2511
        %v3031 = vpop.f32.mrf.mxu0
        %v3032 = vadd.f32 %v2919, %v3031
        %3033 = vmatmul.f32.gmra.mxu0 %v2513
        %v3034 = vpop.f32.mrf.mxu0
        %v3035 = vadd.f32 %v2922, %v3034
        %3036 = vmatmul.f32.gmra.mxu0 %v2515
        %v3037 = vpop.f32.mrf.mxu0
        %v3038 = vadd.f32 %v2925, %v3037
        %3039 = vdwg.mxu0
        %v3040 = vmax.f32 %v2719, 0.0
        %v3041 = vmax.f32 %v2945, 0.0
        %v3042 = vmax.f32 %v2722, 0.0
        %v3043 = vmax.f32 %v2948, 0.0
        %v3044 = vmax.f32 %v2725, 0.0
        %v3045 = vmax.f32 %v2951, 0.0
        %v3046 = vmax.f32 %v2728, 0.0
        %v3047 = vmax.f32 %v2954, 0.0
        %v3048 = vmax.f32 %v2731, 0.0
        %v3049 = vmax.f32 %v2957, 0.0
        %v3050 = vmax.f32 %v2734, 0.0
        %v3051 = vmax.f32 %v2960, 0.0
        %v3052 = vmax.f32 %v2737, 0.0
        %v3053 = vmax.f32 %v2963, 0.0
        %v3054 = vmax.f32 %v2740, 0.0
        %v3055 = vmax.f32 %v2966, 0.0
        %v3056 = vmax.f32 %v2743, 0.0
        %v3057 = vmax.f32 %v2969, 0.0
        %v3058 = vmax.f32 %v2746, 0.0
        %v3059 = vmax.f32 %v2972, 0.0
        %v3060 = vmax.f32 %v2749, 0.0
        %v3061 = vmax.f32 %v2975, 0.0
        %v3062 = vmax.f32 %v2752, 0.0
        %v3063 = vmax.f32 %v2978, 0.0
        %v3064 = vmax.f32 %v2755, 0.0
        %v3065 = vmax.f32 %v2981, 0.0
        %v3066 = vmax.f32 %v2758, 0.0
        %v3067 = vmax.f32 %v2984, 0.0
        %v3068 = vmax.f32 %v2761, 0.0
        %v3069 = vmax.f32 %v2987, 0.0
        %v3070 = vmax.f32 %v2764, 0.0
        %v3071 = vmax.f32 %v2990, 0.0
        %v3072 = vmax.f32 %v2767, 0.0
        %v3073 = vmax.f32 %v2993, 0.0
        %v3074 = vmax.f32 %v2770, 0.0
        %v3075 = vmax.f32 %v2996, 0.0
        %v3076 = vmax.f32 %v2773, 0.0
        %v3077 = vmax.f32 %v2999, 0.0
        %v3078 = vmax.f32 %v2776, 0.0
        %v3079 = vmax.f32 %v3002, 0.0
        %v3080 = vmax.f32 %v2779, 0.0
        %v3081 = vmax.f32 %v3005, 0.0
        %v3082 = vmax.f32 %v2782, 0.0
        %v3083 = vmax.f32 %v3008, 0.0
        %v3084 = vmax.f32 %v2785, 0.0
        %v3085 = vmax.f32 %v3011, 0.0
        %v3086 = vmax.f32 %v2788, 0.0
        %v3087 = vmax.f32 %v3014, 0.0
        %v3088 = vmax.f32 %v2791, 0.0
        %v3089 = vmax.f32 %v3017, 0.0
        %v3090 = vmax.f32 %v2794, 0.0
        %v3091 = vmax.f32 %v3020, 0.0
        %v3092 = vmax.f32 %v2797, 0.0
        %v3093 = vmax.f32 %v3023, 0.0
        %v3094 = vmax.f32 %v2800, 0.0
        %v3095 = vmax.f32 %v3026, 0.0
        %v3096 = vmax.f32 %v2803, 0.0
        %v3097 = vmax.f32 %v3029, 0.0
        %v3098 = vmax.f32 %v2806, 0.0
        %v3099 = vmax.f32 %v3032, 0.0
        %v3100 = vmax.f32 %v2809, 0.0
        %v3101 = vmax.f32 %v3035, 0.0
        %v3102 = vmax.f32 %v2812, 0.0
        %v3103 = vmax.f32 %v3038, 0.0
        %s3104 = scalar_lea.vmem [#allocation5], 2048
        %v3105 = vld [vmem:[%s3104] sm:$0xff]
        %v3106 = vld [vmem:[%s3104 + $0x8] sm:$0xff]
        %v3107 = vld [vmem:[%s3104 + $0x10] sm:$0xff]
        %v3108 = vld [vmem:[%s3104 + $0x18] sm:$0xff]
        %v3109 = vld [vmem:[%s3104 + $0x20] sm:$0xff]
        %v3110 = vld [vmem:[%s3104 + $0x28] sm:$0xff]
        %v3111 = vld [vmem:[%s3104 + $0x30] sm:$0xff]
        %v3112 = vld [vmem:[%s3104 + $0x38] sm:$0xff]
        %v3113 = vld [vmem:[%s3104 + $0x40] sm:$0xff]
        %v3114 = vld [vmem:[%s3104 + $0x48] sm:$0xff]
        %v3115 = vld [vmem:[%s3104 + $0x50] sm:$0xff]
        %v3116 = vld [vmem:[%s3104 + $0x58] sm:$0xff]
        %v3117 = vld [vmem:[%s3104 + $0x60] sm:$0xff]
        %v3118 = vld [vmem:[%s3104 + $0x68] sm:$0xff]
        %v3119 = vld [vmem:[%s3104 + $0x70] sm:$0xff]
        %v3120 = vld [vmem:[%s3104 + $0x78] sm:$0xff]
        %v3121 = vld [vmem:[%s3104 + $0x80] sm:$0xff]
        %v3122 = vld [vmem:[%s3104 + $0x88] sm:$0xff]
        %v3123 = vld [vmem:[%s3104 + $0x90] sm:$0xff]
        %v3124 = vld [vmem:[%s3104 + $0x98] sm:$0xff]
        %v3125 = vld [vmem:[%s3104 + $0xa0] sm:$0xff]
        %v3126 = vld [vmem:[%s3104 + $0xa8] sm:$0xff]
        %v3127 = vld [vmem:[%s3104 + $0xb0] sm:$0xff]
        %v3128 = vld [vmem:[%s3104 + $0xb8] sm:$0xff]
        %v3129 = vld [vmem:[%s3104 + $0xc0] sm:$0xff]
        %v3130 = vld [vmem:[%s3104 + $0xc8] sm:$0xff]
        %v3131 = vld [vmem:[%s3104 + $0xd0] sm:$0xff]
        %v3132 = vld [vmem:[%s3104 + $0xd8] sm:$0xff]
        %v3133 = vld [vmem:[%s3104 + $0xe0] sm:$0xff]
        %v3134 = vld [vmem:[%s3104 + $0xe8] sm:$0xff]
        %v3135 = vld [vmem:[%s3104 + $0xf0] sm:$0xff]
        %v3136 = vld [vmem:[%s3104 + $0xf8] sm:$0xff]
        %v3137 = vld [vmem:[%s3104 + $0x100] sm:$0xff]
        %v3138 = vld [vmem:[%s3104 + $0x108] sm:$0xff]
        %v3139 = vld [vmem:[%s3104 + $0x110] sm:$0xff]
        %v3140 = vld [vmem:[%s3104 + $0x118] sm:$0xff]
        %v3141 = vld [vmem:[%s3104 + $0x120] sm:$0xff]
        %v3142 = vld [vmem:[%s3104 + $0x128] sm:$0xff]
        %v3143 = vld [vmem:[%s3104 + $0x130] sm:$0xff]
        %v3144 = vld [vmem:[%s3104 + $0x138] sm:$0xff]
        %v3145 = vld [vmem:[%s3104 + $0x140] sm:$0xff]
        %v3146 = vld [vmem:[%s3104 + $0x148] sm:$0xff]
        %v3147 = vld [vmem:[%s3104 + $0x150] sm:$0xff]
        %v3148 = vld [vmem:[%s3104 + $0x158] sm:$0xff]
        %v3149 = vld [vmem:[%s3104 + $0x160] sm:$0xff]
        %v3150 = vld [vmem:[%s3104 + $0x168] sm:$0xff]
        %v3151 = vld [vmem:[%s3104 + $0x170] sm:$0xff]
        %v3152 = vld [vmem:[%s3104 + $0x178] sm:$0xff]
        %v3153 = vld [vmem:[%s3104 + $0x180] sm:$0xff]
        %v3154 = vld [vmem:[%s3104 + $0x188] sm:$0xff]
        %v3155 = vld [vmem:[%s3104 + $0x190] sm:$0xff]
        %v3156 = vld [vmem:[%s3104 + $0x198] sm:$0xff]
        %v3157 = vld [vmem:[%s3104 + $0x1a0] sm:$0xff]
        %v3158 = vld [vmem:[%s3104 + $0x1a8] sm:$0xff]
        %v3159 = vld [vmem:[%s3104 + $0x1b0] sm:$0xff]
        %v3160 = vld [vmem:[%s3104 + $0x1b8] sm:$0xff]
        %v3161 = vld [vmem:[%s3104 + $0x1c0] sm:$0xff]
        %v3162 = vld [vmem:[%s3104 + $0x1c8] sm:$0xff]
        %v3163 = vld [vmem:[%s3104 + $0x1d0] sm:$0xff]
        %v3164 = vld [vmem:[%s3104 + $0x1d8] sm:$0xff]
        %v3165 = vld [vmem:[%s3104 + $0x1e0] sm:$0xff]
        %v3166 = vld [vmem:[%s3104 + $0x1e8] sm:$0xff]
        %v3167 = vld [vmem:[%s3104 + $0x1f0] sm:$0xff]
        %v3168 = vld [vmem:[%s3104 + $0x1f8] sm:$0xff]
        %s3169 = scalar_lea.vmem %s4, 8
        %v3170 = vld [vmem:[%s3169] sm:$0x3]
        %v3172 = vperm.slane %v3170, 0
        %v3173 = vperm.slane %v3170, 1
        %3176 = vmatpush.msra.mxu0 %v3135
        %3177 = vmatpush.msra.mxu0 %v3133
        %3178 = vmatpush.msra.mxu0 %v3131
        %3179 = vmatpush.msra.mxu0 %v3129
        %3180 = vmatpush.msra.mxu0 %v3127
        %3181 = vmatpush.msra.mxu0 %v3125
        %3182 = vmatpush.msra.mxu0 %v3123
        %3183 = vmatpush.msra.mxu0 %v3121
        %3184 = vmatpush.msra.mxu0 %v3119
        %3185 = vmatpush.msra.mxu0 %v3117
        %3186 = vmatpush.msra.mxu0 %v3115
        %3187 = vmatpush.msra.mxu0 %v3113
        %3188 = vmatpush.msra.mxu0 %v3111
        %3189 = vmatpush.msra.mxu0 %v3109
        %3190 = vmatpush.msra.mxu0 %v3107
        %3191 = vmatpush.msra.mxu0 %v3105
        %3192 = vmatmul.f32.gmra.mxu0 %v3040
        %v3193 = vpop.f32.mrf.mxu0
        %v3194 = vadd.f32 %v3172, %v3193
        %3195 = vmatmul.f32.gmra.mxu0 %v3042
        %v3196 = vpop.f32.mrf.mxu0
        %v3197 = vadd.f32 %v3172, %v3196
        %3198 = vmatmul.f32.gmra.mxu0 %v3044
        %v3199 = vpop.f32.mrf.mxu0
        %v3200 = vadd.f32 %v3172, %v3199
        %3201 = vmatmul.f32.gmra.mxu0 %v3046
        %v3202 = vpop.f32.mrf.mxu0
        %v3203 = vadd.f32 %v3172, %v3202
        %3204 = vmatmul.f32.gmra.mxu0 %v3048
        %v3205 = vpop.f32.mrf.mxu0
        %v3206 = vadd.f32 %v3172, %v3205
        %3207 = vmatmul.f32.gmra.mxu0 %v3050
        %v3208 = vpop.f32.mrf.mxu0
        %v3209 = vadd.f32 %v3172, %v3208
        %3210 = vmatmul.f32.gmra.mxu0 %v3052
        %v3211 = vpop.f32.mrf.mxu0
        %v3212 = vadd.f32 %v3172, %v3211
        %3213 = vmatmul.f32.gmra.mxu0 %v3054
        %v3214 = vpop.f32.mrf.mxu0
        %v3215 = vadd.f32 %v3172, %v3214
        %3216 = vmatmul.f32.gmra.mxu0 %v3056
        %v3217 = vpop.f32.mrf.mxu0
        %v3218 = vadd.f32 %v3172, %v3217
        %3219 = vmatmul.f32.gmra.mxu0 %v3058
        %v3220 = vpop.f32.mrf.mxu0
        %v3221 = vadd.f32 %v3172, %v3220
        %3222 = vmatmul.f32.gmra.mxu0 %v3060
        %v3223 = vpop.f32.mrf.mxu0
        %v3224 = vadd.f32 %v3172, %v3223
        %3225 = vmatmul.f32.gmra.mxu0 %v3062
        %v3226 = vpop.f32.mrf.mxu0
        %v3227 = vadd.f32 %v3172, %v3226
        %3228 = vmatmul.f32.gmra.mxu0 %v3064
        %v3229 = vpop.f32.mrf.mxu0
        %v3230 = vadd.f32 %v3172, %v3229
        %3231 = vmatmul.f32.gmra.mxu0 %v3066
        %v3232 = vpop.f32.mrf.mxu0
        %v3233 = vadd.f32 %v3172, %v3232
        %3234 = vmatmul.f32.gmra.mxu0 %v3068
        %v3235 = vpop.f32.mrf.mxu0
        %v3236 = vadd.f32 %v3172, %v3235
        %3237 = vmatmul.f32.gmra.mxu0 %v3070
        %v3238 = vpop.f32.mrf.mxu0
        %v3239 = vadd.f32 %v3172, %v3238
        %3240 = vmatmul.f32.gmra.mxu0 %v3072
        %v3241 = vpop.f32.mrf.mxu0
        %v3242 = vadd.f32 %v3172, %v3241
        %3243 = vmatmul.f32.gmra.mxu0 %v3074
        %v3244 = vpop.f32.mrf.mxu0
        %v3245 = vadd.f32 %v3172, %v3244
        %3246 = vmatmul.f32.gmra.mxu0 %v3076
        %v3247 = vpop.f32.mrf.mxu0
        %v3248 = vadd.f32 %v3172, %v3247
        %3249 = vmatmul.f32.gmra.mxu0 %v3078
        %v3250 = vpop.f32.mrf.mxu0
        %v3251 = vadd.f32 %v3172, %v3250
        %3252 = vmatmul.f32.gmra.mxu0 %v3080
        %v3253 = vpop.f32.mrf.mxu0
        %v3254 = vadd.f32 %v3172, %v3253
        %3255 = vmatmul.f32.gmra.mxu0 %v3082
        %v3256 = vpop.f32.mrf.mxu0
        %v3257 = vadd.f32 %v3172, %v3256
        %3258 = vmatmul.f32.gmra.mxu0 %v3084
        %v3259 = vpop.f32.mrf.mxu0
        %v3260 = vadd.f32 %v3172, %v3259
        %3261 = vmatmul.f32.gmra.mxu0 %v3086
        %v3262 = vpop.f32.mrf.mxu0
        %v3263 = vadd.f32 %v3172, %v3262
        %3264 = vmatmul.f32.gmra.mxu0 %v3088
        %v3265 = vpop.f32.mrf.mxu0
        %v3266 = vadd.f32 %v3172, %v3265
        %3267 = vmatmul.f32.gmra.mxu0 %v3090
        %v3268 = vpop.f32.mrf.mxu0
        %v3269 = vadd.f32 %v3172, %v3268
        %3270 = vmatmul.f32.gmra.mxu0 %v3092
        %v3271 = vpop.f32.mrf.mxu0
        %v3272 = vadd.f32 %v3172, %v3271
        %3273 = vmatmul.f32.gmra.mxu0 %v3094
        %v3274 = vpop.f32.mrf.mxu0
        %v3275 = vadd.f32 %v3172, %v3274
        %3276 = vmatmul.f32.gmra.mxu0 %v3096
        %v3277 = vpop.f32.mrf.mxu0
        %v3278 = vadd.f32 %v3172, %v3277
        %3279 = vmatmul.f32.gmra.mxu0 %v3098
        %v3280 = vpop.f32.mrf.mxu0
        %v3281 = vadd.f32 %v3172, %v3280
        %3282 = vmatmul.f32.gmra.mxu0 %v3100
        %v3283 = vpop.f32.mrf.mxu0
        %v3284 = vadd.f32 %v3172, %v3283
        %3285 = vmatmul.f32.gmra.mxu0 %v3102
        %v3286 = vpop.f32.mrf.mxu0
        %v3287 = vadd.f32 %v3172, %v3286
        %3288 = vdwg.mxu0
        %3289 = vmatpush.msra.mxu0 %v3167
        %3290 = vmatpush.msra.mxu0 %v3165
        %3291 = vmatpush.msra.mxu0 %v3163
        %3292 = vmatpush.msra.mxu0 %v3161
        %3293 = vmatpush.msra.mxu0 %v3159
        %3294 = vmatpush.msra.mxu0 %v3157
        %3295 = vmatpush.msra.mxu0 %v3155
        %3296 = vmatpush.msra.mxu0 %v3153
        %3297 = vmatpush.msra.mxu0 %v3151
        %3298 = vmatpush.msra.mxu0 %v3149
        %3299 = vmatpush.msra.mxu0 %v3147
        %3300 = vmatpush.msra.mxu0 %v3145
        %3301 = vmatpush.msra.mxu0 %v3143
        %3302 = vmatpush.msra.mxu0 %v3141
        %3303 = vmatpush.msra.mxu0 %v3139
        %3304 = vmatpush.msra.mxu0 %v3137
        %3305 = vmatmul.f32.gmra.mxu0 %v3041
        %v3306 = vpop.f32.mrf.mxu0
        %v3307 = vadd.f32 %v3194, %v3306
        %3308 = vmatmul.f32.gmra.mxu0 %v3043
        %v3309 = vpop.f32.mrf.mxu0
        %v3310 = vadd.f32 %v3197, %v3309
        %3311 = vmatmul.f32.gmra.mxu0 %v3045
        %v3312 = vpop.f32.mrf.mxu0
        %v3313 = vadd.f32 %v3200, %v3312
        %3314 = vmatmul.f32.gmra.mxu0 %v3047
        %v3315 = vpop.f32.mrf.mxu0
        %v3316 = vadd.f32 %v3203, %v3315
        %3317 = vmatmul.f32.gmra.mxu0 %v3049
        %v3318 = vpop.f32.mrf.mxu0
        %v3319 = vadd.f32 %v3206, %v3318
        %3320 = vmatmul.f32.gmra.mxu0 %v3051
        %v3321 = vpop.f32.mrf.mxu0
        %v3322 = vadd.f32 %v3209, %v3321
        %3323 = vmatmul.f32.gmra.mxu0 %v3053
        %v3324 = vpop.f32.mrf.mxu0
        %v3325 = vadd.f32 %v3212, %v3324
        %3326 = vmatmul.f32.gmra.mxu0 %v3055
        %v3327 = vpop.f32.mrf.mxu0
        %v3328 = vadd.f32 %v3215, %v3327
        %3329 = vmatmul.f32.gmra.mxu0 %v3057
        %v3330 = vpop.f32.mrf.mxu0
        %v3331 = vadd.f32 %v3218, %v3330
        %3332 = vmatmul.f32.gmra.mxu0 %v3059
        %v3333 = vpop.f32.mrf.mxu0
        %v3334 = vadd.f32 %v3221, %v3333
        %3335 = vmatmul.f32.gmra.mxu0 %v3061
        %v3336 = vpop.f32.mrf.mxu0
        %v3337 = vadd.f32 %v3224, %v3336
        %3338 = vmatmul.f32.gmra.mxu0 %v3063
        %v3339 = vpop.f32.mrf.mxu0
        %v3340 = vadd.f32 %v3227, %v3339
        %3341 = vmatmul.f32.gmra.mxu0 %v3065
        %v3342 = vpop.f32.mrf.mxu0
        %v3343 = vadd.f32 %v3230, %v3342
        %3344 = vmatmul.f32.gmra.mxu0 %v3067
        %v3345 = vpop.f32.mrf.mxu0
        %v3346 = vadd.f32 %v3233, %v3345
        %3347 = vmatmul.f32.gmra.mxu0 %v3069
        %v3348 = vpop.f32.mrf.mxu0
        %v3349 = vadd.f32 %v3236, %v3348
        %3350 = vmatmul.f32.gmra.mxu0 %v3071
        %v3351 = vpop.f32.mrf.mxu0
        %v3352 = vadd.f32 %v3239, %v3351
        %3353 = vmatmul.f32.gmra.mxu0 %v3073
        %v3354 = vpop.f32.mrf.mxu0
        %v3355 = vadd.f32 %v3242, %v3354
        %3356 = vmatmul.f32.gmra.mxu0 %v3075
        %v3357 = vpop.f32.mrf.mxu0
        %v3358 = vadd.f32 %v3245, %v3357
        %3359 = vmatmul.f32.gmra.mxu0 %v3077
        %v3360 = vpop.f32.mrf.mxu0
        %v3361 = vadd.f32 %v3248, %v3360
        %3362 = vmatmul.f32.gmra.mxu0 %v3079
        %v3363 = vpop.f32.mrf.mxu0
        %v3364 = vadd.f32 %v3251, %v3363
        %3365 = vmatmul.f32.gmra.mxu0 %v3081
        %v3366 = vpop.f32.mrf.mxu0
        %v3367 = vadd.f32 %v3254, %v3366
        %3368 = vmatmul.f32.gmra.mxu0 %v3083
        %v3369 = vpop.f32.mrf.mxu0
        %v3370 = vadd.f32 %v3257, %v3369
        %3371 = vmatmul.f32.gmra.mxu0 %v3085
        %v3372 = vpop.f32.mrf.mxu0
        %v3373 = vadd.f32 %v3260, %v3372
        %3374 = vmatmul.f32.gmra.mxu0 %v3087
        %v3375 = vpop.f32.mrf.mxu0
        %v3376 = vadd.f32 %v3263, %v3375
        %3377 = vmatmul.f32.gmra.mxu0 %v3089
        %v3378 = vpop.f32.mrf.mxu0
        %v3379 = vadd.f32 %v3266, %v3378
        %3380 = vmatmul.f32.gmra.mxu0 %v3091
        %v3381 = vpop.f32.mrf.mxu0
        %v3382 = vadd.f32 %v3269, %v3381
        %3383 = vmatmul.f32.gmra.mxu0 %v3093
        %v3384 = vpop.f32.mrf.mxu0
        %v3385 = vadd.f32 %v3272, %v3384
        %3386 = vmatmul.f32.gmra.mxu0 %v3095
        %v3387 = vpop.f32.mrf.mxu0
        %v3388 = vadd.f32 %v3275, %v3387
        %3389 = vmatmul.f32.gmra.mxu0 %v3097
        %v3390 = vpop.f32.mrf.mxu0
        %v3391 = vadd.f32 %v3278, %v3390
        %3392 = vmatmul.f32.gmra.mxu0 %v3099
        %v3393 = vpop.f32.mrf.mxu0
        %v3394 = vadd.f32 %v3281, %v3393
        %3395 = vmatmul.f32.gmra.mxu0 %v3101
        %v3396 = vpop.f32.mrf.mxu0
        %v3397 = vadd.f32 %v3284, %v3396
        %3398 = vmatmul.f32.gmra.mxu0 %v3103
        %v3399 = vpop.f32.mrf.mxu0
        %v3400 = vadd.f32 %v3287, %v3399
        %3401 = vdwg.mxu0
        %3402 = vmatpush.msra.mxu0 %v3136
        %3403 = vmatpush.msra.mxu0 %v3134
        %3404 = vmatpush.msra.mxu0 %v3132
        %3405 = vmatpush.msra.mxu0 %v3130
        %3406 = vmatpush.msra.mxu0 %v3128
        %3407 = vmatpush.msra.mxu0 %v3126
        %3408 = vmatpush.msra.mxu0 %v3124
        %3409 = vmatpush.msra.mxu0 %v3122
        %3410 = vmatpush.msra.mxu0 %v3120
        %3411 = vmatpush.msra.mxu0 %v3118
        %3412 = vmatpush.msra.mxu0 %v3116
        %3413 = vmatpush.msra.mxu0 %v3114
        %3414 = vmatpush.msra.mxu0 %v3112
        %3415 = vmatpush.msra.mxu0 %v3110
        %3416 = vmatpush.msra.mxu0 %v3108
        %3417 = vmatpush.msra.mxu0 %v3106
        %3418 = vmatmul.f32.gmra.mxu0 %v3040
        %v3419 = vpop.f32.mrf.mxu0
        %v3420 = vadd.f32 %v3173, %v3419
        %3421 = vmatmul.f32.gmra.mxu0 %v3042
        %v3422 = vpop.f32.mrf.mxu0
        %v3423 = vadd.f32 %v3173, %v3422
        %3424 = vmatmul.f32.gmra.mxu0 %v3044
        %v3425 = vpop.f32.mrf.mxu0
        %v3426 = vadd.f32 %v3173, %v3425
        %3427 = vmatmul.f32.gmra.mxu0 %v3046
        %v3428 = vpop.f32.mrf.mxu0
        %v3429 = vadd.f32 %v3173, %v3428
        %3430 = vmatmul.f32.gmra.mxu0 %v3048
        %v3431 = vpop.f32.mrf.mxu0
        %v3432 = vadd.f32 %v3173, %v3431
        %3433 = vmatmul.f32.gmra.mxu0 %v3050
        %v3434 = vpop.f32.mrf.mxu0
        %v3435 = vadd.f32 %v3173, %v3434
        %3436 = vmatmul.f32.gmra.mxu0 %v3052
        %v3437 = vpop.f32.mrf.mxu0
        %v3438 = vadd.f32 %v3173, %v3437
        %3439 = vmatmul.f32.gmra.mxu0 %v3054
        %v3440 = vpop.f32.mrf.mxu0
        %v3441 = vadd.f32 %v3173, %v3440
        %3442 = vmatmul.f32.gmra.mxu0 %v3056
        %v3443 = vpop.f32.mrf.mxu0
        %v3444 = vadd.f32 %v3173, %v3443
        %3445 = vmatmul.f32.gmra.mxu0 %v3058
        %v3446 = vpop.f32.mrf.mxu0
        %v3447 = vadd.f32 %v3173, %v3446
        %3448 = vmatmul.f32.gmra.mxu0 %v3060
        %v3449 = vpop.f32.mrf.mxu0
        %v3450 = vadd.f32 %v3173, %v3449
        %3451 = vmatmul.f32.gmra.mxu0 %v3062
        %v3452 = vpop.f32.mrf.mxu0
        %v3453 = vadd.f32 %v3173, %v3452
        %3454 = vmatmul.f32.gmra.mxu0 %v3064
        %v3455 = vpop.f32.mrf.mxu0
        %v3456 = vadd.f32 %v3173, %v3455
        %3457 = vmatmul.f32.gmra.mxu0 %v3066
        %v3458 = vpop.f32.mrf.mxu0
        %v3459 = vadd.f32 %v3173, %v3458
        %3460 = vmatmul.f32.gmra.mxu0 %v3068
        %v3461 = vpop.f32.mrf.mxu0
        %v3462 = vadd.f32 %v3173, %v3461
        %3463 = vmatmul.f32.gmra.mxu0 %v3070
        %v3464 = vpop.f32.mrf.mxu0
        %v3465 = vadd.f32 %v3173, %v3464
        %3466 = vmatmul.f32.gmra.mxu0 %v3072
        %v3467 = vpop.f32.mrf.mxu0
        %v3468 = vadd.f32 %v3173, %v3467
        %3469 = vmatmul.f32.gmra.mxu0 %v3074
        %v3470 = vpop.f32.mrf.mxu0
        %v3471 = vadd.f32 %v3173, %v3470
        %3472 = vmatmul.f32.gmra.mxu0 %v3076
        %v3473 = vpop.f32.mrf.mxu0
        %v3474 = vadd.f32 %v3173, %v3473
        %3475 = vmatmul.f32.gmra.mxu0 %v3078
        %v3476 = vpop.f32.mrf.mxu0
        %v3477 = vadd.f32 %v3173, %v3476
        %3478 = vmatmul.f32.gmra.mxu0 %v3080
        %v3479 = vpop.f32.mrf.mxu0
        %v3480 = vadd.f32 %v3173, %v3479
        %3481 = vmatmul.f32.gmra.mxu0 %v3082
        %v3482 = vpop.f32.mrf.mxu0
        %v3483 = vadd.f32 %v3173, %v3482
        %3484 = vmatmul.f32.gmra.mxu0 %v3084
        %v3485 = vpop.f32.mrf.mxu0
        %v3486 = vadd.f32 %v3173, %v3485
        %3487 = vmatmul.f32.gmra.mxu0 %v3086
        %v3488 = vpop.f32.mrf.mxu0
        %v3489 = vadd.f32 %v3173, %v3488
        %3490 = vmatmul.f32.gmra.mxu0 %v3088
        %v3491 = vpop.f32.mrf.mxu0
        %v3492 = vadd.f32 %v3173, %v3491
        %3493 = vmatmul.f32.gmra.mxu0 %v3090
        %v3494 = vpop.f32.mrf.mxu0
        %v3495 = vadd.f32 %v3173, %v3494
        %3496 = vmatmul.f32.gmra.mxu0 %v3092
        %v3497 = vpop.f32.mrf.mxu0
        %v3498 = vadd.f32 %v3173, %v3497
        %3499 = vmatmul.f32.gmra.mxu0 %v3094
        %v3500 = vpop.f32.mrf.mxu0
        %v3501 = vadd.f32 %v3173, %v3500
        %3502 = vmatmul.f32.gmra.mxu0 %v3096
        %v3503 = vpop.f32.mrf.mxu0
        %v3504 = vadd.f32 %v3173, %v3503
        %3505 = vmatmul.f32.gmra.mxu0 %v3098
        %v3506 = vpop.f32.mrf.mxu0
        %v3507 = vadd.f32 %v3173, %v3506
        %3508 = vmatmul.f32.gmra.mxu0 %v3100
        %v3509 = vpop.f32.mrf.mxu0
        %v3510 = vadd.f32 %v3173, %v3509
        %3511 = vmatmul.f32.gmra.mxu0 %v3102
        %v3512 = vpop.f32.mrf.mxu0
        %v3513 = vadd.f32 %v3173, %v3512
        %3514 = vdwg.mxu0
        %3515 = vmatpush.msra.mxu0 %v3168
        %3516 = vmatpush.msra.mxu0 %v3166
        %3517 = vmatpush.msra.mxu0 %v3164
        %3518 = vmatpush.msra.mxu0 %v3162
        %3519 = vmatpush.msra.mxu0 %v3160
        %3520 = vmatpush.msra.mxu0 %v3158
        %3521 = vmatpush.msra.mxu0 %v3156
        %3522 = vmatpush.msra.mxu0 %v3154
        %3523 = vmatpush.msra.mxu0 %v3152
        %3524 = vmatpush.msra.mxu0 %v3150
        %3525 = vmatpush.msra.mxu0 %v3148
        %3526 = vmatpush.msra.mxu0 %v3146
        %3527 = vmatpush.msra.mxu0 %v3144
        %3528 = vmatpush.msra.mxu0 %v3142
        %3529 = vmatpush.msra.mxu0 %v3140
        %3530 = vmatpush.msra.mxu0 %v3138
        %3531 = vmatmul.f32.gmra.mxu0 %v3041
        %v3532 = vpop.f32.mrf.mxu0
        %v3533 = vadd.f32 %v3420, %v3532
        %3534 = vmatmul.f32.gmra.mxu0 %v3043
        %v3535 = vpop.f32.mrf.mxu0
        %v3536 = vadd.f32 %v3423, %v3535
        %3537 = vmatmul.f32.gmra.mxu0 %v3045
        %v3538 = vpop.f32.mrf.mxu0
        %v3539 = vadd.f32 %v3426, %v3538
        %3540 = vmatmul.f32.gmra.mxu0 %v3047
        %v3541 = vpop.f32.mrf.mxu0
        %v3542 = vadd.f32 %v3429, %v3541
        %3543 = vmatmul.f32.gmra.mxu0 %v3049
        %v3544 = vpop.f32.mrf.mxu0
        %v3545 = vadd.f32 %v3432, %v3544
        %3546 = vmatmul.f32.gmra.mxu0 %v3051
        %v3547 = vpop.f32.mrf.mxu0
        %v3548 = vadd.f32 %v3435, %v3547
        %3549 = vmatmul.f32.gmra.mxu0 %v3053
        %v3550 = vpop.f32.mrf.mxu0
        %v3551 = vadd.f32 %v3438, %v3550
        %3552 = vmatmul.f32.gmra.mxu0 %v3055
        %v3553 = vpop.f32.mrf.mxu0
        %v3554 = vadd.f32 %v3441, %v3553
        %3555 = vmatmul.f32.gmra.mxu0 %v3057
        %v3556 = vpop.f32.mrf.mxu0
        %v3557 = vadd.f32 %v3444, %v3556
        %3558 = vmatmul.f32.gmra.mxu0 %v3059
        %v3559 = vpop.f32.mrf.mxu0
        %v3560 = vadd.f32 %v3447, %v3559
        %3561 = vmatmul.f32.gmra.mxu0 %v3061
        %v3562 = vpop.f32.mrf.mxu0
        %v3563 = vadd.f32 %v3450, %v3562
        %3564 = vmatmul.f32.gmra.mxu0 %v3063
        %v3565 = vpop.f32.mrf.mxu0
        %v3566 = vadd.f32 %v3453, %v3565
        %3567 = vmatmul.f32.gmra.mxu0 %v3065
        %v3568 = vpop.f32.mrf.mxu0
        %v3569 = vadd.f32 %v3456, %v3568
        %3570 = vmatmul.f32.gmra.mxu0 %v3067
        %v3571 = vpop.f32.mrf.mxu0
        %v3572 = vadd.f32 %v3459, %v3571
        %3573 = vmatmul.f32.gmra.mxu0 %v3069
        %v3574 = vpop.f32.mrf.mxu0
        %v3575 = vadd.f32 %v3462, %v3574
        %3576 = vmatmul.f32.gmra.mxu0 %v3071
        %v3577 = vpop.f32.mrf.mxu0
        %v3578 = vadd.f32 %v3465, %v3577
        %3579 = vmatmul.f32.gmra.mxu0 %v3073
        %v3580 = vpop.f32.mrf.mxu0
        %v3581 = vadd.f32 %v3468, %v3580
        %3582 = vmatmul.f32.gmra.mxu0 %v3075
        %v3583 = vpop.f32.mrf.mxu0
        %v3584 = vadd.f32 %v3471, %v3583
        %3585 = vmatmul.f32.gmra.mxu0 %v3077
        %v3586 = vpop.f32.mrf.mxu0
        %v3587 = vadd.f32 %v3474, %v3586
        %3588 = vmatmul.f32.gmra.mxu0 %v3079
        %v3589 = vpop.f32.mrf.mxu0
        %v3590 = vadd.f32 %v3477, %v3589
        %3591 = vmatmul.f32.gmra.mxu0 %v3081
        %v3592 = vpop.f32.mrf.mxu0
        %v3593 = vadd.f32 %v3480, %v3592
        %3594 = vmatmul.f32.gmra.mxu0 %v3083
        %v3595 = vpop.f32.mrf.mxu0
        %v3596 = vadd.f32 %v3483, %v3595
        %3597 = vmatmul.f32.gmra.mxu0 %v3085
        %v3598 = vpop.f32.mrf.mxu0
        %v3599 = vadd.f32 %v3486, %v3598
        %3600 = vmatmul.f32.gmra.mxu0 %v3087
        %v3601 = vpop.f32.mrf.mxu0
        %v3602 = vadd.f32 %v3489, %v3601
        %3603 = vmatmul.f32.gmra.mxu0 %v3089
        %v3604 = vpop.f32.mrf.mxu0
        %v3605 = vadd.f32 %v3492, %v3604
        %3606 = vmatmul.f32.gmra.mxu0 %v3091
        %v3607 = vpop.f32.mrf.mxu0
        %v3608 = vadd.f32 %v3495, %v3607
        %3609 = vmatmul.f32.gmra.mxu0 %v3093
        %v3610 = vpop.f32.mrf.mxu0
        %v3611 = vadd.f32 %v3498, %v3610
        %3612 = vmatmul.f32.gmra.mxu0 %v3095
        %v3613 = vpop.f32.mrf.mxu0
        %v3614 = vadd.f32 %v3501, %v3613
        %3615 = vmatmul.f32.gmra.mxu0 %v3097
        %v3616 = vpop.f32.mrf.mxu0
        %v3617 = vadd.f32 %v3504, %v3616
        %3618 = vmatmul.f32.gmra.mxu0 %v3099
        %v3619 = vpop.f32.mrf.mxu0
        %v3620 = vadd.f32 %v3507, %v3619
        %3621 = vmatmul.f32.gmra.mxu0 %v3101
        %v3622 = vpop.f32.mrf.mxu0
        %v3623 = vadd.f32 %v3510, %v3622
        %3624 = vmatmul.f32.gmra.mxu0 %v3103
        %v3625 = vpop.f32.mrf.mxu0
        %v3626 = vadd.f32 %v3513, %v3625
        %3627 = vdwg.mxu0
        %v3628 = vmax.f32 %v3307, 0.0
        %v3629 = vmax.f32 %v3533, 0.0
        %v3630 = vmax.f32 %v3310, 0.0
        %v3631 = vmax.f32 %v3536, 0.0
        %v3632 = vmax.f32 %v3313, 0.0
        %v3633 = vmax.f32 %v3539, 0.0
        %v3634 = vmax.f32 %v3316, 0.0
        %v3635 = vmax.f32 %v3542, 0.0
        %v3636 = vmax.f32 %v3319, 0.0
        %v3637 = vmax.f32 %v3545, 0.0
        %v3638 = vmax.f32 %v3322, 0.0
        %v3639 = vmax.f32 %v3548, 0.0
        %v3640 = vmax.f32 %v3325, 0.0
        %v3641 = vmax.f32 %v3551, 0.0
        %v3642 = vmax.f32 %v3328, 0.0
        %v3643 = vmax.f32 %v3554, 0.0
        %v3644 = vmax.f32 %v3331, 0.0
        %v3645 = vmax.f32 %v3557, 0.0
        %v3646 = vmax.f32 %v3334, 0.0
        %v3647 = vmax.f32 %v3560, 0.0
        %v3648 = vmax.f32 %v3337, 0.0
        %v3649 = vmax.f32 %v3563, 0.0
        %v3650 = vmax.f32 %v3340, 0.0
        %v3651 = vmax.f32 %v3566, 0.0
        %v3652 = vmax.f32 %v3343, 0.0
        %v3653 = vmax.f32 %v3569, 0.0
        %v3654 = vmax.f32 %v3346, 0.0
        %v3655 = vmax.f32 %v3572, 0.0
        %v3656 = vmax.f32 %v3349, 0.0
        %v3657 = vmax.f32 %v3575, 0.0
        %v3658 = vmax.f32 %v3352, 0.0
        %v3659 = vmax.f32 %v3578, 0.0
        %v3660 = vmax.f32 %v3355, 0.0
        %v3661 = vmax.f32 %v3581, 0.0
        %v3662 = vmax.f32 %v3358, 0.0
        %v3663 = vmax.f32 %v3584, 0.0
        %v3664 = vmax.f32 %v3361, 0.0
        %v3665 = vmax.f32 %v3587, 0.0
        %v3666 = vmax.f32 %v3364, 0.0
        %v3667 = vmax.f32 %v3590, 0.0
        %v3668 = vmax.f32 %v3367, 0.0
        %v3669 = vmax.f32 %v3593, 0.0
        %v3670 = vmax.f32 %v3370, 0.0
        %v3671 = vmax.f32 %v3596, 0.0
        %v3672 = vmax.f32 %v3373, 0.0
        %v3673 = vmax.f32 %v3599, 0.0
        %v3674 = vmax.f32 %v3376, 0.0
        %v3675 = vmax.f32 %v3602, 0.0
        %v3676 = vmax.f32 %v3379, 0.0
        %v3677 = vmax.f32 %v3605, 0.0
        %v3678 = vmax.f32 %v3382, 0.0
        %v3679 = vmax.f32 %v3608, 0.0
        %v3680 = vmax.f32 %v3385, 0.0
        %v3681 = vmax.f32 %v3611, 0.0
        %v3682 = vmax.f32 %v3388, 0.0
        %v3683 = vmax.f32 %v3614, 0.0
        %v3684 = vmax.f32 %v3391, 0.0
        %v3685 = vmax.f32 %v3617, 0.0
        %v3686 = vmax.f32 %v3394, 0.0
        %v3687 = vmax.f32 %v3620, 0.0
        %v3688 = vmax.f32 %v3397, 0.0
        %v3689 = vmax.f32 %v3623, 0.0
        %v3690 = vmax.f32 %v3400, 0.0
        %v3691 = vmax.f32 %v3626, 0.0
        %s3692 = scalar_lea.vmem [#allocation5], 2560
        %v3693 = vld [vmem:[%s3692] sm:$0xff]
        %v3694 = vld [vmem:[%s3692 + $0x8] sm:$0xff]
        %v3695 = vld [vmem:[%s3692 + $0x10] sm:$0xff]
        %v3696 = vld [vmem:[%s3692 + $0x18] sm:$0xff]
        %v3697 = vld [vmem:[%s3692 + $0x20] sm:$0xff]
        %v3698 = vld [vmem:[%s3692 + $0x28] sm:$0xff]
        %v3699 = vld [vmem:[%s3692 + $0x30] sm:$0xff]
        %v3700 = vld [vmem:[%s3692 + $0x38] sm:$0xff]
        %v3701 = vld [vmem:[%s3692 + $0x40] sm:$0xff]
        %v3702 = vld [vmem:[%s3692 + $0x48] sm:$0xff]
        %v3703 = vld [vmem:[%s3692 + $0x50] sm:$0xff]
        %v3704 = vld [vmem:[%s3692 + $0x58] sm:$0xff]
        %v3705 = vld [vmem:[%s3692 + $0x60] sm:$0xff]
        %v3706 = vld [vmem:[%s3692 + $0x68] sm:$0xff]
        %v3707 = vld [vmem:[%s3692 + $0x70] sm:$0xff]
        %v3708 = vld [vmem:[%s3692 + $0x78] sm:$0xff]
        %v3709 = vld [vmem:[%s3692 + $0x80] sm:$0xff]
        %v3710 = vld [vmem:[%s3692 + $0x88] sm:$0xff]
        %v3711 = vld [vmem:[%s3692 + $0x90] sm:$0xff]
        %v3712 = vld [vmem:[%s3692 + $0x98] sm:$0xff]
        %v3713 = vld [vmem:[%s3692 + $0xa0] sm:$0xff]
        %v3714 = vld [vmem:[%s3692 + $0xa8] sm:$0xff]
        %v3715 = vld [vmem:[%s3692 + $0xb0] sm:$0xff]
        %v3716 = vld [vmem:[%s3692 + $0xb8] sm:$0xff]
        %v3717 = vld [vmem:[%s3692 + $0xc0] sm:$0xff]
        %v3718 = vld [vmem:[%s3692 + $0xc8] sm:$0xff]
        %v3719 = vld [vmem:[%s3692 + $0xd0] sm:$0xff]
        %v3720 = vld [vmem:[%s3692 + $0xd8] sm:$0xff]
        %v3721 = vld [vmem:[%s3692 + $0xe0] sm:$0xff]
        %v3722 = vld [vmem:[%s3692 + $0xe8] sm:$0xff]
        %v3723 = vld [vmem:[%s3692 + $0xf0] sm:$0xff]
        %v3724 = vld [vmem:[%s3692 + $0xf8] sm:$0xff]
        %v3725 = vld [vmem:[%s3692 + $0x100] sm:$0xff]
        %v3726 = vld [vmem:[%s3692 + $0x108] sm:$0xff]
        %v3727 = vld [vmem:[%s3692 + $0x110] sm:$0xff]
        %v3728 = vld [vmem:[%s3692 + $0x118] sm:$0xff]
        %v3729 = vld [vmem:[%s3692 + $0x120] sm:$0xff]
        %v3730 = vld [vmem:[%s3692 + $0x128] sm:$0xff]
        %v3731 = vld [vmem:[%s3692 + $0x130] sm:$0xff]
        %v3732 = vld [vmem:[%s3692 + $0x138] sm:$0xff]
        %v3733 = vld [vmem:[%s3692 + $0x140] sm:$0xff]
        %v3734 = vld [vmem:[%s3692 + $0x148] sm:$0xff]
        %v3735 = vld [vmem:[%s3692 + $0x150] sm:$0xff]
        %v3736 = vld [vmem:[%s3692 + $0x158] sm:$0xff]
        %v3737 = vld [vmem:[%s3692 + $0x160] sm:$0xff]
        %v3738 = vld [vmem:[%s3692 + $0x168] sm:$0xff]
        %v3739 = vld [vmem:[%s3692 + $0x170] sm:$0xff]
        %v3740 = vld [vmem:[%s3692 + $0x178] sm:$0xff]
        %v3741 = vld [vmem:[%s3692 + $0x180] sm:$0xff]
        %v3742 = vld [vmem:[%s3692 + $0x188] sm:$0xff]
        %v3743 = vld [vmem:[%s3692 + $0x190] sm:$0xff]
        %v3744 = vld [vmem:[%s3692 + $0x198] sm:$0xff]
        %v3745 = vld [vmem:[%s3692 + $0x1a0] sm:$0xff]
        %v3746 = vld [vmem:[%s3692 + $0x1a8] sm:$0xff]
        %v3747 = vld [vmem:[%s3692 + $0x1b0] sm:$0xff]
        %v3748 = vld [vmem:[%s3692 + $0x1b8] sm:$0xff]
        %v3749 = vld [vmem:[%s3692 + $0x1c0] sm:$0xff]
        %v3750 = vld [vmem:[%s3692 + $0x1c8] sm:$0xff]
        %v3751 = vld [vmem:[%s3692 + $0x1d0] sm:$0xff]
        %v3752 = vld [vmem:[%s3692 + $0x1d8] sm:$0xff]
        %v3753 = vld [vmem:[%s3692 + $0x1e0] sm:$0xff]
        %v3754 = vld [vmem:[%s3692 + $0x1e8] sm:$0xff]
        %v3755 = vld [vmem:[%s3692 + $0x1f0] sm:$0xff]
        %v3756 = vld [vmem:[%s3692 + $0x1f8] sm:$0xff]
        %s3757 = scalar_lea.vmem %s4, 10
        %v3758 = vld [vmem:[%s3757] sm:$0x3]
        %v3760 = vperm.slane %v3758, 0
        %v3761 = vperm.slane %v3758, 1
        %3764 = vmatpush.msra.mxu0 %v3723
        %3765 = vmatpush.msra.mxu0 %v3721
        %3766 = vmatpush.msra.mxu0 %v3719
        %3767 = vmatpush.msra.mxu0 %v3717
        %3768 = vmatpush.msra.mxu0 %v3715
        %3769 = vmatpush.msra.mxu0 %v3713
        %3770 = vmatpush.msra.mxu0 %v3711
        %3771 = vmatpush.msra.mxu0 %v3709
        %3772 = vmatpush.msra.mxu0 %v3707
        %3773 = vmatpush.msra.mxu0 %v3705
        %3774 = vmatpush.msra.mxu0 %v3703
        %3775 = vmatpush.msra.mxu0 %v3701
        %3776 = vmatpush.msra.mxu0 %v3699
        %3777 = vmatpush.msra.mxu0 %v3697
        %3778 = vmatpush.msra.mxu0 %v3695
        %3779 = vmatpush.msra.mxu0 %v3693
        %3780 = vmatmul.f32.gmra.mxu0 %v3628
        %v3781 = vpop.f32.mrf.mxu0
        %v3782 = vadd.f32 %v3760, %v3781
        %3783 = vmatmul.f32.gmra.mxu0 %v3630
        %v3784 = vpop.f32.mrf.mxu0
        %v3785 = vadd.f32 %v3760, %v3784
        %3786 = vmatmul.f32.gmra.mxu0 %v3632
        %v3787 = vpop.f32.mrf.mxu0
        %v3788 = vadd.f32 %v3760, %v3787
        %3789 = vmatmul.f32.gmra.mxu0 %v3634
        %v3790 = vpop.f32.mrf.mxu0
        %v3791 = vadd.f32 %v3760, %v3790
        %3792 = vmatmul.f32.gmra.mxu0 %v3636
        %v3793 = vpop.f32.mrf.mxu0
        %v3794 = vadd.f32 %v3760, %v3793
        %3795 = vmatmul.f32.gmra.mxu0 %v3638
        %v3796 = vpop.f32.mrf.mxu0
        %v3797 = vadd.f32 %v3760, %v3796
        %3798 = vmatmul.f32.gmra.mxu0 %v3640
        %v3799 = vpop.f32.mrf.mxu0
        %v3800 = vadd.f32 %v3760, %v3799
        %3801 = vmatmul.f32.gmra.mxu0 %v3642
        %v3802 = vpop.f32.mrf.mxu0
        %v3803 = vadd.f32 %v3760, %v3802
        %3804 = vmatmul.f32.gmra.mxu0 %v3644
        %v3805 = vpop.f32.mrf.mxu0
        %v3806 = vadd.f32 %v3760, %v3805
        %3807 = vmatmul.f32.gmra.mxu0 %v3646
        %v3808 = vpop.f32.mrf.mxu0
        %v3809 = vadd.f32 %v3760, %v3808
        %3810 = vmatmul.f32.gmra.mxu0 %v3648
        %v3811 = vpop.f32.mrf.mxu0
        %v3812 = vadd.f32 %v3760, %v3811
        %3813 = vmatmul.f32.gmra.mxu0 %v3650
        %v3814 = vpop.f32.mrf.mxu0
        %v3815 = vadd.f32 %v3760, %v3814
        %3816 = vmatmul.f32.gmra.mxu0 %v3652
        %v3817 = vpop.f32.mrf.mxu0
        %v3818 = vadd.f32 %v3760, %v3817
        %3819 = vmatmul.f32.gmra.mxu0 %v3654
        %v3820 = vpop.f32.mrf.mxu0
        %v3821 = vadd.f32 %v3760, %v3820
        %3822 = vmatmul.f32.gmra.mxu0 %v3656
        %v3823 = vpop.f32.mrf.mxu0
        %v3824 = vadd.f32 %v3760, %v3823
        %3825 = vmatmul.f32.gmra.mxu0 %v3658
        %v3826 = vpop.f32.mrf.mxu0
        %v3827 = vadd.f32 %v3760, %v3826
        %3828 = vmatmul.f32.gmra.mxu0 %v3660
        %v3829 = vpop.f32.mrf.mxu0
        %v3830 = vadd.f32 %v3760, %v3829
        %3831 = vmatmul.f32.gmra.mxu0 %v3662
        %v3832 = vpop.f32.mrf.mxu0
        %v3833 = vadd.f32 %v3760, %v3832
        %3834 = vmatmul.f32.gmra.mxu0 %v3664
        %v3835 = vpop.f32.mrf.mxu0
        %v3836 = vadd.f32 %v3760, %v3835
        %3837 = vmatmul.f32.gmra.mxu0 %v3666
        %v3838 = vpop.f32.mrf.mxu0
        %v3839 = vadd.f32 %v3760, %v3838
        %3840 = vmatmul.f32.gmra.mxu0 %v3668
        %v3841 = vpop.f32.mrf.mxu0
        %v3842 = vadd.f32 %v3760, %v3841
        %3843 = vmatmul.f32.gmra.mxu0 %v3670
        %v3844 = vpop.f32.mrf.mxu0
        %v3845 = vadd.f32 %v3760, %v3844
        %3846 = vmatmul.f32.gmra.mxu0 %v3672
        %v3847 = vpop.f32.mrf.mxu0
        %v3848 = vadd.f32 %v3760, %v3847
        %3849 = vmatmul.f32.gmra.mxu0 %v3674
        %v3850 = vpop.f32.mrf.mxu0
        %v3851 = vadd.f32 %v3760, %v3850
        %3852 = vmatmul.f32.gmra.mxu0 %v3676
        %v3853 = vpop.f32.mrf.mxu0
        %v3854 = vadd.f32 %v3760, %v3853
        %3855 = vmatmul.f32.gmra.mxu0 %v3678
        %v3856 = vpop.f32.mrf.mxu0
        %v3857 = vadd.f32 %v3760, %v3856
        %3858 = vmatmul.f32.gmra.mxu0 %v3680
        %v3859 = vpop.f32.mrf.mxu0
        %v3860 = vadd.f32 %v3760, %v3859
        %3861 = vmatmul.f32.gmra.mxu0 %v3682
        %v3862 = vpop.f32.mrf.mxu0
        %v3863 = vadd.f32 %v3760, %v3862
        %3864 = vmatmul.f32.gmra.mxu0 %v3684
        %v3865 = vpop.f32.mrf.mxu0
        %v3866 = vadd.f32 %v3760, %v3865
        %3867 = vmatmul.f32.gmra.mxu0 %v3686
        %v3868 = vpop.f32.mrf.mxu0
        %v3869 = vadd.f32 %v3760, %v3868
        %3870 = vmatmul.f32.gmra.mxu0 %v3688
        %v3871 = vpop.f32.mrf.mxu0
        %v3872 = vadd.f32 %v3760, %v3871
        %3873 = vmatmul.f32.gmra.mxu0 %v3690
        %v3874 = vpop.f32.mrf.mxu0
        %v3875 = vadd.f32 %v3760, %v3874
        %3876 = vdwg.mxu0
        %3877 = vmatpush.msra.mxu0 %v3755
        %3878 = vmatpush.msra.mxu0 %v3753
        %3879 = vmatpush.msra.mxu0 %v3751
        %3880 = vmatpush.msra.mxu0 %v3749
        %3881 = vmatpush.msra.mxu0 %v3747
        %3882 = vmatpush.msra.mxu0 %v3745
        %3883 = vmatpush.msra.mxu0 %v3743
        %3884 = vmatpush.msra.mxu0 %v3741
        %3885 = vmatpush.msra.mxu0 %v3739
        %3886 = vmatpush.msra.mxu0 %v3737
        %3887 = vmatpush.msra.mxu0 %v3735
        %3888 = vmatpush.msra.mxu0 %v3733
        %3889 = vmatpush.msra.mxu0 %v3731
        %3890 = vmatpush.msra.mxu0 %v3729
        %3891 = vmatpush.msra.mxu0 %v3727
        %3892 = vmatpush.msra.mxu0 %v3725
        %3893 = vmatmul.f32.gmra.mxu0 %v3629
        %v3894 = vpop.f32.mrf.mxu0
        %v3895 = vadd.f32 %v3782, %v3894
        %3896 = vmatmul.f32.gmra.mxu0 %v3631
        %v3897 = vpop.f32.mrf.mxu0
        %v3898 = vadd.f32 %v3785, %v3897
        %3899 = vmatmul.f32.gmra.mxu0 %v3633
        %v3900 = vpop.f32.mrf.mxu0
        %v3901 = vadd.f32 %v3788, %v3900
        %3902 = vmatmul.f32.gmra.mxu0 %v3635
        %v3903 = vpop.f32.mrf.mxu0
        %v3904 = vadd.f32 %v3791, %v3903
        %3905 = vmatmul.f32.gmra.mxu0 %v3637
        %v3906 = vpop.f32.mrf.mxu0
        %v3907 = vadd.f32 %v3794, %v3906
        %3908 = vmatmul.f32.gmra.mxu0 %v3639
        %v3909 = vpop.f32.mrf.mxu0
        %v3910 = vadd.f32 %v3797, %v3909
        %3911 = vmatmul.f32.gmra.mxu0 %v3641
        %v3912 = vpop.f32.mrf.mxu0
        %v3913 = vadd.f32 %v3800, %v3912
        %3914 = vmatmul.f32.gmra.mxu0 %v3643
        %v3915 = vpop.f32.mrf.mxu0
        %v3916 = vadd.f32 %v3803, %v3915
        %3917 = vmatmul.f32.gmra.mxu0 %v3645
        %v3918 = vpop.f32.mrf.mxu0
        %v3919 = vadd.f32 %v3806, %v3918
        %3920 = vmatmul.f32.gmra.mxu0 %v3647
        %v3921 = vpop.f32.mrf.mxu0
        %v3922 = vadd.f32 %v3809, %v3921
        %3923 = vmatmul.f32.gmra.mxu0 %v3649
        %v3924 = vpop.f32.mrf.mxu0
        %v3925 = vadd.f32 %v3812, %v3924
        %3926 = vmatmul.f32.gmra.mxu0 %v3651
        %v3927 = vpop.f32.mrf.mxu0
        %v3928 = vadd.f32 %v3815, %v3927
        %3929 = vmatmul.f32.gmra.mxu0 %v3653
        %v3930 = vpop.f32.mrf.mxu0
        %v3931 = vadd.f32 %v3818, %v3930
        %3932 = vmatmul.f32.gmra.mxu0 %v3655
        %v3933 = vpop.f32.mrf.mxu0
        %v3934 = vadd.f32 %v3821, %v3933
        %3935 = vmatmul.f32.gmra.mxu0 %v3657
        %v3936 = vpop.f32.mrf.mxu0
        %v3937 = vadd.f32 %v3824, %v3936
        %3938 = vmatmul.f32.gmra.mxu0 %v3659
        %v3939 = vpop.f32.mrf.mxu0
        %v3940 = vadd.f32 %v3827, %v3939
        %3941 = vmatmul.f32.gmra.mxu0 %v3661
        %v3942 = vpop.f32.mrf.mxu0
        %v3943 = vadd.f32 %v3830, %v3942
        %3944 = vmatmul.f32.gmra.mxu0 %v3663
        %v3945 = vpop.f32.mrf.mxu0
        %v3946 = vadd.f32 %v3833, %v3945
        %3947 = vmatmul.f32.gmra.mxu0 %v3665
        %v3948 = vpop.f32.mrf.mxu0
        %v3949 = vadd.f32 %v3836, %v3948
        %3950 = vmatmul.f32.gmra.mxu0 %v3667
        %v3951 = vpop.f32.mrf.mxu0
        %v3952 = vadd.f32 %v3839, %v3951
        %3953 = vmatmul.f32.gmra.mxu0 %v3669
        %v3954 = vpop.f32.mrf.mxu0
        %v3955 = vadd.f32 %v3842, %v3954
        %3956 = vmatmul.f32.gmra.mxu0 %v3671
        %v3957 = vpop.f32.mrf.mxu0
        %v3958 = vadd.f32 %v3845, %v3957
        %3959 = vmatmul.f32.gmra.mxu0 %v3673
        %v3960 = vpop.f32.mrf.mxu0
        %v3961 = vadd.f32 %v3848, %v3960
        %3962 = vmatmul.f32.gmra.mxu0 %v3675
        %v3963 = vpop.f32.mrf.mxu0
        %v3964 = vadd.f32 %v3851, %v3963
        %3965 = vmatmul.f32.gmra.mxu0 %v3677
        %v3966 = vpop.f32.mrf.mxu0
        %v3967 = vadd.f32 %v3854, %v3966
        %3968 = vmatmul.f32.gmra.mxu0 %v3679
        %v3969 = vpop.f32.mrf.mxu0
        %v3970 = vadd.f32 %v3857, %v3969
        %3971 = vmatmul.f32.gmra.mxu0 %v3681
        %v3972 = vpop.f32.mrf.mxu0
        %v3973 = vadd.f32 %v3860, %v3972
        %3974 = vmatmul.f32.gmra.mxu0 %v3683
        %v3975 = vpop.f32.mrf.mxu0
        %v3976 = vadd.f32 %v3863, %v3975
        %3977 = vmatmul.f32.gmra.mxu0 %v3685
        %v3978 = vpop.f32.mrf.mxu0
        %v3979 = vadd.f32 %v3866, %v3978
        %3980 = vmatmul.f32.gmra.mxu0 %v3687
        %v3981 = vpop.f32.mrf.mxu0
        %v3982 = vadd.f32 %v3869, %v3981
        %3983 = vmatmul.f32.gmra.mxu0 %v3689
        %v3984 = vpop.f32.mrf.mxu0
        %v3985 = vadd.f32 %v3872, %v3984
        %3986 = vmatmul.f32.gmra.mxu0 %v3691
        %v3987 = vpop.f32.mrf.mxu0
        %v3988 = vadd.f32 %v3875, %v3987
        %3989 = vdwg.mxu0
        %3990 = vmatpush.msra.mxu0 %v3724
        %3991 = vmatpush.msra.mxu0 %v3722
        %3992 = vmatpush.msra.mxu0 %v3720
        %3993 = vmatpush.msra.mxu0 %v3718
        %3994 = vmatpush.msra.mxu0 %v3716
        %3995 = vmatpush.msra.mxu0 %v3714
        %3996 = vmatpush.msra.mxu0 %v3712
        %3997 = vmatpush.msra.mxu0 %v3710
        %3998 = vmatpush.msra.mxu0 %v3708
        %3999 = vmatpush.msra.mxu0 %v3706
        %4000 = vmatpush.msra.mxu0 %v3704
        %4001 = vmatpush.msra.mxu0 %v3702
        %4002 = vmatpush.msra.mxu0 %v3700
        %4003 = vmatpush.msra.mxu0 %v3698
        %4004 = vmatpush.msra.mxu0 %v3696
        %4005 = vmatpush.msra.mxu0 %v3694
        %4006 = vmatmul.f32.gmra.mxu0 %v3628
        %v4007 = vpop.f32.mrf.mxu0
        %v4008 = vadd.f32 %v3761, %v4007
        %4009 = vmatmul.f32.gmra.mxu0 %v3630
        %v4010 = vpop.f32.mrf.mxu0
        %v4011 = vadd.f32 %v3761, %v4010
        %4012 = vmatmul.f32.gmra.mxu0 %v3632
        %v4013 = vpop.f32.mrf.mxu0
        %v4014 = vadd.f32 %v3761, %v4013
        %4015 = vmatmul.f32.gmra.mxu0 %v3634
        %v4016 = vpop.f32.mrf.mxu0
        %v4017 = vadd.f32 %v3761, %v4016
        %4018 = vmatmul.f32.gmra.mxu0 %v3636
        %v4019 = vpop.f32.mrf.mxu0
        %v4020 = vadd.f32 %v3761, %v4019
        %4021 = vmatmul.f32.gmra.mxu0 %v3638
        %v4022 = vpop.f32.mrf.mxu0
        %v4023 = vadd.f32 %v3761, %v4022
        %4024 = vmatmul.f32.gmra.mxu0 %v3640
        %v4025 = vpop.f32.mrf.mxu0
        %v4026 = vadd.f32 %v3761, %v4025
        %4027 = vmatmul.f32.gmra.mxu0 %v3642
        %v4028 = vpop.f32.mrf.mxu0
        %v4029 = vadd.f32 %v3761, %v4028
        %4030 = vmatmul.f32.gmra.mxu0 %v3644
        %v4031 = vpop.f32.mrf.mxu0
        %v4032 = vadd.f32 %v3761, %v4031
        %4033 = vmatmul.f32.gmra.mxu0 %v3646
        %v4034 = vpop.f32.mrf.mxu0
        %v4035 = vadd.f32 %v3761, %v4034
        %4036 = vmatmul.f32.gmra.mxu0 %v3648
        %v4037 = vpop.f32.mrf.mxu0
        %v4038 = vadd.f32 %v3761, %v4037
        %4039 = vmatmul.f32.gmra.mxu0 %v3650
        %v4040 = vpop.f32.mrf.mxu0
        %v4041 = vadd.f32 %v3761, %v4040
        %4042 = vmatmul.f32.gmra.mxu0 %v3652
        %v4043 = vpop.f32.mrf.mxu0
        %v4044 = vadd.f32 %v3761, %v4043
        %4045 = vmatmul.f32.gmra.mxu0 %v3654
        %v4046 = vpop.f32.mrf.mxu0
        %v4047 = vadd.f32 %v3761, %v4046
        %4048 = vmatmul.f32.gmra.mxu0 %v3656
        %v4049 = vpop.f32.mrf.mxu0
        %v4050 = vadd.f32 %v3761, %v4049
        %4051 = vmatmul.f32.gmra.mxu0 %v3658
        %v4052 = vpop.f32.mrf.mxu0
        %v4053 = vadd.f32 %v3761, %v4052
        %4054 = vmatmul.f32.gmra.mxu0 %v3660
        %v4055 = vpop.f32.mrf.mxu0
        %v4056 = vadd.f32 %v3761, %v4055
        %4057 = vmatmul.f32.gmra.mxu0 %v3662
        %v4058 = vpop.f32.mrf.mxu0
        %v4059 = vadd.f32 %v3761, %v4058
        %4060 = vmatmul.f32.gmra.mxu0 %v3664
        %v4061 = vpop.f32.mrf.mxu0
        %v4062 = vadd.f32 %v3761, %v4061
        %4063 = vmatmul.f32.gmra.mxu0 %v3666
        %v4064 = vpop.f32.mrf.mxu0
        %v4065 = vadd.f32 %v3761, %v4064
        %4066 = vmatmul.f32.gmra.mxu0 %v3668
        %v4067 = vpop.f32.mrf.mxu0
        %v4068 = vadd.f32 %v3761, %v4067
        %4069 = vmatmul.f32.gmra.mxu0 %v3670
        %v4070 = vpop.f32.mrf.mxu0
        %v4071 = vadd.f32 %v3761, %v4070
        %4072 = vmatmul.f32.gmra.mxu0 %v3672
        %v4073 = vpop.f32.mrf.mxu0
        %v4074 = vadd.f32 %v3761, %v4073
        %4075 = vmatmul.f32.gmra.mxu0 %v3674
        %v4076 = vpop.f32.mrf.mxu0
        %v4077 = vadd.f32 %v3761, %v4076
        %4078 = vmatmul.f32.gmra.mxu0 %v3676
        %v4079 = vpop.f32.mrf.mxu0
        %v4080 = vadd.f32 %v3761, %v4079
        %4081 = vmatmul.f32.gmra.mxu0 %v3678
        %v4082 = vpop.f32.mrf.mxu0
        %v4083 = vadd.f32 %v3761, %v4082
        %4084 = vmatmul.f32.gmra.mxu0 %v3680
        %v4085 = vpop.f32.mrf.mxu0
        %v4086 = vadd.f32 %v3761, %v4085
        %4087 = vmatmul.f32.gmra.mxu0 %v3682
        %v4088 = vpop.f32.mrf.mxu0
        %v4089 = vadd.f32 %v3761, %v4088
        %4090 = vmatmul.f32.gmra.mxu0 %v3684
        %v4091 = vpop.f32.mrf.mxu0
        %v4092 = vadd.f32 %v3761, %v4091
        %4093 = vmatmul.f32.gmra.mxu0 %v3686
        %v4094 = vpop.f32.mrf.mxu0
        %v4095 = vadd.f32 %v3761, %v4094
        %4096 = vmatmul.f32.gmra.mxu0 %v3688
        %v4097 = vpop.f32.mrf.mxu0
        %v4098 = vadd.f32 %v3761, %v4097
        %4099 = vmatmul.f32.gmra.mxu0 %v3690
        %v4100 = vpop.f32.mrf.mxu0
        %v4101 = vadd.f32 %v3761, %v4100
        %4102 = vdwg.mxu0
        %4103 = vmatpush.msra.mxu0 %v3756
        %4104 = vmatpush.msra.mxu0 %v3754
        %4105 = vmatpush.msra.mxu0 %v3752
        %4106 = vmatpush.msra.mxu0 %v3750
        %4107 = vmatpush.msra.mxu0 %v3748
        %4108 = vmatpush.msra.mxu0 %v3746
        %4109 = vmatpush.msra.mxu0 %v3744
        %4110 = vmatpush.msra.mxu0 %v3742
        %4111 = vmatpush.msra.mxu0 %v3740
        %4112 = vmatpush.msra.mxu0 %v3738
        %4113 = vmatpush.msra.mxu0 %v3736
        %4114 = vmatpush.msra.mxu0 %v3734
        %4115 = vmatpush.msra.mxu0 %v3732
        %4116 = vmatpush.msra.mxu0 %v3730
        %4117 = vmatpush.msra.mxu0 %v3728
        %4118 = vmatpush.msra.mxu0 %v3726
        %4119 = vmatmul.f32.gmra.mxu0 %v3629
        %v4120 = vpop.f32.mrf.mxu0
        %v4121 = vadd.f32 %v4008, %v4120
        %4122 = vmatmul.f32.gmra.mxu0 %v3631
        %v4123 = vpop.f32.mrf.mxu0
        %v4124 = vadd.f32 %v4011, %v4123
        %4125 = vmatmul.f32.gmra.mxu0 %v3633
        %v4126 = vpop.f32.mrf.mxu0
        %v4127 = vadd.f32 %v4014, %v4126
        %4128 = vmatmul.f32.gmra.mxu0 %v3635
        %v4129 = vpop.f32.mrf.mxu0
        %v4130 = vadd.f32 %v4017, %v4129
        %4131 = vmatmul.f32.gmra.mxu0 %v3637
        %v4132 = vpop.f32.mrf.mxu0
        %v4133 = vadd.f32 %v4020, %v4132
        %4134 = vmatmul.f32.gmra.mxu0 %v3639
        %v4135 = vpop.f32.mrf.mxu0
        %v4136 = vadd.f32 %v4023, %v4135
        %4137 = vmatmul.f32.gmra.mxu0 %v3641
        %v4138 = vpop.f32.mrf.mxu0
        %v4139 = vadd.f32 %v4026, %v4138
        %4140 = vmatmul.f32.gmra.mxu0 %v3643
        %v4141 = vpop.f32.mrf.mxu0
        %v4142 = vadd.f32 %v4029, %v4141
        %4143 = vmatmul.f32.gmra.mxu0 %v3645
        %v4144 = vpop.f32.mrf.mxu0
        %v4145 = vadd.f32 %v4032, %v4144
        %4146 = vmatmul.f32.gmra.mxu0 %v3647
        %v4147 = vpop.f32.mrf.mxu0
        %v4148 = vadd.f32 %v4035, %v4147
        %4149 = vmatmul.f32.gmra.mxu0 %v3649
        %v4150 = vpop.f32.mrf.mxu0
        %v4151 = vadd.f32 %v4038, %v4150
        %4152 = vmatmul.f32.gmra.mxu0 %v3651
        %v4153 = vpop.f32.mrf.mxu0
        %v4154 = vadd.f32 %v4041, %v4153
        %4155 = vmatmul.f32.gmra.mxu0 %v3653
        %v4156 = vpop.f32.mrf.mxu0
        %v4157 = vadd.f32 %v4044, %v4156
        %4158 = vmatmul.f32.gmra.mxu0 %v3655
        %v4159 = vpop.f32.mrf.mxu0
        %v4160 = vadd.f32 %v4047, %v4159
        %4161 = vmatmul.f32.gmra.mxu0 %v3657
        %v4162 = vpop.f32.mrf.mxu0
        %v4163 = vadd.f32 %v4050, %v4162
        %4164 = vmatmul.f32.gmra.mxu0 %v3659
        %v4165 = vpop.f32.mrf.mxu0
        %v4166 = vadd.f32 %v4053, %v4165
        %4167 = vmatmul.f32.gmra.mxu0 %v3661
        %v4168 = vpop.f32.mrf.mxu0
        %v4169 = vadd.f32 %v4056, %v4168
        %4170 = vmatmul.f32.gmra.mxu0 %v3663
        %v4171 = vpop.f32.mrf.mxu0
        %v4172 = vadd.f32 %v4059, %v4171
        %4173 = vmatmul.f32.gmra.mxu0 %v3665
        %v4174 = vpop.f32.mrf.mxu0
        %v4175 = vadd.f32 %v4062, %v4174
        %4176 = vmatmul.f32.gmra.mxu0 %v3667
        %v4177 = vpop.f32.mrf.mxu0
        %v4178 = vadd.f32 %v4065, %v4177
        %4179 = vmatmul.f32.gmra.mxu0 %v3669
        %v4180 = vpop.f32.mrf.mxu0
        %v4181 = vadd.f32 %v4068, %v4180
        %4182 = vmatmul.f32.gmra.mxu0 %v3671
        %v4183 = vpop.f32.mrf.mxu0
        %v4184 = vadd.f32 %v4071, %v4183
        %4185 = vmatmul.f32.gmra.mxu0 %v3673
        %v4186 = vpop.f32.mrf.mxu0
        %v4187 = vadd.f32 %v4074, %v4186
        %4188 = vmatmul.f32.gmra.mxu0 %v3675
        %v4189 = vpop.f32.mrf.mxu0
        %v4190 = vadd.f32 %v4077, %v4189
        %4191 = vmatmul.f32.gmra.mxu0 %v3677
        %v4192 = vpop.f32.mrf.mxu0
        %v4193 = vadd.f32 %v4080, %v4192
        %4194 = vmatmul.f32.gmra.mxu0 %v3679
        %v4195 = vpop.f32.mrf.mxu0
        %v4196 = vadd.f32 %v4083, %v4195
        %4197 = vmatmul.f32.gmra.mxu0 %v3681
        %v4198 = vpop.f32.mrf.mxu0
        %v4199 = vadd.f32 %v4086, %v4198
        %4200 = vmatmul.f32.gmra.mxu0 %v3683
        %v4201 = vpop.f32.mrf.mxu0
        %v4202 = vadd.f32 %v4089, %v4201
        %4203 = vmatmul.f32.gmra.mxu0 %v3685
        %v4204 = vpop.f32.mrf.mxu0
        %v4205 = vadd.f32 %v4092, %v4204
        %4206 = vmatmul.f32.gmra.mxu0 %v3687
        %v4207 = vpop.f32.mrf.mxu0
        %v4208 = vadd.f32 %v4095, %v4207
        %4209 = vmatmul.f32.gmra.mxu0 %v3689
        %v4210 = vpop.f32.mrf.mxu0
        %v4211 = vadd.f32 %v4098, %v4210
        %4212 = vmatmul.f32.gmra.mxu0 %v3691
        %v4213 = vpop.f32.mrf.mxu0
        %v4214 = vadd.f32 %v4101, %v4213
        %4215 = vdwg.mxu0
        %v4216 = vmax.f32 %v3895, 0.0
        %v4217 = vmax.f32 %v4121, 0.0
        %v4218 = vmax.f32 %v3898, 0.0
        %v4219 = vmax.f32 %v4124, 0.0
        %v4220 = vmax.f32 %v3901, 0.0
        %v4221 = vmax.f32 %v4127, 0.0
        %v4222 = vmax.f32 %v3904, 0.0
        %v4223 = vmax.f32 %v4130, 0.0
        %v4224 = vmax.f32 %v3907, 0.0
        %v4225 = vmax.f32 %v4133, 0.0
        %v4226 = vmax.f32 %v3910, 0.0
        %v4227 = vmax.f32 %v4136, 0.0
        %v4228 = vmax.f32 %v3913, 0.0
        %v4229 = vmax.f32 %v4139, 0.0
        %v4230 = vmax.f32 %v3916, 0.0
        %v4231 = vmax.f32 %v4142, 0.0
        %v4232 = vmax.f32 %v3919, 0.0
        %v4233 = vmax.f32 %v4145, 0.0
        %v4234 = vmax.f32 %v3922, 0.0
        %v4235 = vmax.f32 %v4148, 0.0
        %v4236 = vmax.f32 %v3925, 0.0
        %v4237 = vmax.f32 %v4151, 0.0
        %v4238 = vmax.f32 %v3928, 0.0
        %v4239 = vmax.f32 %v4154, 0.0
        %v4240 = vmax.f32 %v3931, 0.0
        %v4241 = vmax.f32 %v4157, 0.0
        %v4242 = vmax.f32 %v3934, 0.0
        %v4243 = vmax.f32 %v4160, 0.0
        %v4244 = vmax.f32 %v3937, 0.0
        %v4245 = vmax.f32 %v4163, 0.0
        %v4246 = vmax.f32 %v3940, 0.0
        %v4247 = vmax.f32 %v4166, 0.0
        %v4248 = vmax.f32 %v3943, 0.0
        %v4249 = vmax.f32 %v4169, 0.0
        %v4250 = vmax.f32 %v3946, 0.0
        %v4251 = vmax.f32 %v4172, 0.0
        %v4252 = vmax.f32 %v3949, 0.0
        %v4253 = vmax.f32 %v4175, 0.0
        %v4254 = vmax.f32 %v3952, 0.0
        %v4255 = vmax.f32 %v4178, 0.0
        %v4256 = vmax.f32 %v3955, 0.0
        %v4257 = vmax.f32 %v4181, 0.0
        %v4258 = vmax.f32 %v3958, 0.0
        %v4259 = vmax.f32 %v4184, 0.0
        %v4260 = vmax.f32 %v3961, 0.0
        %v4261 = vmax.f32 %v4187, 0.0
        %v4262 = vmax.f32 %v3964, 0.0
        %v4263 = vmax.f32 %v4190, 0.0
        %v4264 = vmax.f32 %v3967, 0.0
        %v4265 = vmax.f32 %v4193, 0.0
        %v4266 = vmax.f32 %v3970, 0.0
        %v4267 = vmax.f32 %v4196, 0.0
        %v4268 = vmax.f32 %v3973, 0.0
        %v4269 = vmax.f32 %v4199, 0.0
        %v4270 = vmax.f32 %v3976, 0.0
        %v4271 = vmax.f32 %v4202, 0.0
        %v4272 = vmax.f32 %v3979, 0.0
        %v4273 = vmax.f32 %v4205, 0.0
        %v4274 = vmax.f32 %v3982, 0.0
        %v4275 = vmax.f32 %v4208, 0.0
        %v4276 = vmax.f32 %v3985, 0.0
        %v4277 = vmax.f32 %v4211, 0.0
        %v4278 = vmax.f32 %v3988, 0.0
        %v4279 = vmax.f32 %v4214, 0.0
        %s4280 = scalar_lea.vmem [#allocation5], 3072
        %v4281 = vld [vmem:[%s4280] sm:$0xff]
        %v4282 = vld [vmem:[%s4280 + $0x8] sm:$0xff]
        %v4283 = vld [vmem:[%s4280 + $0x10] sm:$0xff]
        %v4284 = vld [vmem:[%s4280 + $0x18] sm:$0xff]
        %v4285 = vld [vmem:[%s4280 + $0x20] sm:$0xff]
        %v4286 = vld [vmem:[%s4280 + $0x28] sm:$0xff]
        %v4287 = vld [vmem:[%s4280 + $0x30] sm:$0xff]
        %v4288 = vld [vmem:[%s4280 + $0x38] sm:$0xff]
        %v4289 = vld [vmem:[%s4280 + $0x40] sm:$0xff]
        %v4290 = vld [vmem:[%s4280 + $0x48] sm:$0xff]
        %v4291 = vld [vmem:[%s4280 + $0x50] sm:$0xff]
        %v4292 = vld [vmem:[%s4280 + $0x58] sm:$0xff]
        %v4293 = vld [vmem:[%s4280 + $0x60] sm:$0xff]
        %v4294 = vld [vmem:[%s4280 + $0x68] sm:$0xff]
        %v4295 = vld [vmem:[%s4280 + $0x70] sm:$0xff]
        %v4296 = vld [vmem:[%s4280 + $0x78] sm:$0xff]
        %v4297 = vld [vmem:[%s4280 + $0x80] sm:$0xff]
        %v4298 = vld [vmem:[%s4280 + $0x88] sm:$0xff]
        %v4299 = vld [vmem:[%s4280 + $0x90] sm:$0xff]
        %v4300 = vld [vmem:[%s4280 + $0x98] sm:$0xff]
        %v4301 = vld [vmem:[%s4280 + $0xa0] sm:$0xff]
        %v4302 = vld [vmem:[%s4280 + $0xa8] sm:$0xff]
        %v4303 = vld [vmem:[%s4280 + $0xb0] sm:$0xff]
        %v4304 = vld [vmem:[%s4280 + $0xb8] sm:$0xff]
        %v4305 = vld [vmem:[%s4280 + $0xc0] sm:$0xff]
        %v4306 = vld [vmem:[%s4280 + $0xc8] sm:$0xff]
        %v4307 = vld [vmem:[%s4280 + $0xd0] sm:$0xff]
        %v4308 = vld [vmem:[%s4280 + $0xd8] sm:$0xff]
        %v4309 = vld [vmem:[%s4280 + $0xe0] sm:$0xff]
        %v4310 = vld [vmem:[%s4280 + $0xe8] sm:$0xff]
        %v4311 = vld [vmem:[%s4280 + $0xf0] sm:$0xff]
        %v4312 = vld [vmem:[%s4280 + $0xf8] sm:$0xff]
        %v4313 = vld [vmem:[%s4280 + $0x100] sm:$0xff]
        %v4314 = vld [vmem:[%s4280 + $0x108] sm:$0xff]
        %v4315 = vld [vmem:[%s4280 + $0x110] sm:$0xff]
        %v4316 = vld [vmem:[%s4280 + $0x118] sm:$0xff]
        %v4317 = vld [vmem:[%s4280 + $0x120] sm:$0xff]
        %v4318 = vld [vmem:[%s4280 + $0x128] sm:$0xff]
        %v4319 = vld [vmem:[%s4280 + $0x130] sm:$0xff]
        %v4320 = vld [vmem:[%s4280 + $0x138] sm:$0xff]
        %v4321 = vld [vmem:[%s4280 + $0x140] sm:$0xff]
        %v4322 = vld [vmem:[%s4280 + $0x148] sm:$0xff]
        %v4323 = vld [vmem:[%s4280 + $0x150] sm:$0xff]
        %v4324 = vld [vmem:[%s4280 + $0x158] sm:$0xff]
        %v4325 = vld [vmem:[%s4280 + $0x160] sm:$0xff]
        %v4326 = vld [vmem:[%s4280 + $0x168] sm:$0xff]
        %v4327 = vld [vmem:[%s4280 + $0x170] sm:$0xff]
        %v4328 = vld [vmem:[%s4280 + $0x178] sm:$0xff]
        %v4329 = vld [vmem:[%s4280 + $0x180] sm:$0xff]
        %v4330 = vld [vmem:[%s4280 + $0x188] sm:$0xff]
        %v4331 = vld [vmem:[%s4280 + $0x190] sm:$0xff]
        %v4332 = vld [vmem:[%s4280 + $0x198] sm:$0xff]
        %v4333 = vld [vmem:[%s4280 + $0x1a0] sm:$0xff]
        %v4334 = vld [vmem:[%s4280 + $0x1a8] sm:$0xff]
        %v4335 = vld [vmem:[%s4280 + $0x1b0] sm:$0xff]
        %v4336 = vld [vmem:[%s4280 + $0x1b8] sm:$0xff]
        %v4337 = vld [vmem:[%s4280 + $0x1c0] sm:$0xff]
        %v4338 = vld [vmem:[%s4280 + $0x1c8] sm:$0xff]
        %v4339 = vld [vmem:[%s4280 + $0x1d0] sm:$0xff]
        %v4340 = vld [vmem:[%s4280 + $0x1d8] sm:$0xff]
        %v4341 = vld [vmem:[%s4280 + $0x1e0] sm:$0xff]
        %v4342 = vld [vmem:[%s4280 + $0x1e8] sm:$0xff]
        %v4343 = vld [vmem:[%s4280 + $0x1f0] sm:$0xff]
        %v4344 = vld [vmem:[%s4280 + $0x1f8] sm:$0xff]
        %s4345 = scalar_lea.vmem %s4, 12
        %v4346 = vld [vmem:[%s4345] sm:$0x3]
        %v4348 = vperm.slane %v4346, 0
        %v4349 = vperm.slane %v4346, 1
        %4352 = vmatpush.msra.mxu0 %v4311
        %4353 = vmatpush.msra.mxu0 %v4309
        %4354 = vmatpush.msra.mxu0 %v4307
        %4355 = vmatpush.msra.mxu0 %v4305
        %4356 = vmatpush.msra.mxu0 %v4303
        %4357 = vmatpush.msra.mxu0 %v4301
        %4358 = vmatpush.msra.mxu0 %v4299
        %4359 = vmatpush.msra.mxu0 %v4297
        %4360 = vmatpush.msra.mxu0 %v4295
        %4361 = vmatpush.msra.mxu0 %v4293
        %4362 = vmatpush.msra.mxu0 %v4291
        %4363 = vmatpush.msra.mxu0 %v4289
        %4364 = vmatpush.msra.mxu0 %v4287
        %4365 = vmatpush.msra.mxu0 %v4285
        %4366 = vmatpush.msra.mxu0 %v4283
        %4367 = vmatpush.msra.mxu0 %v4281
        %4368 = vmatmul.f32.gmra.mxu0 %v4216
        %v4369 = vpop.f32.mrf.mxu0
        %v4370 = vadd.f32 %v4348, %v4369
        %4371 = vmatmul.f32.gmra.mxu0 %v4218
        %v4372 = vpop.f32.mrf.mxu0
        %v4373 = vadd.f32 %v4348, %v4372
        %4374 = vmatmul.f32.gmra.mxu0 %v4220
        %v4375 = vpop.f32.mrf.mxu0
        %v4376 = vadd.f32 %v4348, %v4375
        %4377 = vmatmul.f32.gmra.mxu0 %v4222
        %v4378 = vpop.f32.mrf.mxu0
        %v4379 = vadd.f32 %v4348, %v4378
        %4380 = vmatmul.f32.gmra.mxu0 %v4224
        %v4381 = vpop.f32.mrf.mxu0
        %v4382 = vadd.f32 %v4348, %v4381
        %4383 = vmatmul.f32.gmra.mxu0 %v4226
        %v4384 = vpop.f32.mrf.mxu0
        %v4385 = vadd.f32 %v4348, %v4384
        %4386 = vmatmul.f32.gmra.mxu0 %v4228
        %v4387 = vpop.f32.mrf.mxu0
        %v4388 = vadd.f32 %v4348, %v4387
        %4389 = vmatmul.f32.gmra.mxu0 %v4230
        %v4390 = vpop.f32.mrf.mxu0
        %v4391 = vadd.f32 %v4348, %v4390
        %4392 = vmatmul.f32.gmra.mxu0 %v4232
        %v4393 = vpop.f32.mrf.mxu0
        %v4394 = vadd.f32 %v4348, %v4393
        %4395 = vmatmul.f32.gmra.mxu0 %v4234
        %v4396 = vpop.f32.mrf.mxu0
        %v4397 = vadd.f32 %v4348, %v4396
        %4398 = vmatmul.f32.gmra.mxu0 %v4236
        %v4399 = vpop.f32.mrf.mxu0
        %v4400 = vadd.f32 %v4348, %v4399
        %4401 = vmatmul.f32.gmra.mxu0 %v4238
        %v4402 = vpop.f32.mrf.mxu0
        %v4403 = vadd.f32 %v4348, %v4402
        %4404 = vmatmul.f32.gmra.mxu0 %v4240
        %v4405 = vpop.f32.mrf.mxu0
        %v4406 = vadd.f32 %v4348, %v4405
        %4407 = vmatmul.f32.gmra.mxu0 %v4242
        %v4408 = vpop.f32.mrf.mxu0
        %v4409 = vadd.f32 %v4348, %v4408
        %4410 = vmatmul.f32.gmra.mxu0 %v4244
        %v4411 = vpop.f32.mrf.mxu0
        %v4412 = vadd.f32 %v4348, %v4411
        %4413 = vmatmul.f32.gmra.mxu0 %v4246
        %v4414 = vpop.f32.mrf.mxu0
        %v4415 = vadd.f32 %v4348, %v4414
        %4416 = vmatmul.f32.gmra.mxu0 %v4248
        %v4417 = vpop.f32.mrf.mxu0
        %v4418 = vadd.f32 %v4348, %v4417
        %4419 = vmatmul.f32.gmra.mxu0 %v4250
        %v4420 = vpop.f32.mrf.mxu0
        %v4421 = vadd.f32 %v4348, %v4420
        %4422 = vmatmul.f32.gmra.mxu0 %v4252
        %v4423 = vpop.f32.mrf.mxu0
        %v4424 = vadd.f32 %v4348, %v4423
        %4425 = vmatmul.f32.gmra.mxu0 %v4254
        %v4426 = vpop.f32.mrf.mxu0
        %v4427 = vadd.f32 %v4348, %v4426
        %4428 = vmatmul.f32.gmra.mxu0 %v4256
        %v4429 = vpop.f32.mrf.mxu0
        %v4430 = vadd.f32 %v4348, %v4429
        %4431 = vmatmul.f32.gmra.mxu0 %v4258
        %v4432 = vpop.f32.mrf.mxu0
        %v4433 = vadd.f32 %v4348, %v4432
        %4434 = vmatmul.f32.gmra.mxu0 %v4260
        %v4435 = vpop.f32.mrf.mxu0
        %v4436 = vadd.f32 %v4348, %v4435
        %4437 = vmatmul.f32.gmra.mxu0 %v4262
        %v4438 = vpop.f32.mrf.mxu0
        %v4439 = vadd.f32 %v4348, %v4438
        %4440 = vmatmul.f32.gmra.mxu0 %v4264
        %v4441 = vpop.f32.mrf.mxu0
        %v4442 = vadd.f32 %v4348, %v4441
        %4443 = vmatmul.f32.gmra.mxu0 %v4266
        %v4444 = vpop.f32.mrf.mxu0
        %v4445 = vadd.f32 %v4348, %v4444
        %4446 = vmatmul.f32.gmra.mxu0 %v4268
        %v4447 = vpop.f32.mrf.mxu0
        %v4448 = vadd.f32 %v4348, %v4447
        %4449 = vmatmul.f32.gmra.mxu0 %v4270
        %v4450 = vpop.f32.mrf.mxu0
        %v4451 = vadd.f32 %v4348, %v4450
        %4452 = vmatmul.f32.gmra.mxu0 %v4272
        %v4453 = vpop.f32.mrf.mxu0
        %v4454 = vadd.f32 %v4348, %v4453
        %4455 = vmatmul.f32.gmra.mxu0 %v4274
        %v4456 = vpop.f32.mrf.mxu0
        %v4457 = vadd.f32 %v4348, %v4456
        %4458 = vmatmul.f32.gmra.mxu0 %v4276
        %v4459 = vpop.f32.mrf.mxu0
        %v4460 = vadd.f32 %v4348, %v4459
        %4461 = vmatmul.f32.gmra.mxu0 %v4278
        %v4462 = vpop.f32.mrf.mxu0
        %v4463 = vadd.f32 %v4348, %v4462
        %4464 = vdwg.mxu0
        %4465 = vmatpush.msra.mxu0 %v4343
        %4466 = vmatpush.msra.mxu0 %v4341
        %4467 = vmatpush.msra.mxu0 %v4339
        %4468 = vmatpush.msra.mxu0 %v4337
        %4469 = vmatpush.msra.mxu0 %v4335
        %4470 = vmatpush.msra.mxu0 %v4333
        %4471 = vmatpush.msra.mxu0 %v4331
        %4472 = vmatpush.msra.mxu0 %v4329
        %4473 = vmatpush.msra.mxu0 %v4327
        %4474 = vmatpush.msra.mxu0 %v4325
        %4475 = vmatpush.msra.mxu0 %v4323
        %4476 = vmatpush.msra.mxu0 %v4321
        %4477 = vmatpush.msra.mxu0 %v4319
        %4478 = vmatpush.msra.mxu0 %v4317
        %4479 = vmatpush.msra.mxu0 %v4315
        %4480 = vmatpush.msra.mxu0 %v4313
        %4481 = vmatmul.f32.gmra.mxu0 %v4217
        %v4482 = vpop.f32.mrf.mxu0
        %v4483 = vadd.f32 %v4370, %v4482
        %4484 = vmatmul.f32.gmra.mxu0 %v4219
        %v4485 = vpop.f32.mrf.mxu0
        %v4486 = vadd.f32 %v4373, %v4485
        %4487 = vmatmul.f32.gmra.mxu0 %v4221
        %v4488 = vpop.f32.mrf.mxu0
        %v4489 = vadd.f32 %v4376, %v4488
        %4490 = vmatmul.f32.gmra.mxu0 %v4223
        %v4491 = vpop.f32.mrf.mxu0
        %v4492 = vadd.f32 %v4379, %v4491
        %4493 = vmatmul.f32.gmra.mxu0 %v4225
        %v4494 = vpop.f32.mrf.mxu0
        %v4495 = vadd.f32 %v4382, %v4494
        %4496 = vmatmul.f32.gmra.mxu0 %v4227
        %v4497 = vpop.f32.mrf.mxu0
        %v4498 = vadd.f32 %v4385, %v4497
        %4499 = vmatmul.f32.gmra.mxu0 %v4229
        %v4500 = vpop.f32.mrf.mxu0
        %v4501 = vadd.f32 %v4388, %v4500
        %4502 = vmatmul.f32.gmra.mxu0 %v4231
        %v4503 = vpop.f32.mrf.mxu0
        %v4504 = vadd.f32 %v4391, %v4503
        %4505 = vmatmul.f32.gmra.mxu0 %v4233
        %v4506 = vpop.f32.mrf.mxu0
        %v4507 = vadd.f32 %v4394, %v4506
        %4508 = vmatmul.f32.gmra.mxu0 %v4235
        %v4509 = vpop.f32.mrf.mxu0
        %v4510 = vadd.f32 %v4397, %v4509
        %4511 = vmatmul.f32.gmra.mxu0 %v4237
        %v4512 = vpop.f32.mrf.mxu0
        %v4513 = vadd.f32 %v4400, %v4512
        %4514 = vmatmul.f32.gmra.mxu0 %v4239
        %v4515 = vpop.f32.mrf.mxu0
        %v4516 = vadd.f32 %v4403, %v4515
        %4517 = vmatmul.f32.gmra.mxu0 %v4241
        %v4518 = vpop.f32.mrf.mxu0
        %v4519 = vadd.f32 %v4406, %v4518
        %4520 = vmatmul.f32.gmra.mxu0 %v4243
        %v4521 = vpop.f32.mrf.mxu0
        %v4522 = vadd.f32 %v4409, %v4521
        %4523 = vmatmul.f32.gmra.mxu0 %v4245
        %v4524 = vpop.f32.mrf.mxu0
        %v4525 = vadd.f32 %v4412, %v4524
        %4526 = vmatmul.f32.gmra.mxu0 %v4247
        %v4527 = vpop.f32.mrf.mxu0
        %v4528 = vadd.f32 %v4415, %v4527
        %4529 = vmatmul.f32.gmra.mxu0 %v4249
        %v4530 = vpop.f32.mrf.mxu0
        %v4531 = vadd.f32 %v4418, %v4530
        %4532 = vmatmul.f32.gmra.mxu0 %v4251
        %v4533 = vpop.f32.mrf.mxu0
        %v4534 = vadd.f32 %v4421, %v4533
        %4535 = vmatmul.f32.gmra.mxu0 %v4253
        %v4536 = vpop.f32.mrf.mxu0
        %v4537 = vadd.f32 %v4424, %v4536
        %4538 = vmatmul.f32.gmra.mxu0 %v4255
        %v4539 = vpop.f32.mrf.mxu0
        %v4540 = vadd.f32 %v4427, %v4539
        %4541 = vmatmul.f32.gmra.mxu0 %v4257
        %v4542 = vpop.f32.mrf.mxu0
        %v4543 = vadd.f32 %v4430, %v4542
        %4544 = vmatmul.f32.gmra.mxu0 %v4259
        %v4545 = vpop.f32.mrf.mxu0
        %v4546 = vadd.f32 %v4433, %v4545
        %4547 = vmatmul.f32.gmra.mxu0 %v4261
        %v4548 = vpop.f32.mrf.mxu0
        %v4549 = vadd.f32 %v4436, %v4548
        %4550 = vmatmul.f32.gmra.mxu0 %v4263
        %v4551 = vpop.f32.mrf.mxu0
        %v4552 = vadd.f32 %v4439, %v4551
        %4553 = vmatmul.f32.gmra.mxu0 %v4265
        %v4554 = vpop.f32.mrf.mxu0
        %v4555 = vadd.f32 %v4442, %v4554
        %4556 = vmatmul.f32.gmra.mxu0 %v4267
        %v4557 = vpop.f32.mrf.mxu0
        %v4558 = vadd.f32 %v4445, %v4557
        %4559 = vmatmul.f32.gmra.mxu0 %v4269
        %v4560 = vpop.f32.mrf.mxu0
        %v4561 = vadd.f32 %v4448, %v4560
        %4562 = vmatmul.f32.gmra.mxu0 %v4271
        %v4563 = vpop.f32.mrf.mxu0
        %v4564 = vadd.f32 %v4451, %v4563
        %4565 = vmatmul.f32.gmra.mxu0 %v4273
        %v4566 = vpop.f32.mrf.mxu0
        %v4567 = vadd.f32 %v4454, %v4566
        %4568 = vmatmul.f32.gmra.mxu0 %v4275
        %v4569 = vpop.f32.mrf.mxu0
        %v4570 = vadd.f32 %v4457, %v4569
        %4571 = vmatmul.f32.gmra.mxu0 %v4277
        %v4572 = vpop.f32.mrf.mxu0
        %v4573 = vadd.f32 %v4460, %v4572
        %4574 = vmatmul.f32.gmra.mxu0 %v4279
        %v4575 = vpop.f32.mrf.mxu0
        %v4576 = vadd.f32 %v4463, %v4575
        %4577 = vdwg.mxu0
        %4578 = vmatpush.msra.mxu0 %v4312
        %4579 = vmatpush.msra.mxu0 %v4310
        %4580 = vmatpush.msra.mxu0 %v4308
        %4581 = vmatpush.msra.mxu0 %v4306
        %4582 = vmatpush.msra.mxu0 %v4304
        %4583 = vmatpush.msra.mxu0 %v4302
        %4584 = vmatpush.msra.mxu0 %v4300
        %4585 = vmatpush.msra.mxu0 %v4298
        %4586 = vmatpush.msra.mxu0 %v4296
        %4587 = vmatpush.msra.mxu0 %v4294
        %4588 = vmatpush.msra.mxu0 %v4292
        %4589 = vmatpush.msra.mxu0 %v4290
        %4590 = vmatpush.msra.mxu0 %v4288
        %4591 = vmatpush.msra.mxu0 %v4286
        %4592 = vmatpush.msra.mxu0 %v4284
        %4593 = vmatpush.msra.mxu0 %v4282
        %4594 = vmatmul.f32.gmra.mxu0 %v4216
        %v4595 = vpop.f32.mrf.mxu0
        %v4596 = vadd.f32 %v4349, %v4595
        %4597 = vmatmul.f32.gmra.mxu0 %v4218
        %v4598 = vpop.f32.mrf.mxu0
        %v4599 = vadd.f32 %v4349, %v4598
        %4600 = vmatmul.f32.gmra.mxu0 %v4220
        %v4601 = vpop.f32.mrf.mxu0
        %v4602 = vadd.f32 %v4349, %v4601
        %4603 = vmatmul.f32.gmra.mxu0 %v4222
        %v4604 = vpop.f32.mrf.mxu0
        %v4605 = vadd.f32 %v4349, %v4604
        %4606 = vmatmul.f32.gmra.mxu0 %v4224
        %v4607 = vpop.f32.mrf.mxu0
        %v4608 = vadd.f32 %v4349, %v4607
        %4609 = vmatmul.f32.gmra.mxu0 %v4226
        %v4610 = vpop.f32.mrf.mxu0
        %v4611 = vadd.f32 %v4349, %v4610
        %4612 = vmatmul.f32.gmra.mxu0 %v4228
        %v4613 = vpop.f32.mrf.mxu0
        %v4614 = vadd.f32 %v4349, %v4613
        %4615 = vmatmul.f32.gmra.mxu0 %v4230
        %v4616 = vpop.f32.mrf.mxu0
        %v4617 = vadd.f32 %v4349, %v4616
        %4618 = vmatmul.f32.gmra.mxu0 %v4232
        %v4619 = vpop.f32.mrf.mxu0
        %v4620 = vadd.f32 %v4349, %v4619
        %4621 = vmatmul.f32.gmra.mxu0 %v4234
        %v4622 = vpop.f32.mrf.mxu0
        %v4623 = vadd.f32 %v4349, %v4622
        %4624 = vmatmul.f32.gmra.mxu0 %v4236
        %v4625 = vpop.f32.mrf.mxu0
        %v4626 = vadd.f32 %v4349, %v4625
        %4627 = vmatmul.f32.gmra.mxu0 %v4238
        %v4628 = vpop.f32.mrf.mxu0
        %v4629 = vadd.f32 %v4349, %v4628
        %4630 = vmatmul.f32.gmra.mxu0 %v4240
        %v4631 = vpop.f32.mrf.mxu0
        %v4632 = vadd.f32 %v4349, %v4631
        %4633 = vmatmul.f32.gmra.mxu0 %v4242
        %v4634 = vpop.f32.mrf.mxu0
        %v4635 = vadd.f32 %v4349, %v4634
        %4636 = vmatmul.f32.gmra.mxu0 %v4244
        %v4637 = vpop.f32.mrf.mxu0
        %v4638 = vadd.f32 %v4349, %v4637
        %4639 = vmatmul.f32.gmra.mxu0 %v4246
        %v4640 = vpop.f32.mrf.mxu0
        %v4641 = vadd.f32 %v4349, %v4640
        %4642 = vmatmul.f32.gmra.mxu0 %v4248
        %v4643 = vpop.f32.mrf.mxu0
        %v4644 = vadd.f32 %v4349, %v4643
        %4645 = vmatmul.f32.gmra.mxu0 %v4250
        %v4646 = vpop.f32.mrf.mxu0
        %v4647 = vadd.f32 %v4349, %v4646
        %4648 = vmatmul.f32.gmra.mxu0 %v4252
        %v4649 = vpop.f32.mrf.mxu0
        %v4650 = vadd.f32 %v4349, %v4649
        %4651 = vmatmul.f32.gmra.mxu0 %v4254
        %v4652 = vpop.f32.mrf.mxu0
        %v4653 = vadd.f32 %v4349, %v4652
        %4654 = vmatmul.f32.gmra.mxu0 %v4256
        %v4655 = vpop.f32.mrf.mxu0
        %v4656 = vadd.f32 %v4349, %v4655
        %4657 = vmatmul.f32.gmra.mxu0 %v4258
        %v4658 = vpop.f32.mrf.mxu0
        %v4659 = vadd.f32 %v4349, %v4658
        %4660 = vmatmul.f32.gmra.mxu0 %v4260
        %v4661 = vpop.f32.mrf.mxu0
        %v4662 = vadd.f32 %v4349, %v4661
        %4663 = vmatmul.f32.gmra.mxu0 %v4262
        %v4664 = vpop.f32.mrf.mxu0
        %v4665 = vadd.f32 %v4349, %v4664
        %4666 = vmatmul.f32.gmra.mxu0 %v4264
        %v4667 = vpop.f32.mrf.mxu0
        %v4668 = vadd.f32 %v4349, %v4667
        %4669 = vmatmul.f32.gmra.mxu0 %v4266
        %v4670 = vpop.f32.mrf.mxu0
        %v4671 = vadd.f32 %v4349, %v4670
        %4672 = vmatmul.f32.gmra.mxu0 %v4268
        %v4673 = vpop.f32.mrf.mxu0
        %v4674 = vadd.f32 %v4349, %v4673
        %4675 = vmatmul.f32.gmra.mxu0 %v4270
        %v4676 = vpop.f32.mrf.mxu0
        %v4677 = vadd.f32 %v4349, %v4676
        %4678 = vmatmul.f32.gmra.mxu0 %v4272
        %v4679 = vpop.f32.mrf.mxu0
        %v4680 = vadd.f32 %v4349, %v4679
        %4681 = vmatmul.f32.gmra.mxu0 %v4274
        %v4682 = vpop.f32.mrf.mxu0
        %v4683 = vadd.f32 %v4349, %v4682
        %4684 = vmatmul.f32.gmra.mxu0 %v4276
        %v4685 = vpop.f32.mrf.mxu0
        %v4686 = vadd.f32 %v4349, %v4685
        %4687 = vmatmul.f32.gmra.mxu0 %v4278
        %v4688 = vpop.f32.mrf.mxu0
        %v4689 = vadd.f32 %v4349, %v4688
        %4690 = vdwg.mxu0
        %4691 = vmatpush.msra.mxu0 %v4344
        %4692 = vmatpush.msra.mxu0 %v4342
        %4693 = vmatpush.msra.mxu0 %v4340
        %4694 = vmatpush.msra.mxu0 %v4338
        %4695 = vmatpush.msra.mxu0 %v4336
        %4696 = vmatpush.msra.mxu0 %v4334
        %4697 = vmatpush.msra.mxu0 %v4332
        %4698 = vmatpush.msra.mxu0 %v4330
        %4699 = vmatpush.msra.mxu0 %v4328
        %4700 = vmatpush.msra.mxu0 %v4326
        %4701 = vmatpush.msra.mxu0 %v4324
        %4702 = vmatpush.msra.mxu0 %v4322
        %4703 = vmatpush.msra.mxu0 %v4320
        %4704 = vmatpush.msra.mxu0 %v4318
        %4705 = vmatpush.msra.mxu0 %v4316
        %4706 = vmatpush.msra.mxu0 %v4314
        %4707 = vmatmul.f32.gmra.mxu0 %v4217
        %v4708 = vpop.f32.mrf.mxu0
        %v4709 = vadd.f32 %v4596, %v4708
        %4710 = vmatmul.f32.gmra.mxu0 %v4219
        %v4711 = vpop.f32.mrf.mxu0
        %v4712 = vadd.f32 %v4599, %v4711
        %4713 = vmatmul.f32.gmra.mxu0 %v4221
        %v4714 = vpop.f32.mrf.mxu0
        %v4715 = vadd.f32 %v4602, %v4714
        %4716 = vmatmul.f32.gmra.mxu0 %v4223
        %v4717 = vpop.f32.mrf.mxu0
        %v4718 = vadd.f32 %v4605, %v4717
        %4719 = vmatmul.f32.gmra.mxu0 %v4225
        %v4720 = vpop.f32.mrf.mxu0
        %v4721 = vadd.f32 %v4608, %v4720
        %4722 = vmatmul.f32.gmra.mxu0 %v4227
        %v4723 = vpop.f32.mrf.mxu0
        %v4724 = vadd.f32 %v4611, %v4723
        %4725 = vmatmul.f32.gmra.mxu0 %v4229
        %v4726 = vpop.f32.mrf.mxu0
        %v4727 = vadd.f32 %v4614, %v4726
        %4728 = vmatmul.f32.gmra.mxu0 %v4231
        %v4729 = vpop.f32.mrf.mxu0
        %v4730 = vadd.f32 %v4617, %v4729
        %4731 = vmatmul.f32.gmra.mxu0 %v4233
        %v4732 = vpop.f32.mrf.mxu0
        %v4733 = vadd.f32 %v4620, %v4732
        %4734 = vmatmul.f32.gmra.mxu0 %v4235
        %v4735 = vpop.f32.mrf.mxu0
        %v4736 = vadd.f32 %v4623, %v4735
        %4737 = vmatmul.f32.gmra.mxu0 %v4237
        %v4738 = vpop.f32.mrf.mxu0
        %v4739 = vadd.f32 %v4626, %v4738
        %4740 = vmatmul.f32.gmra.mxu0 %v4239
        %v4741 = vpop.f32.mrf.mxu0
        %v4742 = vadd.f32 %v4629, %v4741
        %4743 = vmatmul.f32.gmra.mxu0 %v4241
        %v4744 = vpop.f32.mrf.mxu0
        %v4745 = vadd.f32 %v4632, %v4744
        %4746 = vmatmul.f32.gmra.mxu0 %v4243
        %v4747 = vpop.f32.mrf.mxu0
        %v4748 = vadd.f32 %v4635, %v4747
        %4749 = vmatmul.f32.gmra.mxu0 %v4245
        %v4750 = vpop.f32.mrf.mxu0
        %v4751 = vadd.f32 %v4638, %v4750
        %4752 = vmatmul.f32.gmra.mxu0 %v4247
        %v4753 = vpop.f32.mrf.mxu0
        %v4754 = vadd.f32 %v4641, %v4753
        %4755 = vmatmul.f32.gmra.mxu0 %v4249
        %v4756 = vpop.f32.mrf.mxu0
        %v4757 = vadd.f32 %v4644, %v4756
        %4758 = vmatmul.f32.gmra.mxu0 %v4251
        %v4759 = vpop.f32.mrf.mxu0
        %v4760 = vadd.f32 %v4647, %v4759
        %4761 = vmatmul.f32.gmra.mxu0 %v4253
        %v4762 = vpop.f32.mrf.mxu0
        %v4763 = vadd.f32 %v4650, %v4762
        %4764 = vmatmul.f32.gmra.mxu0 %v4255
        %v4765 = vpop.f32.mrf.mxu0
        %v4766 = vadd.f32 %v4653, %v4765
        %4767 = vmatmul.f32.gmra.mxu0 %v4257
        %v4768 = vpop.f32.mrf.mxu0
        %v4769 = vadd.f32 %v4656, %v4768
        %4770 = vmatmul.f32.gmra.mxu0 %v4259
        %v4771 = vpop.f32.mrf.mxu0
        %v4772 = vadd.f32 %v4659, %v4771
        %4773 = vmatmul.f32.gmra.mxu0 %v4261
        %v4774 = vpop.f32.mrf.mxu0
        %v4775 = vadd.f32 %v4662, %v4774
        %4776 = vmatmul.f32.gmra.mxu0 %v4263
        %v4777 = vpop.f32.mrf.mxu0
        %v4778 = vadd.f32 %v4665, %v4777
        %4779 = vmatmul.f32.gmra.mxu0 %v4265
        %v4780 = vpop.f32.mrf.mxu0
        %v4781 = vadd.f32 %v4668, %v4780
        %4782 = vmatmul.f32.gmra.mxu0 %v4267
        %v4783 = vpop.f32.mrf.mxu0
        %v4784 = vadd.f32 %v4671, %v4783
        %4785 = vmatmul.f32.gmra.mxu0 %v4269
        %v4786 = vpop.f32.mrf.mxu0
        %v4787 = vadd.f32 %v4674, %v4786
        %4788 = vmatmul.f32.gmra.mxu0 %v4271
        %v4789 = vpop.f32.mrf.mxu0
        %v4790 = vadd.f32 %v4677, %v4789
        %4791 = vmatmul.f32.gmra.mxu0 %v4273
        %v4792 = vpop.f32.mrf.mxu0
        %v4793 = vadd.f32 %v4680, %v4792
        %4794 = vmatmul.f32.gmra.mxu0 %v4275
        %v4795 = vpop.f32.mrf.mxu0
        %v4796 = vadd.f32 %v4683, %v4795
        %4797 = vmatmul.f32.gmra.mxu0 %v4277
        %v4798 = vpop.f32.mrf.mxu0
        %v4799 = vadd.f32 %v4686, %v4798
        %4800 = vmatmul.f32.gmra.mxu0 %v4279
        %v4801 = vpop.f32.mrf.mxu0
        %v4802 = vadd.f32 %v4689, %v4801
        %4803 = vdwg.mxu0
        %v4804 = vmax.f32 %v4483, 0.0
        %v4805 = vmax.f32 %v4709, 0.0
        %v4806 = vmax.f32 %v4486, 0.0
        %v4807 = vmax.f32 %v4712, 0.0
        %v4808 = vmax.f32 %v4489, 0.0
        %v4809 = vmax.f32 %v4715, 0.0
        %v4810 = vmax.f32 %v4492, 0.0
        %v4811 = vmax.f32 %v4718, 0.0
        %v4812 = vmax.f32 %v4495, 0.0
        %v4813 = vmax.f32 %v4721, 0.0
        %v4814 = vmax.f32 %v4498, 0.0
        %v4815 = vmax.f32 %v4724, 0.0
        %v4816 = vmax.f32 %v4501, 0.0
        %v4817 = vmax.f32 %v4727, 0.0
        %v4818 = vmax.f32 %v4504, 0.0
        %v4819 = vmax.f32 %v4730, 0.0
        %v4820 = vmax.f32 %v4507, 0.0
        %v4821 = vmax.f32 %v4733, 0.0
        %v4822 = vmax.f32 %v4510, 0.0
        %v4823 = vmax.f32 %v4736, 0.0
        %v4824 = vmax.f32 %v4513, 0.0
        %v4825 = vmax.f32 %v4739, 0.0
        %v4826 = vmax.f32 %v4516, 0.0
        %v4827 = vmax.f32 %v4742, 0.0
        %v4828 = vmax.f32 %v4519, 0.0
        %v4829 = vmax.f32 %v4745, 0.0
        %v4830 = vmax.f32 %v4522, 0.0
        %v4831 = vmax.f32 %v4748, 0.0
        %v4832 = vmax.f32 %v4525, 0.0
        %v4833 = vmax.f32 %v4751, 0.0
        %v4834 = vmax.f32 %v4528, 0.0
        %v4835 = vmax.f32 %v4754, 0.0
        %v4836 = vmax.f32 %v4531, 0.0
        %v4837 = vmax.f32 %v4757, 0.0
        %v4838 = vmax.f32 %v4534, 0.0
        %v4839 = vmax.f32 %v4760, 0.0
        %v4840 = vmax.f32 %v4537, 0.0
        %v4841 = vmax.f32 %v4763, 0.0
        %v4842 = vmax.f32 %v4540, 0.0
        %v4843 = vmax.f32 %v4766, 0.0
        %v4844 = vmax.f32 %v4543, 0.0
        %v4845 = vmax.f32 %v4769, 0.0
        %v4846 = vmax.f32 %v4546, 0.0
        %v4847 = vmax.f32 %v4772, 0.0
        %v4848 = vmax.f32 %v4549, 0.0
        %v4849 = vmax.f32 %v4775, 0.0
        %v4850 = vmax.f32 %v4552, 0.0
        %v4851 = vmax.f32 %v4778, 0.0
        %v4852 = vmax.f32 %v4555, 0.0
        %v4853 = vmax.f32 %v4781, 0.0
        %v4854 = vmax.f32 %v4558, 0.0
        %v4855 = vmax.f32 %v4784, 0.0
        %v4856 = vmax.f32 %v4561, 0.0
        %v4857 = vmax.f32 %v4787, 0.0
        %v4858 = vmax.f32 %v4564, 0.0
        %v4859 = vmax.f32 %v4790, 0.0
        %v4860 = vmax.f32 %v4567, 0.0
        %v4861 = vmax.f32 %v4793, 0.0
        %v4862 = vmax.f32 %v4570, 0.0
        %v4863 = vmax.f32 %v4796, 0.0
        %v4864 = vmax.f32 %v4573, 0.0
        %v4865 = vmax.f32 %v4799, 0.0
        %v4866 = vmax.f32 %v4576, 0.0
        %v4867 = vmax.f32 %v4802, 0.0
        %v4868 = vld [vmem:[#allocation7] sm:$0x3]
        %v4870 = vperm.slane %v4868, 0
        %v4871 = vperm.slane %v4868, 1
        %v4874 = vmul.f32 %v4804, %v4870
        %v4875 = vmul.f32 %v4805, %v4871
        %v4876 = vmul.f32 %v4806, %v4870
        %v4877 = vmul.f32 %v4807, %v4871
        %v4878 = vmul.f32 %v4808, %v4870
        %v4879 = vmul.f32 %v4809, %v4871
        %v4880 = vmul.f32 %v4810, %v4870
        %v4881 = vmul.f32 %v4811, %v4871
        %v4882 = vmul.f32 %v4812, %v4870
        %v4883 = vmul.f32 %v4813, %v4871
        %v4884 = vmul.f32 %v4814, %v4870
        %v4885 = vmul.f32 %v4815, %v4871
        %v4886 = vmul.f32 %v4816, %v4870
        %v4887 = vmul.f32 %v4817, %v4871
        %v4888 = vmul.f32 %v4818, %v4870
        %v4889 = vmul.f32 %v4819, %v4871
        %v4890 = vmul.f32 %v4820, %v4870
        %v4891 = vmul.f32 %v4821, %v4871
        %v4892 = vmul.f32 %v4822, %v4870
        %v4893 = vmul.f32 %v4823, %v4871
        %v4894 = vmul.f32 %v4824, %v4870
        %v4895 = vmul.f32 %v4825, %v4871
        %v4896 = vmul.f32 %v4826, %v4870
        %v4897 = vmul.f32 %v4827, %v4871
        %v4898 = vmul.f32 %v4828, %v4870
        %v4899 = vmul.f32 %v4829, %v4871
        %v4900 = vmul.f32 %v4830, %v4870
        %v4901 = vmul.f32 %v4831, %v4871
        %v4902 = vmul.f32 %v4832, %v4870
        %v4903 = vmul.f32 %v4833, %v4871
        %v4904 = vmul.f32 %v4834, %v4870
        %v4905 = vmul.f32 %v4835, %v4871
        %v4906 = vmul.f32 %v4836, %v4870
        %v4907 = vmul.f32 %v4837, %v4871
        %v4908 = vmul.f32 %v4838, %v4870
        %v4909 = vmul.f32 %v4839, %v4871
        %v4910 = vmul.f32 %v4840, %v4870
        %v4911 = vmul.f32 %v4841, %v4871
        %v4912 = vmul.f32 %v4842, %v4870
        %v4913 = vmul.f32 %v4843, %v4871
        %v4914 = vmul.f32 %v4844, %v4870
        %v4915 = vmul.f32 %v4845, %v4871
        %v4916 = vmul.f32 %v4846, %v4870
        %v4917 = vmul.f32 %v4847, %v4871
        %v4918 = vmul.f32 %v4848, %v4870
        %v4919 = vmul.f32 %v4849, %v4871
        %v4920 = vmul.f32 %v4850, %v4870
        %v4921 = vmul.f32 %v4851, %v4871
        %v4922 = vmul.f32 %v4852, %v4870
        %v4923 = vmul.f32 %v4853, %v4871
        %v4924 = vmul.f32 %v4854, %v4870
        %v4925 = vmul.f32 %v4855, %v4871
        %v4926 = vmul.f32 %v4856, %v4870
        %v4927 = vmul.f32 %v4857, %v4871
        %v4928 = vmul.f32 %v4858, %v4870
        %v4929 = vmul.f32 %v4859, %v4871
        %v4930 = vmul.f32 %v4860, %v4870
        %v4931 = vmul.f32 %v4861, %v4871
        %v4932 = vmul.f32 %v4862, %v4870
        %v4933 = vmul.f32 %v4863, %v4871
        %v4934 = vmul.f32 %v4864, %v4870
        %v4935 = vmul.f32 %v4865, %v4871
        %v4936 = vmul.f32 %v4866, %v4870
        %v4937 = vmul.f32 %v4867, %v4871
        %v4938 = vadd.f32 %v4874, %v4875
        %4939 = vadd.xlane.f32.xlu0 %v4938
        %v4940 = vpop.xlane.xlu0 %4939
        %v4941 = vadd.f32 %v4876, %v4877
        %4942 = vadd.xlane.f32.xlu0 %v4941
        %v4943 = vpop.xlane.xlu0 %4942
        %v4944 = vadd.f32 %v4878, %v4879
        %4945 = vadd.xlane.f32.xlu0 %v4944
        %v4946 = vpop.xlane.xlu0 %4945
        %v4947 = vadd.f32 %v4880, %v4881
        %4948 = vadd.xlane.f32.xlu0 %v4947
        %v4949 = vpop.xlane.xlu0 %4948
        %v4950 = vadd.f32 %v4882, %v4883
        %4951 = vadd.xlane.f32.xlu0 %v4950
        %v4952 = vpop.xlane.xlu0 %4951
        %v4953 = vadd.f32 %v4884, %v4885
        %4954 = vadd.xlane.f32.xlu0 %v4953
        %v4955 = vpop.xlane.xlu0 %4954
        %v4956 = vadd.f32 %v4886, %v4887
        %4957 = vadd.xlane.f32.xlu0 %v4956
        %v4958 = vpop.xlane.xlu0 %4957
        %v4959 = vadd.f32 %v4888, %v4889
        %4960 = vadd.xlane.f32.xlu0 %v4959
        %v4961 = vpop.xlane.xlu0 %4960
        %v4962 = vadd.f32 %v4890, %v4891
        %4963 = vadd.xlane.f32.xlu0 %v4962
        %v4964 = vpop.xlane.xlu0 %4963
        %v4965 = vadd.f32 %v4892, %v4893
        %4966 = vadd.xlane.f32.xlu0 %v4965
        %v4967 = vpop.xlane.xlu0 %4966
        %v4968 = vadd.f32 %v4894, %v4895
        %4969 = vadd.xlane.f32.xlu0 %v4968
        %v4970 = vpop.xlane.xlu0 %4969
        %v4971 = vadd.f32 %v4896, %v4897
        %4972 = vadd.xlane.f32.xlu0 %v4971
        %v4973 = vpop.xlane.xlu0 %4972
        %v4974 = vadd.f32 %v4898, %v4899
        %4975 = vadd.xlane.f32.xlu0 %v4974
        %v4976 = vpop.xlane.xlu0 %4975
        %v4977 = vadd.f32 %v4900, %v4901
        %4978 = vadd.xlane.f32.xlu0 %v4977
        %v4979 = vpop.xlane.xlu0 %4978
        %v4980 = vadd.f32 %v4902, %v4903
        %4981 = vadd.xlane.f32.xlu0 %v4980
        %v4982 = vpop.xlane.xlu0 %4981
        %v4983 = vadd.f32 %v4904, %v4905
        %4984 = vadd.xlane.f32.xlu0 %v4983
        %v4985 = vpop.xlane.xlu0 %4984
        %v4986 = vadd.f32 %v4906, %v4907
        %4987 = vadd.xlane.f32.xlu0 %v4986
        %v4988 = vpop.xlane.xlu0 %4987
        %v4989 = vadd.f32 %v4908, %v4909
        %4990 = vadd.xlane.f32.xlu0 %v4989
        %v4991 = vpop.xlane.xlu0 %4990
        %v4992 = vadd.f32 %v4910, %v4911
        %4993 = vadd.xlane.f32.xlu0 %v4992
        %v4994 = vpop.xlane.xlu0 %4993
        %v4995 = vadd.f32 %v4912, %v4913
        %4996 = vadd.xlane.f32.xlu0 %v4995
        %v4997 = vpop.xlane.xlu0 %4996
        %v4998 = vadd.f32 %v4914, %v4915
        %4999 = vadd.xlane.f32.xlu0 %v4998
        %v5000 = vpop.xlane.xlu0 %4999
        %v5001 = vadd.f32 %v4916, %v4917
        %5002 = vadd.xlane.f32.xlu0 %v5001
        %v5003 = vpop.xlane.xlu0 %5002
        %v5004 = vadd.f32 %v4918, %v4919
        %5005 = vadd.xlane.f32.xlu0 %v5004
        %v5006 = vpop.xlane.xlu0 %5005
        %v5007 = vadd.f32 %v4920, %v4921
        %5008 = vadd.xlane.f32.xlu0 %v5007
        %v5009 = vpop.xlane.xlu0 %5008
        %v5010 = vadd.f32 %v4922, %v4923
        %5011 = vadd.xlane.f32.xlu0 %v5010
        %v5012 = vpop.xlane.xlu0 %5011
        %v5013 = vadd.f32 %v4924, %v4925
        %5014 = vadd.xlane.f32.xlu0 %v5013
        %v5015 = vpop.xlane.xlu0 %5014
        %v5016 = vadd.f32 %v4926, %v4927
        %5017 = vadd.xlane.f32.xlu0 %v5016
        %v5018 = vpop.xlane.xlu0 %5017
        %v5019 = vadd.f32 %v4928, %v4929
        %5020 = vadd.xlane.f32.xlu0 %v5019
        %v5021 = vpop.xlane.xlu0 %5020
        %v5022 = vadd.f32 %v4930, %v4931
        %5023 = vadd.xlane.f32.xlu0 %v5022
        %v5024 = vpop.xlane.xlu0 %5023
        %v5025 = vadd.f32 %v4932, %v4933
        %5026 = vadd.xlane.f32.xlu0 %v5025
        %v5027 = vpop.xlane.xlu0 %5026
        %v5028 = vadd.f32 %v4934, %v4935
        %5029 = vadd.xlane.f32.xlu0 %v5028
        %v5030 = vpop.xlane.xlu0 %5029
        %v5031 = vadd.f32 %v4936, %v4937
        %5032 = vadd.xlane.f32.xlu0 %v5031
        %v5033 = vpop.xlane.xlu0 %5032
        %v5034 = vld [vmem:[#allocation2] sm:$0x1]
        %5036 = vset.pattern.permute.xlu0 0
        %5037 = vperm.xlu0 %5036, %v5034
        %v5038 = vpop.permute.xlu0 %5037
        %v5040 = vperm.slane %v5038, 0
        %v5041 = vadd.f32 %v4940, %v5040
        %v5042 = vadd.f32 %v4943, %v5040
        %v5043 = vadd.f32 %v4946, %v5040
        %v5044 = vadd.f32 %v4949, %v5040
        %v5045 = vadd.f32 %v4952, %v5040
        %v5046 = vadd.f32 %v4955, %v5040
        %v5047 = vadd.f32 %v4958, %v5040
        %v5048 = vadd.f32 %v4961, %v5040
        %v5049 = vadd.f32 %v4964, %v5040
        %v5050 = vadd.f32 %v4967, %v5040
        %v5051 = vadd.f32 %v4970, %v5040
        %v5052 = vadd.f32 %v4973, %v5040
        %v5053 = vadd.f32 %v4976, %v5040
        %v5054 = vadd.f32 %v4979, %v5040
        %v5055 = vadd.f32 %v4982, %v5040
        %v5056 = vadd.f32 %v4985, %v5040
        %v5057 = vadd.f32 %v4988, %v5040
        %v5058 = vadd.f32 %v4991, %v5040
        %v5059 = vadd.f32 %v4994, %v5040
        %v5060 = vadd.f32 %v4997, %v5040
        %v5061 = vadd.f32 %v5000, %v5040
        %v5062 = vadd.f32 %v5003, %v5040
        %v5063 = vadd.f32 %v5006, %v5040
        %v5064 = vadd.f32 %v5009, %v5040
        %v5065 = vadd.f32 %v5012, %v5040
        %v5066 = vadd.f32 %v5015, %v5040
        %v5067 = vadd.f32 %v5018, %v5040
        %v5068 = vadd.f32 %v5021, %v5040
        %v5069 = vadd.f32 %v5024, %v5040
        %v5070 = vadd.f32 %v5027, %v5040
        %v5071 = vadd.f32 %v5030, %v5040
        %v5072 = vadd.f32 %v5033, %v5040
        %v5105 = vperm.slane %v5041, 0
        %v5106 = vperm.slane %v5041, 1
        %v5107 = vperm.slane %v5041, 2
        %v5108 = vperm.slane %v5041, 3
        %v5109 = vperm.slane %v5041, 4
        %v5110 = vperm.slane %v5041, 5
        %v5111 = vperm.slane %v5041, 6
        %v5112 = vperm.slane %v5041, 7
        %v5113 = vperm.slane %v5042, 0
        %v5114 = vperm.slane %v5042, 1
        %v5115 = vperm.slane %v5042, 2
        %v5116 = vperm.slane %v5042, 3
        %v5117 = vperm.slane %v5042, 4
        %v5118 = vperm.slane %v5042, 5
        %v5119 = vperm.slane %v5042, 6
        %v5120 = vperm.slane %v5042, 7
        %v5121 = vperm.slane %v5043, 0
        %v5122 = vperm.slane %v5043, 1
        %v5123 = vperm.slane %v5043, 2
        %v5124 = vperm.slane %v5043, 3
        %v5125 = vperm.slane %v5043, 4
        %v5126 = vperm.slane %v5043, 5
        %v5127 = vperm.slane %v5043, 6
        %v5128 = vperm.slane %v5043, 7
        %v5129 = vperm.slane %v5044, 0
        %v5130 = vperm.slane %v5044, 1
        %v5131 = vperm.slane %v5044, 2
        %v5132 = vperm.slane %v5044, 3
        %v5133 = vperm.slane %v5044, 4
        %v5134 = vperm.slane %v5044, 5
        %v5135 = vperm.slane %v5044, 6
        %v5136 = vperm.slane %v5044, 7
        %v5137 = vperm.slane %v5045, 0
        %v5138 = vperm.slane %v5045, 1
        %v5139 = vperm.slane %v5045, 2
        %v5140 = vperm.slane %v5045, 3
        %v5141 = vperm.slane %v5045, 4
        %v5142 = vperm.slane %v5045, 5
        %v5143 = vperm.slane %v5045, 6
        %v5144 = vperm.slane %v5045, 7
        %v5145 = vperm.slane %v5046, 0
        %v5146 = vperm.slane %v5046, 1
        %v5147 = vperm.slane %v5046, 2
        %v5148 = vperm.slane %v5046, 3
        %v5149 = vperm.slane %v5046, 4
        %v5150 = vperm.slane %v5046, 5
        %v5151 = vperm.slane %v5046, 6
        %v5152 = vperm.slane %v5046, 7
        %v5153 = vperm.slane %v5047, 0
        %v5154 = vperm.slane %v5047, 1
        %v5155 = vperm.slane %v5047, 2
        %v5156 = vperm.slane %v5047, 3
        %v5157 = vperm.slane %v5047, 4
        %v5158 = vperm.slane %v5047, 5
        %v5159 = vperm.slane %v5047, 6
        %v5160 = vperm.slane %v5047, 7
        %v5161 = vperm.slane %v5048, 0
        %v5162 = vperm.slane %v5048, 1
        %v5163 = vperm.slane %v5048, 2
        %v5164 = vperm.slane %v5048, 3
        %v5165 = vperm.slane %v5048, 4
        %v5166 = vperm.slane %v5048, 5
        %v5167 = vperm.slane %v5048, 6
        %v5168 = vperm.slane %v5048, 7
        %v5169 = vperm.slane %v5049, 0
        %v5170 = vperm.slane %v5049, 1
        %v5171 = vperm.slane %v5049, 2
        %v5172 = vperm.slane %v5049, 3
        %v5173 = vperm.slane %v5049, 4
        %v5174 = vperm.slane %v5049, 5
        %v5175 = vperm.slane %v5049, 6
        %v5176 = vperm.slane %v5049, 7
        %v5177 = vperm.slane %v5050, 0
        %v5178 = vperm.slane %v5050, 1
        %v5179 = vperm.slane %v5050, 2
        %v5180 = vperm.slane %v5050, 3
        %v5181 = vperm.slane %v5050, 4
        %v5182 = vperm.slane %v5050, 5
        %v5183 = vperm.slane %v5050, 6
        %v5184 = vperm.slane %v5050, 7
        %v5185 = vperm.slane %v5051, 0
        %v5186 = vperm.slane %v5051, 1
        %v5187 = vperm.slane %v5051, 2
        %v5188 = vperm.slane %v5051, 3
        %v5189 = vperm.slane %v5051, 4
        %v5190 = vperm.slane %v5051, 5
        %v5191 = vperm.slane %v5051, 6
        %v5192 = vperm.slane %v5051, 7
        %v5193 = vperm.slane %v5052, 0
        %v5194 = vperm.slane %v5052, 1
        %v5195 = vperm.slane %v5052, 2
        %v5196 = vperm.slane %v5052, 3
        %v5197 = vperm.slane %v5052, 4
        %v5198 = vperm.slane %v5052, 5
        %v5199 = vperm.slane %v5052, 6
        %v5200 = vperm.slane %v5052, 7
        %v5201 = vperm.slane %v5053, 0
        %v5202 = vperm.slane %v5053, 1
        %v5203 = vperm.slane %v5053, 2
        %v5204 = vperm.slane %v5053, 3
        %v5205 = vperm.slane %v5053, 4
        %v5206 = vperm.slane %v5053, 5
        %v5207 = vperm.slane %v5053, 6
        %v5208 = vperm.slane %v5053, 7
        %v5209 = vperm.slane %v5054, 0
        %v5210 = vperm.slane %v5054, 1
        %v5211 = vperm.slane %v5054, 2
        %v5212 = vperm.slane %v5054, 3
        %v5213 = vperm.slane %v5054, 4
        %v5214 = vperm.slane %v5054, 5
        %v5215 = vperm.slane %v5054, 6
        %v5216 = vperm.slane %v5054, 7
        %v5217 = vperm.slane %v5055, 0
        %v5218 = vperm.slane %v5055, 1
        %v5219 = vperm.slane %v5055, 2
        %v5220 = vperm.slane %v5055, 3
        %v5221 = vperm.slane %v5055, 4
        %v5222 = vperm.slane %v5055, 5
        %v5223 = vperm.slane %v5055, 6
        %v5224 = vperm.slane %v5055, 7
        %v5225 = vperm.slane %v5056, 0
        %v5226 = vperm.slane %v5056, 1
        %v5227 = vperm.slane %v5056, 2
        %v5228 = vperm.slane %v5056, 3
        %v5229 = vperm.slane %v5056, 4
        %v5230 = vperm.slane %v5056, 5
        %v5231 = vperm.slane %v5056, 6
        %v5232 = vperm.slane %v5056, 7
        %v5233 = vperm.slane %v5057, 0
        %v5234 = vperm.slane %v5057, 1
        %v5235 = vperm.slane %v5057, 2
        %v5236 = vperm.slane %v5057, 3
        %v5237 = vperm.slane %v5057, 4
        %v5238 = vperm.slane %v5057, 5
        %v5239 = vperm.slane %v5057, 6
        %v5240 = vperm.slane %v5057, 7
        %v5241 = vperm.slane %v5058, 0
        %v5242 = vperm.slane %v5058, 1
        %v5243 = vperm.slane %v5058, 2
        %v5244 = vperm.slane %v5058, 3
        %v5245 = vperm.slane %v5058, 4
        %v5246 = vperm.slane %v5058, 5
        %v5247 = vperm.slane %v5058, 6
        %v5248 = vperm.slane %v5058, 7
        %v5249 = vperm.slane %v5059, 0
        %v5250 = vperm.slane %v5059, 1
        %v5251 = vperm.slane %v5059, 2
        %v5252 = vperm.slane %v5059, 3
        %v5253 = vperm.slane %v5059, 4
        %v5254 = vperm.slane %v5059, 5
        %v5255 = vperm.slane %v5059, 6
        %v5256 = vperm.slane %v5059, 7
        %v5257 = vperm.slane %v5060, 0
        %v5258 = vperm.slane %v5060, 1
        %v5259 = vperm.slane %v5060, 2
        %v5260 = vperm.slane %v5060, 3
        %v5261 = vperm.slane %v5060, 4
        %v5262 = vperm.slane %v5060, 5
        %v5263 = vperm.slane %v5060, 6
        %v5264 = vperm.slane %v5060, 7
        %v5265 = vperm.slane %v5061, 0
        %v5266 = vperm.slane %v5061, 1
        %v5267 = vperm.slane %v5061, 2
        %v5268 = vperm.slane %v5061, 3
        %v5269 = vperm.slane %v5061, 4
        %v5270 = vperm.slane %v5061, 5
        %v5271 = vperm.slane %v5061, 6
        %v5272 = vperm.slane %v5061, 7
        %v5273 = vperm.slane %v5062, 0
        %v5274 = vperm.slane %v5062, 1
        %v5275 = vperm.slane %v5062, 2
        %v5276 = vperm.slane %v5062, 3
        %v5277 = vperm.slane %v5062, 4
        %v5278 = vperm.slane %v5062, 5
        %v5279 = vperm.slane %v5062, 6
        %v5280 = vperm.slane %v5062, 7
        %v5281 = vperm.slane %v5063, 0
        %v5282 = vperm.slane %v5063, 1
        %v5283 = vperm.slane %v5063, 2
        %v5284 = vperm.slane %v5063, 3
        %v5285 = vperm.slane %v5063, 4
        %v5286 = vperm.slane %v5063, 5
        %v5287 = vperm.slane %v5063, 6
        %v5288 = vperm.slane %v5063, 7
        %v5289 = vperm.slane %v5064, 0
        %v5290 = vperm.slane %v5064, 1
        %v5291 = vperm.slane %v5064, 2
        %v5292 = vperm.slane %v5064, 3
        %v5293 = vperm.slane %v5064, 4
        %v5294 = vperm.slane %v5064, 5
        %v5295 = vperm.slane %v5064, 6
        %v5296 = vperm.slane %v5064, 7
        %v5297 = vperm.slane %v5065, 0
        %v5298 = vperm.slane %v5065, 1
        %v5299 = vperm.slane %v5065, 2
        %v5300 = vperm.slane %v5065, 3
        %v5301 = vperm.slane %v5065, 4
        %v5302 = vperm.slane %v5065, 5
        %v5303 = vperm.slane %v5065, 6
        %v5304 = vperm.slane %v5065, 7
        %v5305 = vperm.slane %v5066, 0
        %v5306 = vperm.slane %v5066, 1
        %v5307 = vperm.slane %v5066, 2
        %v5308 = vperm.slane %v5066, 3
        %v5309 = vperm.slane %v5066, 4
        %v5310 = vperm.slane %v5066, 5
        %v5311 = vperm.slane %v5066, 6
        %v5312 = vperm.slane %v5066, 7
        %v5313 = vperm.slane %v5067, 0
        %v5314 = vperm.slane %v5067, 1
        %v5315 = vperm.slane %v5067, 2
        %v5316 = vperm.slane %v5067, 3
        %v5317 = vperm.slane %v5067, 4
        %v5318 = vperm.slane %v5067, 5
        %v5319 = vperm.slane %v5067, 6
        %v5320 = vperm.slane %v5067, 7
        %v5321 = vperm.slane %v5068, 0
        %v5322 = vperm.slane %v5068, 1
        %v5323 = vperm.slane %v5068, 2
        %v5324 = vperm.slane %v5068, 3
        %v5325 = vperm.slane %v5068, 4
        %v5326 = vperm.slane %v5068, 5
        %v5327 = vperm.slane %v5068, 6
        %v5328 = vperm.slane %v5068, 7
        %v5329 = vperm.slane %v5069, 0
        %v5330 = vperm.slane %v5069, 1
        %v5331 = vperm.slane %v5069, 2
        %v5332 = vperm.slane %v5069, 3
        %v5333 = vperm.slane %v5069, 4
        %v5334 = vperm.slane %v5069, 5
        %v5335 = vperm.slane %v5069, 6
        %v5336 = vperm.slane %v5069, 7
        %v5337 = vperm.slane %v5070, 0
        %v5338 = vperm.slane %v5070, 1
        %v5339 = vperm.slane %v5070, 2
        %v5340 = vperm.slane %v5070, 3
        %v5341 = vperm.slane %v5070, 4
        %v5342 = vperm.slane %v5070, 5
        %v5343 = vperm.slane %v5070, 6
        %v5344 = vperm.slane %v5070, 7
        %v5345 = vperm.slane %v5071, 0
        %v5346 = vperm.slane %v5071, 1
        %v5347 = vperm.slane %v5071, 2
        %v5348 = vperm.slane %v5071, 3
        %v5349 = vperm.slane %v5071, 4
        %v5350 = vperm.slane %v5071, 5
        %v5351 = vperm.slane %v5071, 6
        %v5352 = vperm.slane %v5071, 7
        %v5353 = vperm.slane %v5072, 0
        %v5354 = vperm.slane %v5072, 1
        %v5355 = vperm.slane %v5072, 2
        %v5356 = vperm.slane %v5072, 3
        %v5357 = vperm.slane %v5072, 4
        %v5358 = vperm.slane %v5072, 5
        %v5359 = vperm.slane %v5072, 6
        %v5360 = vperm.slane %v5072, 7
        %5361 = vst [vmem:[#allocation1] ss:$9 sm:$0xff] %v5105
        %s5362 = scalar_lea.vmem [#allocation1], 1
        %5363 = vst [vmem:[%s5362] ss:$9 sm:$0xff] %v5106
        %s5364 = scalar_lea.vmem [#allocation1], 2
        %5365 = vst [vmem:[%s5364] ss:$9 sm:$0xff] %v5107
        %s5366 = scalar_lea.vmem [#allocation1], 3
        %5367 = vst [vmem:[%s5366] ss:$9 sm:$0xff] %v5108
        %s5368 = scalar_lea.vmem [#allocation1], 4
        %5369 = vst [vmem:[%s5368] ss:$9 sm:$0xff] %v5109
        %s5370 = scalar_lea.vmem [#allocation1], 5
        %5371 = vst [vmem:[%s5370] ss:$9 sm:$0xff] %v5110
        %s5372 = scalar_lea.vmem [#allocation1], 6
        %5373 = vst [vmem:[%s5372] ss:$9 sm:$0xff] %v5111
        %s5374 = scalar_lea.vmem [#allocation1], 7
        %5375 = vst [vmem:[%s5374] ss:$9 sm:$0xff] %v5112
        %v5376 = vld [vmem:[#allocation1] sm:$0xff]
        %5377 = vst [vmem:[#allocation1] ss:$9 sm:$0xff] %v5113
        %5378 = vst [vmem:[%s5362] ss:$9 sm:$0xff] %v5114
        %5379 = vst [vmem:[%s5364] ss:$9 sm:$0xff] %v5115
        %5380 = vst [vmem:[%s5366] ss:$9 sm:$0xff] %v5116
        %5381 = vst [vmem:[%s5368] ss:$9 sm:$0xff] %v5117
        %5382 = vst [vmem:[%s5370] ss:$9 sm:$0xff] %v5118
        %5383 = vst [vmem:[%s5372] ss:$9 sm:$0xff] %v5119
        %5384 = vst [vmem:[%s5374] ss:$9 sm:$0xff] %v5120
        %v5385 = vld [vmem:[#allocation1] sm:$0xff]
        %5386 = vst [vmem:[#allocation1] ss:$9 sm:$0xff] %v5121
        %5387 = vst [vmem:[%s5362] ss:$9 sm:$0xff] %v5122
        %5388 = vst [vmem:[%s5364] ss:$9 sm:$0xff] %v5123
        %5389 = vst [vmem:[%s5366] ss:$9 sm:$0xff] %v5124
        %5390 = vst [vmem:[%s5368] ss:$9 sm:$0xff] %v5125
        %5391 = vst [vmem:[%s5370] ss:$9 sm:$0xff] %v5126
        %5392 = vst [vmem:[%s5372] ss:$9 sm:$0xff] %v5127
        %5393 = vst [vmem:[%s5374] ss:$9 sm:$0xff] %v5128
        %v5394 = vld [vmem:[#allocation1] sm:$0xff]
        %5395 = vst [vmem:[#allocation1] ss:$9 sm:$0xff] %v5129
        %5396 = vst [vmem:[%s5362] ss:$9 sm:$0xff] %v5130
        %5397 = vst [vmem:[%s5364] ss:$9 sm:$0xff] %v5131
        %5398 = vst [vmem:[%s5366] ss:$9 sm:$0xff] %v5132
        %5399 = vst [vmem:[%s5368] ss:$9 sm:$0xff] %v5133
        %5400 = vst [vmem:[%s5370] ss:$9 sm:$0xff] %v5134
        %5401 = vst [vmem:[%s5372] ss:$9 sm:$0xff] %v5135
        %5402 = vst [vmem:[%s5374] ss:$9 sm:$0xff] %v5136
        %v5403 = vld [vmem:[#allocation1] sm:$0xff]
        %5404 = vst [vmem:[#allocation1] ss:$9 sm:$0xff] %v5137
        %5405 = vst [vmem:[%s5362] ss:$9 sm:$0xff] %v5138
        %5406 = vst [vmem:[%s5364] ss:$9 sm:$0xff] %v5139
        %5407 = vst [vmem:[%s5366] ss:$9 sm:$0xff] %v5140
        %5408 = vst [vmem:[%s5368] ss:$9 sm:$0xff] %v5141
        %5409 = vst [vmem:[%s5370] ss:$9 sm:$0xff] %v5142
        %5410 = vst [vmem:[%s5372] ss:$9 sm:$0xff] %v5143
        %5411 = vst [vmem:[%s5374] ss:$9 sm:$0xff] %v5144
        %v5412 = vld [vmem:[#allocation1] sm:$0xff]
        %5413 = vst [vmem:[#allocation1] ss:$9 sm:$0xff] %v5145
        %5414 = vst [vmem:[%s5362] ss:$9 sm:$0xff] %v5146
        %5415 = vst [vmem:[%s5364] ss:$9 sm:$0xff] %v5147
        %5416 = vst [vmem:[%s5366] ss:$9 sm:$0xff] %v5148
        %5417 = vst [vmem:[%s5368] ss:$9 sm:$0xff] %v5149
        %5418 = vst [vmem:[%s5370] ss:$9 sm:$0xff] %v5150
        %5419 = vst [vmem:[%s5372] ss:$9 sm:$0xff] %v5151
        %5420 = vst [vmem:[%s5374] ss:$9 sm:$0xff] %v5152
        %v5421 = vld [vmem:[#allocation1] sm:$0xff]
        %5422 = vst [vmem:[#allocation1] ss:$9 sm:$0xff] %v5153
        %5423 = vst [vmem:[%s5362] ss:$9 sm:$0xff] %v5154
        %5424 = vst [vmem:[%s5364] ss:$9 sm:$0xff] %v5155
        %5425 = vst [vmem:[%s5366] ss:$9 sm:$0xff] %v5156
        %5426 = vst [vmem:[%s5368] ss:$9 sm:$0xff] %v5157
        %5427 = vst [vmem:[%s5370] ss:$9 sm:$0xff] %v5158
        %5428 = vst [vmem:[%s5372] ss:$9 sm:$0xff] %v5159
        %5429 = vst [vmem:[%s5374] ss:$9 sm:$0xff] %v5160
        %v5430 = vld [vmem:[#allocation1] sm:$0xff]
        %5431 = vst [vmem:[#allocation1] ss:$9 sm:$0xff] %v5161
        %5432 = vst [vmem:[%s5362] ss:$9 sm:$0xff] %v5162
        %5433 = vst [vmem:[%s5364] ss:$9 sm:$0xff] %v5163
        %5434 = vst [vmem:[%s5366] ss:$9 sm:$0xff] %v5164
        %5435 = vst [vmem:[%s5368] ss:$9 sm:$0xff] %v5165
        %5436 = vst [vmem:[%s5370] ss:$9 sm:$0xff] %v5166
        %5437 = vst [vmem:[%s5372] ss:$9 sm:$0xff] %v5167
        %5438 = vst [vmem:[%s5374] ss:$9 sm:$0xff] %v5168
        %v5439 = vld [vmem:[#allocation1] sm:$0xff]
        %5440 = vst [vmem:[#allocation1] ss:$9 sm:$0xff] %v5169
        %5441 = vst [vmem:[%s5362] ss:$9 sm:$0xff] %v5170
        %5442 = vst [vmem:[%s5364] ss:$9 sm:$0xff] %v5171
        %5443 = vst [vmem:[%s5366] ss:$9 sm:$0xff] %v5172
        %5444 = vst [vmem:[%s5368] ss:$9 sm:$0xff] %v5173
        %5445 = vst [vmem:[%s5370] ss:$9 sm:$0xff] %v5174
        %5446 = vst [vmem:[%s5372] ss:$9 sm:$0xff] %v5175
        %5447 = vst [vmem:[%s5374] ss:$9 sm:$0xff] %v5176
        %v5448 = vld [vmem:[#allocation1] sm:$0xff]
        %5449 = vst [vmem:[#allocation1] ss:$9 sm:$0xff] %v5177
        %5450 = vst [vmem:[%s5362] ss:$9 sm:$0xff] %v5178
        %5451 = vst [vmem:[%s5364] ss:$9 sm:$0xff] %v5179
        %5452 = vst [vmem:[%s5366] ss:$9 sm:$0xff] %v5180
        %5453 = vst [vmem:[%s5368] ss:$9 sm:$0xff] %v5181
        %5454 = vst [vmem:[%s5370] ss:$9 sm:$0xff] %v5182
        %5455 = vst [vmem:[%s5372] ss:$9 sm:$0xff] %v5183
        %5456 = vst [vmem:[%s5374] ss:$9 sm:$0xff] %v5184
        %v5457 = vld [vmem:[#allocation1] sm:$0xff]
        %5458 = vst [vmem:[#allocation1] ss:$9 sm:$0xff] %v5185
        %5459 = vst [vmem:[%s5362] ss:$9 sm:$0xff] %v5186
        %5460 = vst [vmem:[%s5364] ss:$9 sm:$0xff] %v5187
        %5461 = vst [vmem:[%s5366] ss:$9 sm:$0xff] %v5188
        %5462 = vst [vmem:[%s5368] ss:$9 sm:$0xff] %v5189
        %5463 = vst [vmem:[%s5370] ss:$9 sm:$0xff] %v5190
        %5464 = vst [vmem:[%s5372] ss:$9 sm:$0xff] %v5191
        %5465 = vst [vmem:[%s5374] ss:$9 sm:$0xff] %v5192
        %v5466 = vld [vmem:[#allocation1] sm:$0xff]
        %5467 = vst [vmem:[#allocation1] ss:$9 sm:$0xff] %v5193
        %5468 = vst [vmem:[%s5362] ss:$9 sm:$0xff] %v5194
        %5469 = vst [vmem:[%s5364] ss:$9 sm:$0xff] %v5195
        %5470 = vst [vmem:[%s5366] ss:$9 sm:$0xff] %v5196
        %5471 = vst [vmem:[%s5368] ss:$9 sm:$0xff] %v5197
        %5472 = vst [vmem:[%s5370] ss:$9 sm:$0xff] %v5198
        %5473 = vst [vmem:[%s5372] ss:$9 sm:$0xff] %v5199
        %5474 = vst [vmem:[%s5374] ss:$9 sm:$0xff] %v5200
        %v5475 = vld [vmem:[#allocation1] sm:$0xff]
        %5476 = vst [vmem:[#allocation1] ss:$9 sm:$0xff] %v5201
        %5477 = vst [vmem:[%s5362] ss:$9 sm:$0xff] %v5202
        %5478 = vst [vmem:[%s5364] ss:$9 sm:$0xff] %v5203
        %5479 = vst [vmem:[%s5366] ss:$9 sm:$0xff] %v5204
        %5480 = vst [vmem:[%s5368] ss:$9 sm:$0xff] %v5205
        %5481 = vst [vmem:[%s5370] ss:$9 sm:$0xff] %v5206
        %5482 = vst [vmem:[%s5372] ss:$9 sm:$0xff] %v5207
        %5483 = vst [vmem:[%s5374] ss:$9 sm:$0xff] %v5208
        %v5484 = vld [vmem:[#allocation1] sm:$0xff]
        %5485 = vst [vmem:[#allocation1] ss:$9 sm:$0xff] %v5209
        %5486 = vst [vmem:[%s5362] ss:$9 sm:$0xff] %v5210
        %5487 = vst [vmem:[%s5364] ss:$9 sm:$0xff] %v5211
        %5488 = vst [vmem:[%s5366] ss:$9 sm:$0xff] %v5212
        %5489 = vst [vmem:[%s5368] ss:$9 sm:$0xff] %v5213
        %5490 = vst [vmem:[%s5370] ss:$9 sm:$0xff] %v5214
        %5491 = vst [vmem:[%s5372] ss:$9 sm:$0xff] %v5215
        %5492 = vst [vmem:[%s5374] ss:$9 sm:$0xff] %v5216
        %v5493 = vld [vmem:[#allocation1] sm:$0xff]
        %5494 = vst [vmem:[#allocation1] ss:$9 sm:$0xff] %v5217
        %5495 = vst [vmem:[%s5362] ss:$9 sm:$0xff] %v5218
        %5496 = vst [vmem:[%s5364] ss:$9 sm:$0xff] %v5219
        %5497 = vst [vmem:[%s5366] ss:$9 sm:$0xff] %v5220
        %5498 = vst [vmem:[%s5368] ss:$9 sm:$0xff] %v5221
        %5499 = vst [vmem:[%s5370] ss:$9 sm:$0xff] %v5222
        %5500 = vst [vmem:[%s5372] ss:$9 sm:$0xff] %v5223
        %5501 = vst [vmem:[%s5374] ss:$9 sm:$0xff] %v5224
        %v5502 = vld [vmem:[#allocation1] sm:$0xff]
        %5503 = vst [vmem:[#allocation1] ss:$9 sm:$0xff] %v5225
        %5504 = vst [vmem:[%s5362] ss:$9 sm:$0xff] %v5226
        %5505 = vst [vmem:[%s5364] ss:$9 sm:$0xff] %v5227
        %5506 = vst [vmem:[%s5366] ss:$9 sm:$0xff] %v5228
        %5507 = vst [vmem:[%s5368] ss:$9 sm:$0xff] %v5229
        %5508 = vst [vmem:[%s5370] ss:$9 sm:$0xff] %v5230
        %5509 = vst [vmem:[%s5372] ss:$9 sm:$0xff] %v5231
        %5510 = vst [vmem:[%s5374] ss:$9 sm:$0xff] %v5232
        %v5511 = vld [vmem:[#allocation1] sm:$0xff]
        %5512 = vst [vmem:[#allocation1] ss:$9 sm:$0xff] %v5233
        %5513 = vst [vmem:[%s5362] ss:$9 sm:$0xff] %v5234
        %5514 = vst [vmem:[%s5364] ss:$9 sm:$0xff] %v5235
        %5515 = vst [vmem:[%s5366] ss:$9 sm:$0xff] %v5236
        %5516 = vst [vmem:[%s5368] ss:$9 sm:$0xff] %v5237
        %5517 = vst [vmem:[%s5370] ss:$9 sm:$0xff] %v5238
        %5518 = vst [vmem:[%s5372] ss:$9 sm:$0xff] %v5239
        %5519 = vst [vmem:[%s5374] ss:$9 sm:$0xff] %v5240
        %v5520 = vld [vmem:[#allocation1] sm:$0xff]
        %5521 = vst [vmem:[#allocation1] ss:$9 sm:$0xff] %v5241
        %5522 = vst [vmem:[%s5362] ss:$9 sm:$0xff] %v5242
        %5523 = vst [vmem:[%s5364] ss:$9 sm:$0xff] %v5243
        %5524 = vst [vmem:[%s5366] ss:$9 sm:$0xff] %v5244
        %5525 = vst [vmem:[%s5368] ss:$9 sm:$0xff] %v5245
        %5526 = vst [vmem:[%s5370] ss:$9 sm:$0xff] %v5246
        %5527 = vst [vmem:[%s5372] ss:$9 sm:$0xff] %v5247
        %5528 = vst [vmem:[%s5374] ss:$9 sm:$0xff] %v5248
        %v5529 = vld [vmem:[#allocation1] sm:$0xff]
        %5530 = vst [vmem:[#allocation1] ss:$9 sm:$0xff] %v5249
        %5531 = vst [vmem:[%s5362] ss:$9 sm:$0xff] %v5250
        %5532 = vst [vmem:[%s5364] ss:$9 sm:$0xff] %v5251
        %5533 = vst [vmem:[%s5366] ss:$9 sm:$0xff] %v5252
        %5534 = vst [vmem:[%s5368] ss:$9 sm:$0xff] %v5253
        %5535 = vst [vmem:[%s5370] ss:$9 sm:$0xff] %v5254
        %5536 = vst [vmem:[%s5372] ss:$9 sm:$0xff] %v5255
        %5537 = vst [vmem:[%s5374] ss:$9 sm:$0xff] %v5256
        %v5538 = vld [vmem:[#allocation1] sm:$0xff]
        %5539 = vst [vmem:[#allocation1] ss:$9 sm:$0xff] %v5257
        %5540 = vst [vmem:[%s5362] ss:$9 sm:$0xff] %v5258
        %5541 = vst [vmem:[%s5364] ss:$9 sm:$0xff] %v5259
        %5542 = vst [vmem:[%s5366] ss:$9 sm:$0xff] %v5260
        %5543 = vst [vmem:[%s5368] ss:$9 sm:$0xff] %v5261
        %5544 = vst [vmem:[%s5370] ss:$9 sm:$0xff] %v5262
        %5545 = vst [vmem:[%s5372] ss:$9 sm:$0xff] %v5263
        %5546 = vst [vmem:[%s5374] ss:$9 sm:$0xff] %v5264
        %v5547 = vld [vmem:[#allocation1] sm:$0xff]
        %5548 = vst [vmem:[#allocation1] ss:$9 sm:$0xff] %v5265
        %5549 = vst [vmem:[%s5362] ss:$9 sm:$0xff] %v5266
        %5550 = vst [vmem:[%s5364] ss:$9 sm:$0xff] %v5267
        %5551 = vst [vmem:[%s5366] ss:$9 sm:$0xff] %v5268
        %5552 = vst [vmem:[%s5368] ss:$9 sm:$0xff] %v5269
        %5553 = vst [vmem:[%s5370] ss:$9 sm:$0xff] %v5270
        %5554 = vst [vmem:[%s5372] ss:$9 sm:$0xff] %v5271
        %5555 = vst [vmem:[%s5374] ss:$9 sm:$0xff] %v5272
        %v5556 = vld [vmem:[#allocation1] sm:$0xff]
        %5557 = vst [vmem:[#allocation1] ss:$9 sm:$0xff] %v5273
        %5558 = vst [vmem:[%s5362] ss:$9 sm:$0xff] %v5274
        %5559 = vst [vmem:[%s5364] ss:$9 sm:$0xff] %v5275
        %5560 = vst [vmem:[%s5366] ss:$9 sm:$0xff] %v5276
        %5561 = vst [vmem:[%s5368] ss:$9 sm:$0xff] %v5277
        %5562 = vst [vmem:[%s5370] ss:$9 sm:$0xff] %v5278
        %5563 = vst [vmem:[%s5372] ss:$9 sm:$0xff] %v5279
        %5564 = vst [vmem:[%s5374] ss:$9 sm:$0xff] %v5280
        %v5565 = vld [vmem:[#allocation1] sm:$0xff]
        %5566 = vst [vmem:[#allocation1] ss:$9 sm:$0xff] %v5281
        %5567 = vst [vmem:[%s5362] ss:$9 sm:$0xff] %v5282
        %5568 = vst [vmem:[%s5364] ss:$9 sm:$0xff] %v5283
        %5569 = vst [vmem:[%s5366] ss:$9 sm:$0xff] %v5284
        %5570 = vst [vmem:[%s5368] ss:$9 sm:$0xff] %v5285
        %5571 = vst [vmem:[%s5370] ss:$9 sm:$0xff] %v5286
        %5572 = vst [vmem:[%s5372] ss:$9 sm:$0xff] %v5287
        %5573 = vst [vmem:[%s5374] ss:$9 sm:$0xff] %v5288
        %v5574 = vld [vmem:[#allocation1] sm:$0xff]
        %5575 = vst [vmem:[#allocation1] ss:$9 sm:$0xff] %v5289
        %5576 = vst [vmem:[%s5362] ss:$9 sm:$0xff] %v5290
        %5577 = vst [vmem:[%s5364] ss:$9 sm:$0xff] %v5291
        %5578 = vst [vmem:[%s5366] ss:$9 sm:$0xff] %v5292
        %5579 = vst [vmem:[%s5368] ss:$9 sm:$0xff] %v5293
        %5580 = vst [vmem:[%s5370] ss:$9 sm:$0xff] %v5294
        %5581 = vst [vmem:[%s5372] ss:$9 sm:$0xff] %v5295
        %5582 = vst [vmem:[%s5374] ss:$9 sm:$0xff] %v5296
        %v5583 = vld [vmem:[#allocation1] sm:$0xff]
        %5584 = vst [vmem:[#allocation1] ss:$9 sm:$0xff] %v5297
        %5585 = vst [vmem:[%s5362] ss:$9 sm:$0xff] %v5298
        %5586 = vst [vmem:[%s5364] ss:$9 sm:$0xff] %v5299
        %5587 = vst [vmem:[%s5366] ss:$9 sm:$0xff] %v5300
        %5588 = vst [vmem:[%s5368] ss:$9 sm:$0xff] %v5301
        %5589 = vst [vmem:[%s5370] ss:$9 sm:$0xff] %v5302
        %5590 = vst [vmem:[%s5372] ss:$9 sm:$0xff] %v5303
        %5591 = vst [vmem:[%s5374] ss:$9 sm:$0xff] %v5304
        %v5592 = vld [vmem:[#allocation1] sm:$0xff]
        %5593 = vst [vmem:[#allocation1] ss:$9 sm:$0xff] %v5305
        %5594 = vst [vmem:[%s5362] ss:$9 sm:$0xff] %v5306
        %5595 = vst [vmem:[%s5364] ss:$9 sm:$0xff] %v5307
        %5596 = vst [vmem:[%s5366] ss:$9 sm:$0xff] %v5308
        %5597 = vst [vmem:[%s5368] ss:$9 sm:$0xff] %v5309
        %5598 = vst [vmem:[%s5370] ss:$9 sm:$0xff] %v5310
        %5599 = vst [vmem:[%s5372] ss:$9 sm:$0xff] %v5311
        %5600 = vst [vmem:[%s5374] ss:$9 sm:$0xff] %v5312
        %v5601 = vld [vmem:[#allocation1] sm:$0xff]
        %5602 = vst [vmem:[#allocation1] ss:$9 sm:$0xff] %v5313
        %5603 = vst [vmem:[%s5362] ss:$9 sm:$0xff] %v5314
        %5604 = vst [vmem:[%s5364] ss:$9 sm:$0xff] %v5315
        %5605 = vst [vmem:[%s5366] ss:$9 sm:$0xff] %v5316
        %5606 = vst [vmem:[%s5368] ss:$9 sm:$0xff] %v5317
        %5607 = vst [vmem:[%s5370] ss:$9 sm:$0xff] %v5318
        %5608 = vst [vmem:[%s5372] ss:$9 sm:$0xff] %v5319
        %5609 = vst [vmem:[%s5374] ss:$9 sm:$0xff] %v5320
        %v5610 = vld [vmem:[#allocation1] sm:$0xff]
        %5611 = vst [vmem:[#allocation1] ss:$9 sm:$0xff] %v5321
        %5612 = vst [vmem:[%s5362] ss:$9 sm:$0xff] %v5322
        %5613 = vst [vmem:[%s5364] ss:$9 sm:$0xff] %v5323
        %5614 = vst [vmem:[%s5366] ss:$9 sm:$0xff] %v5324
        %5615 = vst [vmem:[%s5368] ss:$9 sm:$0xff] %v5325
        %5616 = vst [vmem:[%s5370] ss:$9 sm:$0xff] %v5326
        %5617 = vst [vmem:[%s5372] ss:$9 sm:$0xff] %v5327
        %5618 = vst [vmem:[%s5374] ss:$9 sm:$0xff] %v5328
        %v5619 = vld [vmem:[#allocation1] sm:$0xff]
        %5620 = vst [vmem:[#allocation1] ss:$9 sm:$0xff] %v5329
        %5621 = vst [vmem:[%s5362] ss:$9 sm:$0xff] %v5330
        %5622 = vst [vmem:[%s5364] ss:$9 sm:$0xff] %v5331
        %5623 = vst [vmem:[%s5366] ss:$9 sm:$0xff] %v5332
        %5624 = vst [vmem:[%s5368] ss:$9 sm:$0xff] %v5333
        %5625 = vst [vmem:[%s5370] ss:$9 sm:$0xff] %v5334
        %5626 = vst [vmem:[%s5372] ss:$9 sm:$0xff] %v5335
        %5627 = vst [vmem:[%s5374] ss:$9 sm:$0xff] %v5336
        %v5628 = vld [vmem:[#allocation1] sm:$0xff]
        %5629 = vst [vmem:[#allocation1] ss:$9 sm:$0xff] %v5337
        %5630 = vst [vmem:[%s5362] ss:$9 sm:$0xff] %v5338
        %5631 = vst [vmem:[%s5364] ss:$9 sm:$0xff] %v5339
        %5632 = vst [vmem:[%s5366] ss:$9 sm:$0xff] %v5340
        %5633 = vst [vmem:[%s5368] ss:$9 sm:$0xff] %v5341
        %5634 = vst [vmem:[%s5370] ss:$9 sm:$0xff] %v5342
        %5635 = vst [vmem:[%s5372] ss:$9 sm:$0xff] %v5343
        %5636 = vst [vmem:[%s5374] ss:$9 sm:$0xff] %v5344
        %v5637 = vld [vmem:[#allocation1] sm:$0xff]
        %5638 = vst [vmem:[#allocation1] ss:$9 sm:$0xff] %v5345
        %5639 = vst [vmem:[%s5362] ss:$9 sm:$0xff] %v5346
        %5640 = vst [vmem:[%s5364] ss:$9 sm:$0xff] %v5347
        %5641 = vst [vmem:[%s5366] ss:$9 sm:$0xff] %v5348
        %5642 = vst [vmem:[%s5368] ss:$9 sm:$0xff] %v5349
        %5643 = vst [vmem:[%s5370] ss:$9 sm:$0xff] %v5350
        %5644 = vst [vmem:[%s5372] ss:$9 sm:$0xff] %v5351
        %5645 = vst [vmem:[%s5374] ss:$9 sm:$0xff] %v5352
        %v5646 = vld [vmem:[#allocation1] sm:$0xff]
        %5647 = vst [vmem:[#allocation1] ss:$9 sm:$0xff] %v5353
        %5648 = vst [vmem:[%s5362] ss:$9 sm:$0xff] %v5354
        %5649 = vst [vmem:[%s5364] ss:$9 sm:$0xff] %v5355
        %5650 = vst [vmem:[%s5366] ss:$9 sm:$0xff] %v5356
        %5651 = vst [vmem:[%s5368] ss:$9 sm:$0xff] %v5357
        %5652 = vst [vmem:[%s5370] ss:$9 sm:$0xff] %v5358
        %5653 = vst [vmem:[%s5372] ss:$9 sm:$0xff] %v5359
        %5654 = vst [vmem:[%s5374] ss:$9 sm:$0xff] %v5360
        %v5655 = vld [vmem:[#allocation1] sm:$0xff]
        %5656 = vset.pattern.permute.xlu0 0
        %5657 = vperm.xlu0 %5656, %v5376
        %v5658 = vpop.permute.xlu0 %5657
        %5659 = vset.pattern.permute.xlu0 0
        %5660 = vperm.xlu0 %5659, %v5385
        %v5661 = vpop.permute.xlu0 %5660
        %5662 = vset.pattern.permute.xlu0 0
        %5663 = vperm.xlu0 %5662, %v5394
        %v5664 = vpop.permute.xlu0 %5663
        %5665 = vset.pattern.permute.xlu0 0
        %5666 = vperm.xlu0 %5665, %v5403
        %v5667 = vpop.permute.xlu0 %5666
        %5668 = vset.pattern.permute.xlu0 0
        %5669 = vperm.xlu0 %5668, %v5412
        %v5670 = vpop.permute.xlu0 %5669
        %5671 = vset.pattern.permute.xlu0 0
        %5672 = vperm.xlu0 %5671, %v5421
        %v5673 = vpop.permute.xlu0 %5672
        %5674 = vset.pattern.permute.xlu0 0
        %5675 = vperm.xlu0 %5674, %v5430
        %v5676 = vpop.permute.xlu0 %5675
        %5677 = vset.pattern.permute.xlu0 0
        %5678 = vperm.xlu0 %5677, %v5439
        %v5679 = vpop.permute.xlu0 %5678
        %5680 = vset.pattern.permute.xlu0 0
        %5681 = vperm.xlu0 %5680, %v5448
        %v5682 = vpop.permute.xlu0 %5681
        %5683 = vset.pattern.permute.xlu0 0
        %5684 = vperm.xlu0 %5683, %v5457
        %v5685 = vpop.permute.xlu0 %5684
        %5686 = vset.pattern.permute.xlu0 0
        %5687 = vperm.xlu0 %5686, %v5466
        %v5688 = vpop.permute.xlu0 %5687
        %5689 = vset.pattern.permute.xlu0 0
        %5690 = vperm.xlu0 %5689, %v5475
        %v5691 = vpop.permute.xlu0 %5690
        %5692 = vset.pattern.permute.xlu0 0
        %5693 = vperm.xlu0 %5692, %v5484
        %v5694 = vpop.permute.xlu0 %5693
        %5695 = vset.pattern.permute.xlu0 0
        %5696 = vperm.xlu0 %5695, %v5493
        %v5697 = vpop.permute.xlu0 %5696
        %5698 = vset.pattern.permute.xlu0 0
        %5699 = vperm.xlu0 %5698, %v5502
        %v5700 = vpop.permute.xlu0 %5699
        %5701 = vset.pattern.permute.xlu0 0
        %5702 = vperm.xlu0 %5701, %v5511
        %v5703 = vpop.permute.xlu0 %5702
        %5704 = vset.pattern.permute.xlu0 0
        %5705 = vperm.xlu0 %5704, %v5520
        %v5706 = vpop.permute.xlu0 %5705
        %5707 = vset.pattern.permute.xlu0 0
        %5708 = vperm.xlu0 %5707, %v5529
        %v5709 = vpop.permute.xlu0 %5708
        %5710 = vset.pattern.permute.xlu0 0
        %5711 = vperm.xlu0 %5710, %v5538
        %v5712 = vpop.permute.xlu0 %5711
        %5713 = vset.pattern.permute.xlu0 0
        %5714 = vperm.xlu0 %5713, %v5547
        %v5715 = vpop.permute.xlu0 %5714
        %5716 = vset.pattern.permute.xlu0 0
        %5717 = vperm.xlu0 %5716, %v5556
        %v5718 = vpop.permute.xlu0 %5717
        %5719 = vset.pattern.permute.xlu0 0
        %5720 = vperm.xlu0 %5719, %v5565
        %v5721 = vpop.permute.xlu0 %5720
        %5722 = vset.pattern.permute.xlu0 0
        %5723 = vperm.xlu0 %5722, %v5574
        %v5724 = vpop.permute.xlu0 %5723
        %5725 = vset.pattern.permute.xlu0 0
        %5726 = vperm.xlu0 %5725, %v5583
        %v5727 = vpop.permute.xlu0 %5726
        %5728 = vset.pattern.permute.xlu0 0
        %5729 = vperm.xlu0 %5728, %v5592
        %v5730 = vpop.permute.xlu0 %5729
        %5731 = vset.pattern.permute.xlu0 0
        %5732 = vperm.xlu0 %5731, %v5601
        %v5733 = vpop.permute.xlu0 %5732
        %5734 = vset.pattern.permute.xlu0 0
        %5735 = vperm.xlu0 %5734, %v5610
        %v5736 = vpop.permute.xlu0 %5735
        %5737 = vset.pattern.permute.xlu0 0
        %5738 = vperm.xlu0 %5737, %v5619
        %v5739 = vpop.permute.xlu0 %5738
        %5740 = vset.pattern.permute.xlu0 0
        %5741 = vperm.xlu0 %5740, %v5628
        %v5742 = vpop.permute.xlu0 %5741
        %5743 = vset.pattern.permute.xlu0 0
        %5744 = vperm.xlu0 %5743, %v5637
        %v5745 = vpop.permute.xlu0 %5744
        %5746 = vset.pattern.permute.xlu0 0
        %5747 = vperm.xlu0 %5746, %v5646
        %v5748 = vpop.permute.xlu0 %5747
        %5749 = vset.pattern.permute.xlu0 0
        %5750 = vperm.xlu0 %5749, %v5655
        %v5751 = vpop.permute.xlu0 %5750
        %v5752 = vlaneseq
        %v5753 = vand.u32 %v5752, 127
        %v5754 = vperm.slane %v5658, %v5753
        %v5755 = vadd.s32 %v5753, 4294967288
        %v5756 = vperm.slane %v5661, %v5755
        %vm5757 = vcmask 130112
        %v5758 = vsel %vm5757, %v5756, %v5754
        %v5759 = vadd.s32 %v5753, 4294967280
        %v5760 = vperm.slane %v5664, %v5759
        %vm5761 = vcmask 195712
        %v5762 = vsel %vm5761, %v5760, %v5758
        %v5763 = vadd.s32 %v5753, 4294967272
        %v5764 = vperm.slane %v5667, %v5763
        %vm5765 = vcmask 261312
        %v5766 = vsel %vm5765, %v5764, %v5762
        %v5767 = vadd.s32 %v5753, 4294967264
        %v5768 = vperm.slane %v5670, %v5767
        %vm5769 = vcmask 326912
        %v5770 = vsel %vm5769, %v5768, %v5766
        %v5771 = vadd.s32 %v5753, 4294967256
        %v5772 = vperm.slane %v5673, %v5771
        %vm5773 = vcmask 392512
        %v5774 = vsel %vm5773, %v5772, %v5770
        %v5775 = vadd.s32 %v5753, 4294967248
        %v5776 = vperm.slane %v5676, %v5775
        %vm5777 = vcmask 458112
        %v5778 = vsel %vm5777, %v5776, %v5774
        %v5779 = vadd.s32 %v5753, 4294967240
        %v5780 = vperm.slane %v5679, %v5779
        %vm5781 = vcmask 523712
        %v5782 = vsel %vm5781, %v5780, %v5778
        %v5783 = vadd.s32 %v5753, 4294967232
        %v5784 = vperm.slane %v5682, %v5783
        %vm5785 = vcmask 589312
        %v5786 = vsel %vm5785, %v5784, %v5782
        %v5787 = vadd.s32 %v5753, 4294967224
        %v5788 = vperm.slane %v5685, %v5787
        %vm5789 = vcmask 654912
        %v5790 = vsel %vm5789, %v5788, %v5786
        %v5791 = vadd.s32 %v5753, 4294967216
        %v5792 = vperm.slane %v5688, %v5791
        %vm5793 = vcmask 720512
        %v5794 = vsel %vm5793, %v5792, %v5790
        %v5795 = vadd.s32 %v5753, 4294967208
        %v5796 = vperm.slane %v5691, %v5795
        %vm5797 = vcmask 786112
        %v5798 = vsel %vm5797, %v5796, %v5794
        %v5799 = vadd.s32 %v5753, 4294967200
        %v5800 = vperm.slane %v5694, %v5799
        %vm5801 = vcmask 851712
        %v5802 = vsel %vm5801, %v5800, %v5798
        %v5803 = vadd.s32 %v5753, 4294967192
        %v5804 = vperm.slane %v5697, %v5803
        %vm5805 = vcmask 917312
        %v5806 = vsel %vm5805, %v5804, %v5802
        %v5807 = vadd.s32 %v5753, 4294967184
        %v5808 = vperm.slane %v5700, %v5807
        %vm5809 = vcmask 982912
        %v5810 = vsel %vm5809, %v5808, %v5806
        %v5811 = vadd.s32 %v5753, 4294967176
        %v5812 = vperm.slane %v5703, %v5811
        %vm5813 = vcmask 1048512
        %v5814 = vsel %vm5813, %v5812, %v5810
        %v5815 = vperm.slane %v5706, %v5753
        %v5816 = vperm.slane %v5709, %v5755
        %v5817 = vsel %vm5757, %v5816, %v5815
        %v5818 = vperm.slane %v5712, %v5759
        %v5819 = vsel %vm5761, %v5818, %v5817
        %v5820 = vperm.slane %v5715, %v5763
        %v5821 = vsel %vm5765, %v5820, %v5819
        %v5822 = vperm.slane %v5718, %v5767
        %v5823 = vsel %vm5769, %v5822, %v5821
        %v5824 = vperm.slane %v5721, %v5771
        %v5825 = vsel %vm5773, %v5824, %v5823
        %v5826 = vperm.slane %v5724, %v5775
        %v5827 = vsel %vm5777, %v5826, %v5825
        %v5828 = vperm.slane %v5727, %v5779
        %v5829 = vsel %vm5781, %v5828, %v5827
        %v5830 = vperm.slane %v5730, %v5783
        %v5831 = vsel %vm5785, %v5830, %v5829
        %v5832 = vperm.slane %v5733, %v5787
        %v5833 = vsel %vm5789, %v5832, %v5831
        %v5834 = vperm.slane %v5736, %v5791
        %v5835 = vsel %vm5793, %v5834, %v5833
        %v5836 = vperm.slane %v5739, %v5795
        %v5837 = vsel %vm5797, %v5836, %v5835
        %v5838 = vperm.slane %v5742, %v5799
        %v5839 = vsel %vm5801, %v5838, %v5837
        %v5840 = vperm.slane %v5745, %v5803
        %v5841 = vsel %vm5805, %v5840, %v5839
        %v5842 = vperm.slane %v5748, %v5807
        %v5843 = vsel %vm5809, %v5842, %v5841
        %v5844 = vperm.slane %v5751, %v5811
        %v5845 = vsel %vm5813, %v5844, %v5843
        %v5846 = vrot.slane %v5845, 7
        %vm5847 = vcmask 1040384
        %v5848 = vsel %vm5847, %v5814, %v5846
        %v5850 = vlaneseq
        %vm5851 = vcmp.ge.s32.totalorder %v5850, 0
        %vm5852 = vcmp.lt.s32.totalorder %v5850, 256
        %vm5853 = vmand %vm5851, %vm5852
        %5854 = vst.msk [vmem:[%s326] sm:$0x3] %vm5853, %v5848
        %p5855 = scmp.lt.s32.totalorder %s22, 1
        %s5856 = scalar_select %p5855, %s22, 1
        %s5857 = smul.addr %s5856, 2
        %s5858 = scalar_lea.vmem %s7, %s5857
        // Predicated region
        $region61: #{ffnn_forward.1} parent=47 // pred_check
          %p5859 = pneg %p192
        $region62: #{ffnn_forward.1} parent=47 // pred_check_branch
          %5861 = sbr.rel (%p5859) target = $region64
        $region63: #{ffnn_forward.1} parent=47 // pred_region
          _
        $region64: #{ffnn_forward.1} parent=47 // pred_fallthru
          _
      $region48: #{ffnn_forward.1} parent=5 // pred_fallthru
        _
      %p5862 = scmp.le.s32.totalorder 2, %s17
      // Predicated region
      $region65: #{ffnn_forward.1} parent=5 // pred_check
        %p5863 = pneg %p5862
      $region66: #{ffnn_forward.1} parent=5 // pred_check_branch
        %5865 = sbr.rel (%p5863) target = $region68
      $region67: #{ffnn_forward.1} parent=5 // pred_region
        %s5866 = ssub.s32 %s17, 2
        // Predicated region
        $region69: #{ffnn_forward.1} parent=67 // pred_check
          %p5867 = pneg %p198
        $region70: #{ffnn_forward.1} parent=67 // pred_check_branch
          %5869 = sbr.rel (%p5867) target = $region72
        $region71: #{ffnn_forward.1} parent=67 // pred_region
          %p5870 = scmp.lt.s32.totalorder %s23, 1
          %s5871 = scalar_select %p5870, %s23, 1
          %s5872 = smul.addr %s5871, 2
          %s5873 = scalar_lea.vmem %s7, %s5872
        $region72: #{ffnn_forward.1} parent=67 // pred_fallthru
          _
      $region68: #{ffnn_forward.1} parent=5 // pred_fallthru
        _
    $region6: #{ffnn_forward.1} parent=1 // loop_footer
      %s21 = sadd.s32 1, %s17
    $region7: #{ffnn_forward.1} parent=1 // loop_footer_branch
      %16 = sbr.rel target = $region3
    $region8: #{ffnn_forward.1} parent=1 // loop_exit
      _
    %5874 = vsyncpa [#allocation4], 1
    %s5875 = scalar_lea.sflag [#allocation4], 1
    %5876 = vsyncpa %s5875, 1
    %5877 = vsyncpa [#allocation6], 1

</llo_original>
